<compile_context>
chip_gen: v7x
topology: tpu7x:2x2x1
jax: 0.10.0
libtpu: 0.0.40
codegen_flags: <defaults>
</compile_context>

<pallas_src>
import functools

import jax
import jax.numpy as jnp
import numpy as np
from jax.experimental import pallas as pl
from jax.experimental.pallas import tpu as pltpu


# ------------------------------------------------------------------ helpers --

def _rup(n, m):
    return ((n + m - 1) // m) * m


def _row_tile(np_):
    """Row-tile size: multiple of 128, >=2 tiles when possible (v7x has 2 TCs),
    capped at 512 so VMEM stays bounded for larger graphs."""
    if np_ <= 128:
        return np_
    for t in (512, 384, 256, 128):
        if np_ % t == 0 and np_ // t >= 2:
            return t
    return 128


def _pad2d(a, rows, cols, dtype=jnp.float32):
    a = a.astype(dtype)
    r, c = a.shape
    return jnp.pad(a, ((0, rows - r), (0, cols - c)))


# --------------------------------- call 1: hidden = relu(adj @ ([X|Y] @ W1)) --

def _gcn_hidden_kernel(x_ref, y_ref, w1x_ref, w1y_ref, adj_ref, hid_ref):
    # X / Y / W1 are fully resident (constant index_maps); only the adj row
    # slab is streamed.  xw1 is recomputed per row tile (tiny vs. adj sweep).
    xw1 = (jnp.dot(x_ref[...], w1x_ref[...], preferred_element_type=jnp.float32)
           + jnp.dot(y_ref[...], w1y_ref[...], preferred_element_type=jnp.float32))
    h = jnp.dot(adj_ref[...].astype(jnp.float32), xw1,
                preferred_element_type=jnp.float32)
    hid_ref[...] = jnp.maximum(h, 0.0)


# ---- call 2: mean/logstd pass + reparameterization + decode fc1/fc2+sigmoid --

def _ms_reparam_decode_kernel(hid_ref, wms_ref, adj_ref, noise_ref, y_ref,
                              w1z_ref, w1y_ref, b1_ref, w2_ref, b2_ref,
                              apred_ref, mean_ref, logstd_ref, *, h2p):
    # mean/logstd adjacency pass kept fully f32 (logstd feeds exp()).
    xw_ms = jnp.dot(hid_ref[...], wms_ref[...],
                    preferred_element_type=jnp.float32)            # [Np, 2*h2p]
    ms = jnp.dot(adj_ref[...].astype(jnp.float32), xw_ms,
                 preferred_element_type=jnp.float32)               # [tm, 2*h2p]
    mean = ms[:, :h2p]                                             # lane-aligned
    logstd = ms[:, h2p:]
    mean_ref[...] = mean
    logstd_ref[...] = logstd

    # fused reparameterization (exp runs on the EUP slot).
    z = noise_ref[...] * jnp.exp(logstd) + mean                    # [tm, h2p]

    # decode fc1: split weight avoids an in-kernel concat of [z | Y].
    h = (jnp.dot(z, w1z_ref[...], preferred_element_type=jnp.float32)
         + jnp.dot(y_ref[...], w1y_ref[...], preferred_element_type=jnp.float32)
         + b1_ref[...])
    h = jnp.maximum(h, 0.0)

    # decode fc2 + sigmoid (EUP exp + approx reciprocal, bf16 output write).
    logits = (jnp.dot(h, w2_ref[...], preferred_element_type=jnp.float32)
              + b2_ref[...])
    sig = pl.reciprocal(1.0 + jnp.exp(-logits), approx=True)
    apred_ref[...] = sig.astype(apred_ref.dtype)


# ---------------------------------------------------------- VGAE5 forward ----

def vgae5_forward(params, adj, X, Y, noise):
    N, Din = X.shape
    C = Y.shape[1]
    h1 = params["w1"].shape[1]
    h2 = params["w_mean"].shape[1]

    Np = _rup(N, 128)
    Dinp = _rup(Din, 128)
    Cp = _rup(C, 128)
    H1p = _rup(h1, 128)
    H2p = _rup(h2, 128)
    tm = _row_tile(Np)
    n_tiles = Np // tm

    # ---- pad once; everything downstream stays padded & lane-aligned --------
    adj_p = _pad2d(adj, Np, Np).astype(jnp.bfloat16)    # dominant stream -> bf16
    x_p = _pad2d(X, Np, Dinp)
    y_p = _pad2d(Y, Np, Cp)
    noise_p = _pad2d(noise, Np, H2p)

    w1 = params["w1"].astype(jnp.float32)
    w1x_p = _pad2d(w1[:Din], Dinp, H1p)                 # [X | Y] split of W1
    w1y_p = _pad2d(w1[Din:], Cp, H1p)

    # pad each of Wm / Ws to a 128-lane multiple BEFORE concatenation so the
    # in-kernel mean/logstd split is lane aligned.
    wm_p = _pad2d(params["w_mean"], H1p, H2p)
    ws_p = _pad2d(params["w_logstd"], H1p, H2p)
    wms_p = jnp.concatenate([wm_p, ws_p], axis=1)       # [H1p, 2*H2p]

    fc1_w = params["fc1_w"].astype(jnp.float32)
    fc1_wz_p = _pad2d(fc1_w[:h2], H2p, H1p)             # [z | Y] split of fc1_w
    fc1_wy_p = _pad2d(fc1_w[h2:], Cp, H1p)
    fc1_b_p = _pad2d(params["fc1_b"].reshape(1, -1), 1, H1p)
    fc2_w_p = _pad2d(params["fc2_w"], H1p, Np)
    fc2_b_p = _pad2d(params["fc2_b"].reshape(1, -1), 1, Np)

    # ---------------- call 1: hidden = relu(adj @ ([X|Y] @ W1)) --------------
    hidden_p = pl.pallas_call(
        _gcn_hidden_kernel,
        out_shape=jax.ShapeDtypeStruct((Np, H1p), jnp.float32),
        grid_spec=pltpu.PrefetchScalarGridSpec(
            num_scalar_prefetch=0,
            grid=(n_tiles,),
            in_specs=[
                pl.BlockSpec((Np, Dinp), lambda i: (0, 0)),    # X   (resident)
                pl.BlockSpec((Np, Cp), lambda i: (0, 0)),      # Y   (resident)
                pl.BlockSpec((Dinp, H1p), lambda i: (0, 0)),   # W1 (X rows)
                pl.BlockSpec((Cp, H1p), lambda i: (0, 0)),     # W1 (Y rows)
                pl.BlockSpec((tm, Np), lambda i: (i, 0)),      # adj row slab
            ],
            out_specs=pl.BlockSpec((tm, H1p), lambda i: (i, 0)),
        ),
        compiler_params=pltpu.CompilerParams(
            dimension_semantics=("parallel",),
        ),
    )(x_p, y_p, w1x_p, w1y_p, adj_p)

    # ---- call 2: mean/logstd + reparameterize + decode, fused per row tile ---
    a_pred_p, mean_p, logstd_p = pl.pallas_call(
        functools.partial(_ms_reparam_decode_kernel, h2p=H2p),
        out_shape=(
            jax.ShapeDtypeStruct((Np, Np), jnp.bfloat16),      # A_pred (bf16)
            jax.ShapeDtypeStruct((Np, H2p), jnp.float32),      # mean
            jax.ShapeDtypeStruct((Np, H2p), jnp.float32),      # logstd
        ),
        grid_spec=pltpu.PrefetchScalarGridSpec(
            num_scalar_prefetch=0,
            grid=(n_tiles,),
            in_specs=[
                pl.BlockSpec((Np, H1p), lambda i: (0, 0)),     # hidden (resident)
                pl.BlockSpec((H1p, 2 * H2p), lambda i: (0, 0)),# [Wm | Ws]
                pl.BlockSpec((tm, Np), lambda i: (i, 0)),      # adj row slab
                pl.BlockSpec((tm, H2p), lambda i: (i, 0)),     # noise row tile
                pl.BlockSpec((tm, Cp), lambda i: (i, 0)),      # Y row tile
                pl.BlockSpec((H2p, H1p), lambda i: (0, 0)),    # fc1_w (z rows)
                pl.BlockSpec((Cp, H1p), lambda i: (0, 0)),     # fc1_w (Y rows)
                pl.BlockSpec((1, H1p), lambda i: (0, 0)),      # fc1_b
                pl.BlockSpec((H1p, Np), lambda i: (0, 0)),     # fc2_w (resident)
                pl.BlockSpec((1, Np), lambda i: (0, 0)),       # fc2_b
            ],
            out_specs=[
                pl.BlockSpec((tm, Np), lambda i: (i, 0)),
                pl.BlockSpec((tm, H2p), lambda i: (i, 0)),
                pl.BlockSpec((tm, H2p), lambda i: (i, 0)),
            ],
        ),
        compiler_params=pltpu.CompilerParams(
            dimension_semantics=("parallel",),
        ),
    )(hidden_p, wms_p, adj_p, noise_p, y_p,
      fc1_wz_p, fc1_wy_p, fc1_b_p, fc2_w_p, fc2_b_p)

    # Single slice back to logical shapes at the very end (padded rows/cols of
    # A_pred contain sigmoid(bias)/0.5 garbage and MUST be cut here).
    a_pred = a_pred_p[:N, :N]
    mean = mean_p[:N, :h2]
    logstd = logstd_p[:N, :h2]
    return a_pred, mean, logstd


def glorot_init(key, input_dim, output_dim):
    init_range = np.sqrt(6.0 / (input_dim + output_dim))
    u = jax.random.uniform(key, (input_dim, output_dim), dtype=jnp.float32)
    return u * 2.0 * init_range - init_range


# ------------------------------------------------------------------- main ----

if __name__ == "__main__":
    # Small deterministic shapes consistent with the module.
    N = 256                      # number of graph nodes (= adj.shape[0])
    input_dim, num_class = 24, 8
    hidden1_dim, hidden2_dim = 64, 32

    key = jax.random.PRNGKey(0)
    keys = jax.random.split(key, 10)

    X = jax.random.normal(keys[0], (N, input_dim), dtype=jnp.float32)
    Y = jax.nn.one_hot(jax.random.randint(keys[1], (N,), 0, num_class),
                       num_class, dtype=jnp.float32)

    # Symmetric, row-normalized dense adjacency (stand-in for sparse adj).
    a = (jax.random.uniform(keys[2], (N, N)) < 0.05).astype(jnp.float32)
    adj = a + a.T + jnp.eye(N, dtype=jnp.float32)
    adj = adj / jnp.maximum(adj.sum(axis=1, keepdims=True), 1.0)

    params = {
        "w1": glorot_init(keys[3], input_dim + num_class, hidden1_dim),
        "w_mean": glorot_init(keys[4], hidden1_dim, hidden2_dim),
        "w_logstd": glorot_init(keys[5], hidden1_dim, hidden2_dim),
        "fc1_w": glorot_init(keys[6], hidden2_dim + num_class, hidden1_dim),
        "fc1_b": 0.1 * jax.random.normal(keys[7], (hidden1_dim,), jnp.float32),
        "fc2_w": glorot_init(keys[8], hidden1_dim, N),
        "fc2_b": 0.1 * jax.random.normal(keys[9], (N,), jnp.float32),
    }
    # torch.randn replaced by a deterministic, externally supplied noise array.
    noise = jax.random.normal(jax.random.PRNGKey(42), (N, hidden2_dim),
                              dtype=jnp.float32)

    fwd = jax.jit(vgae5_forward)
    a_pred, mean, logstd = fwd(params, adj, X, Y, noise)
    jax.block_until_ready(a_pred)

    # Pure-JAX f32 reference of the same forward pass.
    Xc = jnp.concatenate([X, Y], axis=1)
    hidden_r = jnp.maximum(adj @ (Xc @ params["w1"]), 0.0)
    mean_r = adj @ (hidden_r @ params["w_mean"])
    logstd_r = adj @ (hidden_r @ params["w_logstd"])
    z_r = noise * jnp.exp(logstd_r) + mean_r
    z2_r = jnp.concatenate([z_r, Y], axis=1)
    h_r = jnp.maximum(z2_r @ params["fc1_w"] + params["fc1_b"], 0.0)
    a_ref = jax.nn.sigmoid(h_r @ params["fc2_w"] + params["fc2_b"])

    # adj is streamed in bf16 and A_pred is written in bf16 -> loose tolerance.
    np.testing.assert_allclose(np.asarray(a_pred.astype(jnp.float32)),
                               np.asarray(a_ref), rtol=2e-2, atol=2e-2)
    np.testing.assert_allclose(np.asarray(mean), np.asarray(mean_r),
                               rtol=2e-2, atol=2e-2)
    np.testing.assert_allclose(np.asarray(logstd), np.asarray(logstd_r),
                               rtol=2e-2, atol=2e-2)
    print("KERNEL_OK")
</pallas_src>

<mosaic_0001>
module attributes {stable_mosaic.version = 11 : i64} {
  func.func @_gcn_hidden_kernel(%arg0: i32, %arg1: memref<256x128xf32, #tpu.memory_space<vmem>>, %arg2: memref<256x128xf32, #tpu.memory_space<vmem>>, %arg3: memref<128x128xf32, #tpu.memory_space<vmem>>, %arg4: memref<128x128xf32, #tpu.memory_space<vmem>>, %arg5: memref<128x256xbf16, #tpu.memory_space<vmem>>, %arg6: memref<128x128xf32, #tpu.memory_space<vmem>>) attributes {dimension_semantics = [#tpu.dimension_semantics<parallel>], iteration_bounds = array<i64: 2>, scalar_prefetch = 0 : i64, scratch_operands = 0 : i64, tpu.core_type = #tpu.core_type<tc>, window_params = [{pipeline_mode = #tpu.pipeline_mode<synchronous>, transform_indices = @transform_0, window_bounds = array<i64: 256, 128>}, {pipeline_mode = #tpu.pipeline_mode<synchronous>, transform_indices = @transform_1, window_bounds = array<i64: 256, 128>}, {pipeline_mode = #tpu.pipeline_mode<synchronous>, transform_indices = @transform_2, window_bounds = array<i64: 128, 128>}, {pipeline_mode = #tpu.pipeline_mode<synchronous>, transform_indices = @transform_3, window_bounds = array<i64: 128, 128>}, {transform_indices = @transform_4, window_bounds = array<i64: 128, 256>}, {transform_indices = @transform_5, window_bounds = array<i64: 128, 128>}]} {
    %c0 = arith.constant 0 : index
    %c0_0 = arith.constant 0 : index
    %0 = vector.load %arg1[%c0, %c0_0] : memref<256x128xf32, #tpu.memory_space<vmem>>, vector<256x128xf32>
    %c0_1 = arith.constant 0 : index
    %c0_2 = arith.constant 0 : index
    %1 = vector.load %arg3[%c0_1, %c0_2] : memref<128x128xf32, #tpu.memory_space<vmem>>, vector<128x128xf32>
    %cst = arith.constant dense<0.000000e+00> : vector<256x128xf32>
    %2 = tpu.matmul %0, %1, %cst {dimension_numbers = #tpu.dot_dimension_numbers<[1], [0], [0], [1], [0, 0, 1, 1], [], []>} : vector<256x128xf32>, vector<128x128xf32>, vector<256x128xf32> -> vector<256x128xf32>
    %c0_3 = arith.constant 0 : index
    %c0_4 = arith.constant 0 : index
    %3 = vector.load %arg2[%c0_3, %c0_4] : memref<256x128xf32, #tpu.memory_space<vmem>>, vector<256x128xf32>
    %c0_5 = arith.constant 0 : index
    %c0_6 = arith.constant 0 : index
    %4 = vector.load %arg4[%c0_5, %c0_6] : memref<128x128xf32, #tpu.memory_space<vmem>>, vector<128x128xf32>
    %cst_7 = arith.constant dense<0.000000e+00> : vector<256x128xf32>
    %5 = tpu.matmul %3, %4, %cst_7 {dimension_numbers = #tpu.dot_dimension_numbers<[1], [0], [0], [1], [0, 0, 1, 1], [], []>} : vector<256x128xf32>, vector<128x128xf32>, vector<256x128xf32> -> vector<256x128xf32>
    %6 = arith.addf %2, %5 : vector<256x128xf32>
    %c0_8 = arith.constant 0 : index
    %c0_9 = arith.constant 0 : index
    %7 = vector.load %arg5[%c0_8, %c0_9] : memref<128x256xbf16, #tpu.memory_space<vmem>>, vector<128x256xbf16>
    %8 = arith.extf %7 : vector<128x256xbf16> to vector<128x256xf32>
    %cst_10 = arith.constant dense<0.000000e+00> : vector<128x128xf32>
    %9 = tpu.matmul %8, %6, %cst_10 {dimension_numbers = #tpu.dot_dimension_numbers<[1], [0], [0], [1], [0, 0, 1, 1], [], []>} : vector<128x256xf32>, vector<256x128xf32>, vector<128x128xf32> -> vector<128x128xf32>
    %cst_11 = arith.constant 0.000000e+00 : f32
    %10 = vector.broadcast %cst_11 : f32 to vector<128x128xf32>
    %11 = arith.maximumf %9, %10 : vector<128x128xf32>
    %c0_12 = arith.constant 0 : index
    %c0_13 = arith.constant 0 : index
    %12 = vector.load %arg6[%c0_12, %c0_13] : memref<128x128xf32, #tpu.memory_space<vmem>>, vector<128x128xf32>
    tpu.vector_store %arg6[%c0_12, %c0_13], %11 {strides = array<i32>} : memref<128x128xf32, #tpu.memory_space<vmem>>, vector<128x128xf32>,
    return
  }
  func.func @transform_0(%arg0: i32) -> (i32, i32) {
    %c0_i32 = arith.constant 0 : i32
    %c0_i32_0 = arith.constant 0 : i32
    %c0_i32_1 = arith.constant 0 : i32
    return %c0_i32, %c0_i32_0 : i32, i32
  }
  func.func @transform_1(%arg0: i32) -> (i32, i32) {
    %c0_i32 = arith.constant 0 : i32
    %c0_i32_0 = arith.constant 0 : i32
    %c0_i32_1 = arith.constant 0 : i32
    return %c0_i32, %c0_i32_0 : i32, i32
  }
  func.func @transform_2(%arg0: i32) -> (i32, i32) {
    %c0_i32 = arith.constant 0 : i32
    %c0_i32_0 = arith.constant 0 : i32
    %c0_i32_1 = arith.constant 0 : i32
    return %c0_i32, %c0_i32_0 : i32, i32
  }
  func.func @transform_3(%arg0: i32) -> (i32, i32) {
    %c0_i32 = arith.constant 0 : i32
    %c0_i32_0 = arith.constant 0 : i32
    %c0_i32_1 = arith.constant 0 : i32
    return %c0_i32, %c0_i32_0 : i32, i32
  }
  func.func @transform_4(%arg0: i32) -> (i32, i32) {
    %c0_i32 = arith.constant 0 : i32
    %c0_i32_0 = arith.constant 0 : i32
    return %arg0, %c0_i32 : i32, i32
  }
  func.func @transform_5(%arg0: i32) -> (i32, i32) {
    %c0_i32 = arith.constant 0 : i32
    %c0_i32_0 = arith.constant 0 : i32
    return %arg0, %c0_i32 : i32, i32
  }
}

module attributes {stable_mosaic.version = 11 : i64} {
  func.func @_ms_reparam_decode_kernel(%arg0: i32, %arg1: memref<256x128xf32, #tpu.memory_space<vmem>>, %arg2: memref<128x256xf32, #tpu.memory_space<vmem>>, %arg3: memref<128x256xbf16, #tpu.memory_space<vmem>>, %arg4: memref<128x128xf32, #tpu.memory_space<vmem>>, %arg5: memref<128x128xf32, #tpu.memory_space<vmem>>, %arg6: memref<128x128xf32, #tpu.memory_space<vmem>>, %arg7: memref<128x128xf32, #tpu.memory_space<vmem>>, %arg8: memref<1x128xf32, #tpu.memory_space<vmem>>, %arg9: memref<128x256xf32, #tpu.memory_space<vmem>>, %arg10: memref<1x256xf32, #tpu.memory_space<vmem>>, %arg11: memref<128x256xbf16, #tpu.memory_space<vmem>>, %arg12: memref<128x128xf32, #tpu.memory_space<vmem>>, %arg13: memref<128x128xf32, #tpu.memory_space<vmem>>) attributes {dimension_semantics = [#tpu.dimension_semantics<parallel>], iteration_bounds = array<i64: 2>, scalar_prefetch = 0 : i64, scratch_operands = 0 : i64, tpu.core_type = #tpu.core_type<tc>, window_params = [{pipeline_mode = #tpu.pipeline_mode<synchronous>, transform_indices = @transform_0, window_bounds = array<i64: 256, 128>}, {pipeline_mode = #tpu.pipeline_mode<synchronous>, transform_indices = @transform_1, window_bounds = array<i64: 128, 256>}, {transform_indices = @transform_2, window_bounds = array<i64: 128, 256>}, {transform_indices = @transform_3, window_bounds = array<i64: 128, 128>}, {transform_indices = @transform_4, window_bounds = array<i64: 128, 128>}, {pipeline_mode = #tpu.pipeline_mode<synchronous>, transform_indices = @transform_5, window_bounds = array<i64: 128, 128>}, {pipeline_mode = #tpu.pipeline_mode<synchronous>, transform_indices = @transform_6, window_bounds = array<i64: 128, 128>}, {pipeline_mode = #tpu.pipeline_mode<synchronous>, transform_indices = @transform_7, window_bounds = array<i64: 1, 128>}, {pipeline_mode = #tpu.pipeline_mode<synchronous>, transform_indices = @transform_8, window_bounds = array<i64: 128, 256>}, {pipeline_mode = #tpu.pipeline_mode<synchronous>, transform_indices = @transform_9, window_bounds = array<i64: 1, 256>}, {transform_indices = @transform_10, window_bounds = array<i64: 128, 256>}, {transform_indices = @transform_11, window_bounds = array<i64: 128, 128>}, {transform_indices = @transform_12, window_bounds = array<i64: 128, 128>}]} {
    %c0 = arith.constant 0 : index
    %c0_0 = arith.constant 0 : index
    %0 = vector.load %arg1[%c0, %c0_0] : memref<256x128xf32, #tpu.memory_space<vmem>>, vector<256x128xf32>
    %c0_1 = arith.constant 0 : index
    %c0_2 = arith.constant 0 : index
    %1 = vector.load %arg2[%c0_1, %c0_2] : memref<128x256xf32, #tpu.memory_space<vmem>>, vector<128x256xf32>
    %cst = arith.constant dense<0.000000e+00> : vector<256x256xf32>
    %2 = tpu.matmul %0, %1, %cst {dimension_numbers = #tpu.dot_dimension_numbers<[1], [0], [0], [1], [0, 0, 1, 1], [], []>} : vector<256x128xf32>, vector<128x256xf32>, vector<256x256xf32> -> vector<256x256xf32>
    %c0_3 = arith.constant 0 : index
    %c0_4 = arith.constant 0 : index
    %3 = vector.load %arg3[%c0_3, %c0_4] : memref<128x256xbf16, #tpu.memory_space<vmem>>, vector<128x256xbf16>
    %4 = arith.extf %3 : vector<128x256xbf16> to vector<128x256xf32>
    %cst_5 = arith.constant dense<0.000000e+00> : vector<128x256xf32>
    %5 = tpu.matmul %4, %2, %cst_5 {dimension_numbers = #tpu.dot_dimension_numbers<[1], [0], [0], [1], [0, 0, 1, 1], [], []>} : vector<128x256xf32>, vector<256x256xf32>, vector<128x256xf32> -> vector<128x256xf32>
    %6 = vector.extract_strided_slice %5 {offsets = [0, 0], sizes = [128, 128], strides = [1, 1]} : vector<128x256xf32> to vector<128x128xf32>
    %7 = vector.extract_strided_slice %5 {offsets = [0, 128], sizes = [128, 128], strides = [1, 1]} : vector<128x256xf32> to vector<128x128xf32>
    %c0_6 = arith.constant 0 : index
    %c0_7 = arith.constant 0 : index
    %8 = vector.load %arg12[%c0_6, %c0_7] : memref<128x128xf32, #tpu.memory_space<vmem>>, vector<128x128xf32>
    tpu.vector_store %arg12[%c0_6, %c0_7], %6 {strides = array<i32>} : memref<128x128xf32, #tpu.memory_space<vmem>>, vector<128x128xf32>,
    %c0_8 = arith.constant 0 : index
    %c0_9 = arith.constant 0 : index
    %9 = vector.load %arg13[%c0_8, %c0_9] : memref<128x128xf32, #tpu.memory_space<vmem>>, vector<128x128xf32>
    tpu.vector_store %arg13[%c0_8, %c0_9], %7 {strides = array<i32>} : memref<128x128xf32, #tpu.memory_space<vmem>>, vector<128x128xf32>,
    %c0_10 = arith.constant 0 : index
    %c0_11 = arith.constant 0 : index
    %10 = vector.load %arg4[%c0_10, %c0_11] : memref<128x128xf32, #tpu.memory_space<vmem>>, vector<128x128xf32>
    %11 = math.exp %7 : vector<128x128xf32>
    %12 = arith.mulf %10, %11 : vector<128x128xf32>
    %13 = arith.addf %12, %6 : vector<128x128xf32>
    %c0_12 = arith.constant 0 : index
    %c0_13 = arith.constant 0 : index
    %14 = vector.load %arg6[%c0_12, %c0_13] : memref<128x128xf32, #tpu.memory_space<vmem>>, vector<128x128xf32>
    %cst_14 = arith.constant dense<0.000000e+00> : vector<128x128xf32>
    %15 = tpu.matmul %13, %14, %cst_14 {dimension_numbers = #tpu.dot_dimension_numbers<[1], [0], [0], [1], [0, 0, 1, 1], [], []>} : vector<128x128xf32>, vector<128x128xf32>, vector<128x128xf32> -> vector<128x128xf32>
    %c0_15 = arith.constant 0 : index
    %c0_16 = arith.constant 0 : index
    %16 = vector.load %arg5[%c0_15, %c0_16] : memref<128x128xf32, #tpu.memory_space<vmem>>, vector<128x128xf32>
    %c0_17 = arith.constant 0 : index
    %c0_18 = arith.constant 0 : index
    %17 = vector.load %arg7[%c0_17, %c0_18] : memref<128x128xf32, #tpu.memory_space<vmem>>, vector<128x128xf32>
    %cst_19 = arith.constant dense<0.000000e+00> : vector<128x128xf32>
    %18 = tpu.matmul %16, %17, %cst_19 {dimension_numbers = #tpu.dot_dimension_numbers<[1], [0], [0], [1], [0, 0, 1, 1], [], []>} : vector<128x128xf32>, vector<128x128xf32>, vector<128x128xf32> -> vector<128x128xf32>
    %19 = arith.addf %15, %18 : vector<128x128xf32>
    %c0_20 = arith.constant 0 : index
    %c0_21 = arith.constant 0 : index
    %20 = vector.load %arg8[%c0_20, %c0_21] : memref<1x128xf32, #tpu.memory_space<vmem>>, vector<1x128xf32>
    %21 = vector.broadcast %20 : vector<1x128xf32> to vector<128x128xf32>
    %22 = arith.addf %19, %21 : vector<128x128xf32>
    %cst_22 = arith.constant 0.000000e+00 : f32
    %23 = vector.broadcast %cst_22 : f32 to vector<128x128xf32>
    %24 = arith.maximumf %22, %23 : vector<128x128xf32>
    %c0_23 = arith.constant 0 : index
    %c0_24 = arith.constant 0 : index
    %25 = vector.load %arg9[%c0_23, %c0_24] : memref<128x256xf32, #tpu.memory_space<vmem>>, vector<128x256xf32>
    %cst_25 = arith.constant dense<0.000000e+00> : vector<128x256xf32>
    %26 = tpu.matmul %24, %25, %cst_25 {dimension_numbers = #tpu.dot_dimension_numbers<[1], [0], [0], [1], [0, 0, 1, 1], [], []>} : vector<128x128xf32>, vector<128x256xf32>, vector<128x256xf32> -> vector<128x256xf32>
    %c0_26 = arith.constant 0 : index
    %c0_27 = arith.constant 0 : index
    %27 = vector.load %arg10[%c0_26, %c0_27] : memref<1x256xf32, #tpu.memory_space<vmem>>, vector<1x256xf32>
    %28 = vector.broadcast %27 : vector<1x256xf32> to vector<128x256xf32>
    %29 = arith.addf %26, %28 : vector<128x256xf32>
    %cst_28 = arith.constant 0.000000e+00 : f32
    %30 = vector.broadcast %cst_28 : f32 to vector<128x256xf32>
    %31 = arith.subf %30, %29 : vector<128x256xf32>
    %32 = math.exp %31 : vector<128x256xf32>
    %cst_29 = arith.constant 1.000000e+00 : f32
    %33 = vector.broadcast %cst_29 : f32 to vector<128x256xf32>
    %34 = arith.addf %33, %32 : vector<128x256xf32>
    %35 = tpu.reciprocal %34 {approx = true} : vector<128x256xf32> -> vector<128x256xf32>
    %36 = arith.truncf %35 : vector<128x256xf32> to vector<128x256xbf16>
    %c0_30 = arith.constant 0 : index
    %c0_31 = arith.constant 0 : index
    %37 = vector.load %arg11[%c0_30, %c0_31] : memref<128x256xbf16, #tpu.memory_space<vmem>>, vector<128x256xbf16>
    tpu.vector_store %arg11[%c0_30, %c0_31], %36 {strides = array<i32>} : memref<128x256xbf16, #tpu.memory_space<vmem>>, vector<128x256xbf16>,
    return
  }
  func.func @transform_0(%arg0: i32) -> (i32, i32) {
    %c0_i32 = arith.constant 0 : i32
    %c0_i32_0 = arith.constant 0 : i32
    %c0_i32_1 = arith.constant 0 : i32
    return %c0_i32, %c0_i32_0 : i32, i32
  }
  func.func @transform_1(%arg0: i32) -> (i32, i32) {
    %c0_i32 = arith.constant 0 : i32
    %c0_i32_0 = arith.constant 0 : i32
    %c0_i32_1 = arith.constant 0 : i32
    return %c0_i32, %c0_i32_0 : i32, i32
  }
  func.func @transform_2(%arg0: i32) -> (i32, i32) {
    %c0_i32 = arith.constant 0 : i32
    %c0_i32_0 = arith.constant 0 : i32
    return %arg0, %c0_i32 : i32, i32
  }
  func.func @transform_3(%arg0: i32) -> (i32, i32) {
    %c0_i32 = arith.constant 0 : i32
    %c0_i32_0 = arith.constant 0 : i32
    return %arg0, %c0_i32 : i32, i32
  }
  func.func @transform_4(%arg0: i32) -> (i32, i32) {
    %c0_i32 = arith.constant 0 : i32
    %c0_i32_0 = arith.constant 0 : i32
    return %arg0, %c0_i32 : i32, i32
  }
  func.func @transform_5(%arg0: i32) -> (i32, i32) {
    %c0_i32 = arith.constant 0 : i32
    %c0_i32_0 = arith.constant 0 : i32
    %c0_i32_1 = arith.constant 0 : i32
    return %c0_i32, %c0_i32_0 : i32, i32
  }
  func.func @transform_6(%arg0: i32) -> (i32, i32) {
    %c0_i32 = arith.constant 0 : i32
    %c0_i32_0 = arith.constant 0 : i32
    %c0_i32_1 = arith.constant 0 : i32
    return %c0_i32, %c0_i32_0 : i32, i32
  }
  func.func @transform_7(%arg0: i32) -> (i32, i32) {
    %c0_i32 = arith.constant 0 : i32
    %c0_i32_0 = arith.constant 0 : i32
    %c0_i32_1 = arith.constant 0 : i32
    return %c0_i32, %c0_i32_0 : i32, i32
  }
  func.func @transform_8(%arg0: i32) -> (i32, i32) {
    %c0_i32 = arith.constant 0 : i32
    %c0_i32_0 = arith.constant 0 : i32
    %c0_i32_1 = arith.constant 0 : i32
    return %c0_i32, %c0_i32_0 : i32, i32
  }
  func.func @transform_9(%arg0: i32) -> (i32, i32) {
    %c0_i32 = arith.constant 0 : i32
    %c0_i32_0 = arith.constant 0 : i32
    %c0_i32_1 = arith.constant 0 : i32
    return %c0_i32, %c0_i32_0 : i32, i32
  }
  func.func @transform_10(%arg0: i32) -> (i32, i32) {
    %c0_i32 = arith.constant 0 : i32
    %c0_i32_0 = arith.constant 0 : i32
    return %arg0, %c0_i32 : i32, i32
  }
  func.func @transform_11(%arg0: i32) -> (i32, i32) {
    %c0_i32 = arith.constant 0 : i32
    %c0_i32_0 = arith.constant 0 : i32
    return %arg0, %c0_i32 : i32, i32
  }
  func.func @transform_12(%arg0: i32) -> (i32, i32) {
    %c0_i32 = arith.constant 0 : i32
    %c0_i32_0 = arith.constant 0 : i32
    return %arg0, %c0_i32 : i32, i32
  }
}

</mosaic_0001>

<llo_original>
// kernel: vgae5_forward.2
$region0: #{vgae5_forward.2}
  #allocation0 [shape = 'u32[]', space=smem, size = 0x4, offset = 0x4, fixed_abs, tag = 'smem constant byte address 0x4 - core index']
  #allocation1 [shape = 'u32[144,128]{1,0:T(1,128)}', space=vmem, size = 0x12000, scoped, tag = 'internal scratch']
  %s0 = inlined_call_operand.vmem [shape: f32[256,128], index: 0, kind: input, shape index: {}]
  %s1 = inlined_call_operand.vmem [shape: f32[256,128], index: 1, kind: input, shape index: {}]
  %s2 = inlined_call_operand.vmem [shape: f32[128,128], index: 2, kind: input, shape index: {}]
  %s3 = inlined_call_operand.vmem [shape: f32[128,128], index: 3, kind: input, shape index: {}]
  %s4 = inlined_call_operand.vmem [shape: bf16[256,256], index: 4, kind: input, shape index: {}]
  %s5 = inlined_call_operand.vmem [shape: f32[256,128], index: 5, kind: output, shape index: {}]
  %s6 = sld [smem:[#allocation0]]
  $region53: #{vgae5_forward.2} parent=0
    _
  %s8 = ssub.s32 1, %s6
  %s9 = scalar_select 0, %s8, %s6
  loop: start=0, step=1, limit=4
  $region2: #{vgae5_forward.2} parent=0 // loop_pre_header
    _
  $region3: #{vgae5_forward.2} parent=0 // loop_header
    %s11 = sphi 0, %s15
    %p12 = scmp.ge.s32.totalorder %s11, 4
    %s19 = sphi 0, %s19
    %s21 = sphi 0, %s19
    %s22 = sphi 0, %s21
    %s36 = sphi 0, %s22
    %s40 = sphi 0, %s40
    %s42 = sphi 0, %s40
    %s43 = sphi 0, %s42
    %s57 = sphi 0, %s43
    %s61 = sphi 0, %s61
    %s63 = sphi 0, %s61
    %s64 = sphi 0, %s63
    %s78 = sphi 0, %s64
    %s82 = sphi 0, %s82
    %s84 = sphi 0, %s82
    %s85 = sphi 0, %s84
    %s99 = sphi 0, %s85
    %s105 = sphi 0, %s107
    %s108 = sphi 0, %s105
    %s109 = sphi 0, %s108
    %s125 = sphi 0, %s109
    %s131 = sphi 0, %s133
    %s134 = sphi 0, %s131
    %s135 = sphi 0, %s134
    %s151 = sphi 0, %s135
  $region4: #{vgae5_forward.2} parent=0 // loop_header_branch
    %14 = sbr.rel (%p12) target = $region8
  $region5: #{vgae5_forward.2} parent=0 // loop_body
    %s16 = ssub.s32 %s11, 1
    %s17 = ssub.s32 %s11, 2
    %s18 = sadd.s32 %s11, 1
    %s20 = sadd.s32 %s19, 1
    %p23 = scmp.eq.s32.totalorder %s11, 1
    %p24 = scmp.ne.s32.totalorder %s19, %s21
    %p25 = scmp.eq.s32.totalorder %s11, 0
    %p26 = por %p24, %p25
    %p27 = scmp.ne.s32.totalorder %s19, %s21
    %p28 = scmp.eq.s32.totalorder %s16, 1
    %p29 = por %p27, %p28
    %p30 = scmp.ne.s32.totalorder %s21, %s22
    %p31 = scmp.eq.s32.totalorder %s16, 0
    %p32 = por %p30, %p31
    %p33 = scmp.ne.s32.totalorder %s21, %s22
    %p34 = scmp.eq.s32.totalorder %s17, 1
    %p35 = por %p33, %p34
    %p37 = scmp.ne.s32.totalorder %s22, %s36
    %p38 = scmp.eq.s32.totalorder %s17, 0
    %p39 = por %p37, %p38
    %s41 = sadd.s32 %s40, 1
    %p44 = scmp.eq.s32.totalorder %s11, 1
    %p45 = scmp.ne.s32.totalorder %s40, %s42
    %p46 = scmp.eq.s32.totalorder %s11, 0
    %p47 = por %p45, %p46
    %p48 = scmp.ne.s32.totalorder %s40, %s42
    %p49 = scmp.eq.s32.totalorder %s16, 1
    %p50 = por %p48, %p49
    %p51 = scmp.ne.s32.totalorder %s42, %s43
    %p52 = scmp.eq.s32.totalorder %s16, 0
    %p53 = por %p51, %p52
    %p54 = scmp.ne.s32.totalorder %s42, %s43
    %p55 = scmp.eq.s32.totalorder %s17, 1
    %p56 = por %p54, %p55
    %p58 = scmp.ne.s32.totalorder %s43, %s57
    %p59 = scmp.eq.s32.totalorder %s17, 0
    %p60 = por %p58, %p59
    %s62 = sadd.s32 %s61, 1
    %p65 = scmp.eq.s32.totalorder %s11, 1
    %p66 = scmp.ne.s32.totalorder %s61, %s63
    %p67 = scmp.eq.s32.totalorder %s11, 0
    %p68 = por %p66, %p67
    %p69 = scmp.ne.s32.totalorder %s61, %s63
    %p70 = scmp.eq.s32.totalorder %s16, 1
    %p71 = por %p69, %p70
    %p72 = scmp.ne.s32.totalorder %s63, %s64
    %p73 = scmp.eq.s32.totalorder %s16, 0
    %p74 = por %p72, %p73
    %p75 = scmp.ne.s32.totalorder %s63, %s64
    %p76 = scmp.eq.s32.totalorder %s17, 1
    %p77 = por %p75, %p76
    %p79 = scmp.ne.s32.totalorder %s64, %s78
    %p80 = scmp.eq.s32.totalorder %s17, 0
    %p81 = por %p79, %p80
    %s83 = sadd.s32 %s82, 1
    %p86 = scmp.eq.s32.totalorder %s11, 1
    %p87 = scmp.ne.s32.totalorder %s82, %s84
    %p88 = scmp.eq.s32.totalorder %s11, 0
    %p89 = por %p87, %p88
    %p90 = scmp.ne.s32.totalorder %s82, %s84
    %p91 = scmp.eq.s32.totalorder %s16, 1
    %p92 = por %p90, %p91
    %p93 = scmp.ne.s32.totalorder %s84, %s85
    %p94 = scmp.eq.s32.totalorder %s16, 0
    %p95 = por %p93, %p94
    %p96 = scmp.ne.s32.totalorder %s84, %s85
    %p97 = scmp.eq.s32.totalorder %s17, 1
    %p98 = por %p96, %p97
    %p100 = scmp.ne.s32.totalorder %s85, %s99
    %p101 = scmp.eq.s32.totalorder %s17, 0
    %p102 = por %p100, %p101
    %s103 = ssub.s32 %s11, %s18
    %p104 = scmp.eq.s32.totalorder %s103, 0
    %s106 = sadd.s32 %s105, 1
    %s107 = scalar_select %p104, %s105, %s106
    %p110 = pneg %p104
    %p111 = scmp.eq.s32.totalorder %s11, 1
    %p112 = por %p110, %p111
    %p113 = scmp.ne.s32.totalorder %s105, %s108
    %p114 = scmp.eq.s32.totalorder %s11, 0
    %p115 = por %p113, %p114
    %p116 = scmp.ne.s32.totalorder %s105, %s108
    %p117 = scmp.eq.s32.totalorder %s16, 1
    %p118 = por %p116, %p117
    %p119 = scmp.ne.s32.totalorder %s108, %s109
    %p120 = scmp.eq.s32.totalorder %s16, 0
    %p121 = por %p119, %p120
    %p122 = scmp.ne.s32.totalorder %s108, %s109
    %p123 = scmp.eq.s32.totalorder %s17, 1
    %p124 = por %p122, %p123
    %p126 = scmp.ne.s32.totalorder %s109, %s125
    %p127 = scmp.eq.s32.totalorder %s17, 0
    %p128 = por %p126, %p127
    %s129 = ssub.s32 %s11, %s18
    %p130 = scmp.eq.s32.totalorder %s129, 0
    %s132 = sadd.s32 %s131, 1
    %s133 = scalar_select %p130, %s131, %s132
    %p136 = pneg %p130
    %p137 = scmp.eq.s32.totalorder %s11, 1
    %p138 = por %p136, %p137
    %p139 = scmp.ne.s32.totalorder %s131, %s134
    %p140 = scmp.eq.s32.totalorder %s11, 0
    %p141 = por %p139, %p140
    %p142 = scmp.ne.s32.totalorder %s131, %s134
    %p143 = scmp.eq.s32.totalorder %s16, 1
    %p144 = por %p142, %p143
    %p145 = scmp.ne.s32.totalorder %s134, %s135
    %p146 = scmp.eq.s32.totalorder %s16, 0
    %p147 = por %p145, %p146
    %p148 = scmp.ne.s32.totalorder %s134, %s135
    %p149 = scmp.eq.s32.totalorder %s17, 1
    %p150 = por %p148, %p149
    %p152 = scmp.ne.s32.totalorder %s135, %s151
    %p153 = scmp.eq.s32.totalorder %s17, 0
    %p154 = por %p152, %p153
    %p155 = scmp.le.s32.totalorder 1, %s11
    %p156 = scmp.lt.s32.totalorder %s11, 3
    %p157 = pnand %p155, %p156
    %p158 = pneg %p157
    // Predicated region
    $region9: #{vgae5_forward.2} parent=5 // pred_check
      _
    $region10: #{vgae5_forward.2} parent=5 // pred_check_branch
      %160 = sbr.rel (%p157) target = $region12
    $region11: #{vgae5_forward.2} parent=5 // pred_region
      %s161 = ssub.s32 %s11, 1
      // Predicated region
      $region13: #{vgae5_forward.2} parent=11 // pred_check
        %p162 = pneg %p32
      $region14: #{vgae5_forward.2} parent=11 // pred_check_branch
        %164 = sbr.rel (%p162) target = $region16
      $region15: #{vgae5_forward.2} parent=11 // pred_region
        _
      $region16: #{vgae5_forward.2} parent=11 // pred_fallthru
        _
      // Predicated region
      $region17: #{vgae5_forward.2} parent=11 // pred_check
        %p165 = pneg %p53
      $region18: #{vgae5_forward.2} parent=11 // pred_check_branch
        %167 = sbr.rel (%p165) target = $region20
      $region19: #{vgae5_forward.2} parent=11 // pred_region
        _
      $region20: #{vgae5_forward.2} parent=11 // pred_fallthru
        _
      // Predicated region
      $region21: #{vgae5_forward.2} parent=11 // pred_check
        %p168 = pneg %p74
      $region22: #{vgae5_forward.2} parent=11 // pred_check_branch
        %170 = sbr.rel (%p168) target = $region24
      $region23: #{vgae5_forward.2} parent=11 // pred_region
        _
      $region24: #{vgae5_forward.2} parent=11 // pred_fallthru
        _
      // Predicated region
      $region25: #{vgae5_forward.2} parent=11 // pred_check
        %p171 = pneg %p95
      $region26: #{vgae5_forward.2} parent=11 // pred_check_branch
        %173 = sbr.rel (%p171) target = $region28
      $region27: #{vgae5_forward.2} parent=11 // pred_region
        _
      $region28: #{vgae5_forward.2} parent=11 // pred_fallthru
        _
    $region12: #{vgae5_forward.2} parent=5 // pred_fallthru
      _
    %p174 = scmp.lt.s32.totalorder %s11, 2
    // Predicated region
    $region29: #{vgae5_forward.2} parent=5 // pred_check
      %p175 = pneg %p174
    $region30: #{vgae5_forward.2} parent=5 // pred_check_branch
      %177 = sbr.rel (%p175) target = $region32
    $region31: #{vgae5_forward.2} parent=5 // pred_region
      // Predicated region
      $region33: #{vgae5_forward.2} parent=31 // pred_check
        %p178 = pneg %p115
      $region34: #{vgae5_forward.2} parent=31 // pred_check_branch
        %180 = sbr.rel (%p178) target = $region36
      $region35: #{vgae5_forward.2} parent=31 // pred_region
        %s181 = smul.u32 16, %s11
        %p182 = scmp.lt.s32.totalorder %s181, 31
        %s183 = scalar_select %p182, %s181, 31
        %s184 = smul.addr %s183, 2
        %s185 = smul.addr %s184, 4
        %s186 = scalar_lea.vmem %s4, %s185
        %s187 = smul.u32 16, %s11
      $region36: #{vgae5_forward.2} parent=31 // pred_fallthru
        _
    $region32: #{vgae5_forward.2} parent=5 // pred_fallthru
      _
    %p188 = scmp.le.s32.totalorder 1, %s11
    %p189 = scmp.lt.s32.totalorder %s11, 3
    %p190 = pnand %p188, %p189
    %p191 = pneg %p190
    // Predicated region
    $region37: #{vgae5_forward.2} parent=5 // pred_check
      _
    $region38: #{vgae5_forward.2} parent=5 // pred_check_branch
      %193 = sbr.rel (%p190) target = $region40
    $region39: #{vgae5_forward.2} parent=5 // pred_region
      %s194 = ssub.s32 %s11, 1
      %p195 = pneg %p32
      %p196 = pneg %p29
      %p197 = pneg %p53
      %p198 = pneg %p50
      %p199 = pneg %p74
      %p200 = pneg %p71
      %p201 = pneg %p95
      %p202 = pneg %p92
      %s203 = smul.u32 16, %s16
      %p204 = scmp.lt.s32.totalorder %s203, 31
      %s205 = scalar_select %p204, %s203, 31
      %s206 = smul.addr %s205, 2
      %s207 = smul.addr %s206, 4
      %s208 = scalar_lea.vmem %s4, %s207
      %p209 = pneg %p121
      %p210 = pneg %p118
      %p211 = pneg %p147
      %p212 = pneg %p144
      %s213 = smul.u32 16, %s16
      %p214 = scmp.lt.s32.totalorder %s213, 31
      %s215 = scalar_select %p214, %s213, 31
      %s216 = smul.addr %s215, 8
      %s217 = scalar_lea.vmem %s5, %s216
      %s218 = smul.u32 16, %s16
      %p219 = scmp.lt.s32.totalorder %s218, 31
      %s220 = scalar_select %p219, %s218, 31
      %s221 = smul.addr %s220, 2
      %s222 = smul.addr %s221, 4
      %s223 = scalar_lea.vmem %s4, %s222
      %s224 = smul.u32 16, %s16
      %s225 = smul.u32 16, %s16
      %p226 = scmp.lt.s32.totalorder %s225, 31
      %s227 = scalar_select %p226, %s225, 31
      %s228 = smul.addr %s227, 8
      %s229 = scalar_lea.vmem %s5, %s228
      %s230 = smul.u32 16, %s16
      %v231 = vld [vmem:[%s0] sm:$0xff]
      %v232 = vld [vmem:[%s0 + $0x8] sm:$0xff]
      %v233 = vld [vmem:[%s0 + $0x10] sm:$0xff]
      %v234 = vld [vmem:[%s0 + $0x18] sm:$0xff]
      %v235 = vld [vmem:[%s0 + $0x20] sm:$0xff]
      %v236 = vld [vmem:[%s0 + $0x28] sm:$0xff]
      %v237 = vld [vmem:[%s0 + $0x30] sm:$0xff]
      %v238 = vld [vmem:[%s0 + $0x38] sm:$0xff]
      %v239 = vld [vmem:[%s0 + $0x40] sm:$0xff]
      %v240 = vld [vmem:[%s0 + $0x48] sm:$0xff]
      %v241 = vld [vmem:[%s0 + $0x50] sm:$0xff]
      %v242 = vld [vmem:[%s0 + $0x58] sm:$0xff]
      %v243 = vld [vmem:[%s0 + $0x60] sm:$0xff]
      %v244 = vld [vmem:[%s0 + $0x68] sm:$0xff]
      %v245 = vld [vmem:[%s0 + $0x70] sm:$0xff]
      %v246 = vld [vmem:[%s0 + $0x78] sm:$0xff]
      %v247 = vld [vmem:[%s0 + $0x80] sm:$0xff]
      %v248 = vld [vmem:[%s0 + $0x88] sm:$0xff]
      %v249 = vld [vmem:[%s0 + $0x90] sm:$0xff]
      %v250 = vld [vmem:[%s0 + $0x98] sm:$0xff]
      %v251 = vld [vmem:[%s0 + $0xa0] sm:$0xff]
      %v252 = vld [vmem:[%s0 + $0xa8] sm:$0xff]
      %v253 = vld [vmem:[%s0 + $0xb0] sm:$0xff]
      %v254 = vld [vmem:[%s0 + $0xb8] sm:$0xff]
      %v255 = vld [vmem:[%s0 + $0xc0] sm:$0xff]
      %v256 = vld [vmem:[%s0 + $0xc8] sm:$0xff]
      %v257 = vld [vmem:[%s0 + $0xd0] sm:$0xff]
      %v258 = vld [vmem:[%s0 + $0xd8] sm:$0xff]
      %v259 = vld [vmem:[%s0 + $0xe0] sm:$0xff]
      %v260 = vld [vmem:[%s0 + $0xe8] sm:$0xff]
      %v261 = vld [vmem:[%s0 + $0xf0] sm:$0xff]
      %v262 = vld [vmem:[%s0 + $0xf8] sm:$0xff]
      %v263 = vld [vmem:[%s2] sm:$0xff]
      %v264 = vld [vmem:[%s2 + $0x8] sm:$0xff]
      %v265 = vld [vmem:[%s2 + $0x10] sm:$0xff]
      %v266 = vld [vmem:[%s2 + $0x18] sm:$0xff]
      %v267 = vld [vmem:[%s2 + $0x20] sm:$0xff]
      %v268 = vld [vmem:[%s2 + $0x28] sm:$0xff]
      %v269 = vld [vmem:[%s2 + $0x30] sm:$0xff]
      %v270 = vld [vmem:[%s2 + $0x38] sm:$0xff]
      %v271 = vld [vmem:[%s2 + $0x40] sm:$0xff]
      %v272 = vld [vmem:[%s2 + $0x48] sm:$0xff]
      %v273 = vld [vmem:[%s2 + $0x50] sm:$0xff]
      %v274 = vld [vmem:[%s2 + $0x58] sm:$0xff]
      %v275 = vld [vmem:[%s2 + $0x60] sm:$0xff]
      %v276 = vld [vmem:[%s2 + $0x68] sm:$0xff]
      %v277 = vld [vmem:[%s2 + $0x70] sm:$0xff]
      %v278 = vld [vmem:[%s2 + $0x78] sm:$0xff]
      %v279 = vld [vmem:[%s1] sm:$0xff]
      %v280 = vld [vmem:[%s1 + $0x8] sm:$0xff]
      %v281 = vld [vmem:[%s1 + $0x10] sm:$0xff]
      %v282 = vld [vmem:[%s1 + $0x18] sm:$0xff]
      %v283 = vld [vmem:[%s1 + $0x20] sm:$0xff]
      %v284 = vld [vmem:[%s1 + $0x28] sm:$0xff]
      %v285 = vld [vmem:[%s1 + $0x30] sm:$0xff]
      %v286 = vld [vmem:[%s1 + $0x38] sm:$0xff]
      %v287 = vld [vmem:[%s1 + $0x40] sm:$0xff]
      %v288 = vld [vmem:[%s1 + $0x48] sm:$0xff]
      %v289 = vld [vmem:[%s1 + $0x50] sm:$0xff]
      %v290 = vld [vmem:[%s1 + $0x58] sm:$0xff]
      %v291 = vld [vmem:[%s1 + $0x60] sm:$0xff]
      %v292 = vld [vmem:[%s1 + $0x68] sm:$0xff]
      %v293 = vld [vmem:[%s1 + $0x70] sm:$0xff]
      %v294 = vld [vmem:[%s1 + $0x78] sm:$0xff]
      %v295 = vld [vmem:[%s1 + $0x80] sm:$0xff]
      %v296 = vld [vmem:[%s1 + $0x88] sm:$0xff]
      %v297 = vld [vmem:[%s1 + $0x90] sm:$0xff]
      %v298 = vld [vmem:[%s1 + $0x98] sm:$0xff]
      %v299 = vld [vmem:[%s1 + $0xa0] sm:$0xff]
      %v300 = vld [vmem:[%s1 + $0xa8] sm:$0xff]
      %v301 = vld [vmem:[%s1 + $0xb0] sm:$0xff]
      %v302 = vld [vmem:[%s1 + $0xb8] sm:$0xff]
      %v303 = vld [vmem:[%s1 + $0xc0] sm:$0xff]
      %v304 = vld [vmem:[%s1 + $0xc8] sm:$0xff]
      %v305 = vld [vmem:[%s1 + $0xd0] sm:$0xff]
      %v306 = vld [vmem:[%s1 + $0xd8] sm:$0xff]
      %v307 = vld [vmem:[%s1 + $0xe0] sm:$0xff]
      %v308 = vld [vmem:[%s1 + $0xe8] sm:$0xff]
      %v309 = vld [vmem:[%s1 + $0xf0] sm:$0xff]
      %v310 = vld [vmem:[%s1 + $0xf8] sm:$0xff]
      %v311 = vld [vmem:[%s3] sm:$0xff]
      %v312 = vld [vmem:[%s3 + $0x8] sm:$0xff]
      %v313 = vld [vmem:[%s3 + $0x10] sm:$0xff]
      %v314 = vld [vmem:[%s3 + $0x18] sm:$0xff]
      %v315 = vld [vmem:[%s3 + $0x20] sm:$0xff]
      %v316 = vld [vmem:[%s3 + $0x28] sm:$0xff]
      %v317 = vld [vmem:[%s3 + $0x30] sm:$0xff]
      %v318 = vld [vmem:[%s3 + $0x38] sm:$0xff]
      %v319 = vld [vmem:[%s3 + $0x40] sm:$0xff]
      %v320 = vld [vmem:[%s3 + $0x48] sm:$0xff]
      %v321 = vld [vmem:[%s3 + $0x50] sm:$0xff]
      %v322 = vld [vmem:[%s3 + $0x58] sm:$0xff]
      %v323 = vld [vmem:[%s3 + $0x60] sm:$0xff]
      %v324 = vld [vmem:[%s3 + $0x68] sm:$0xff]
      %v325 = vld [vmem:[%s3 + $0x70] sm:$0xff]
      %v326 = vld [vmem:[%s3 + $0x78] sm:$0xff]
      %327 = vmatprep.subr.mxu0 0.0
      %328 = vmatpush1.msra.mxu0 %v311
      %329 = vmatprep.subr.mxu0 0.0
      %330 = vmatpush1.msra.mxu0 %v312
      %331 = vmatprep.subr.mxu0 0.0
      %332 = vmatpush1.msra.mxu0 %v313
      %333 = vmatprep.subr.mxu0 0.0
      %334 = vmatpush1.msra.mxu0 %v314
      %335 = vmatprep.subr.mxu0 0.0
      %336 = vmatpush1.msra.mxu0 %v315
      %337 = vmatprep.subr.mxu0 0.0
      %338 = vmatpush1.msra.mxu0 %v316
      %339 = vmatprep.subr.mxu0 0.0
      %340 = vmatpush1.msra.mxu0 %v317
      %341 = vmatprep.subr.mxu0 0.0
      %342 = vmatpush1.msra.mxu0 %v318
      %343 = vmatprep.subr.mxu0 0.0
      %344 = vmatpush1.msra.mxu0 %v319
      %345 = vmatprep.subr.mxu0 0.0
      %346 = vmatpush1.msra.mxu0 %v320
      %347 = vmatprep.subr.mxu0 0.0
      %348 = vmatpush1.msra.mxu0 %v321
      %349 = vmatprep.subr.mxu0 0.0
      %350 = vmatpush1.msra.mxu0 %v322
      %351 = vmatprep.subr.mxu0 0.0
      %352 = vmatpush1.msra.mxu0 %v323
      %353 = vmatprep.subr.mxu0 0.0
      %354 = vmatpush1.msra.mxu0 %v324
      %355 = vmatprep.subr.mxu0 0.0
      %356 = vmatpush1.msra.mxu0 %v325
      %357 = vmatprep.subr.mxu0 0.0
      %358 = vmatpush1.msra.mxu0 %v326
      %359 = vmatprep.subr.mxu0 0.0
      %360 = vmatpush1.msra.mxu0 0.0
      %361 = vmatprep.subr.mxu0 0.0
      %362 = vmatpush1.msra.mxu0 0.0
      %363 = vmatprep.subr.mxu0 0.0
      %364 = vmatpush1.msra.mxu0 0.0
      %365 = vmatprep.subr.mxu0 0.0
      %366 = vmatpush1.msra.mxu0 0.0
      %367 = vmatprep.subr.mxu0 0.0
      %368 = vmatpush1.msra.mxu0 0.0
      %369 = vmatprep.subr.mxu0 0.0
      %370 = vmatpush1.msra.mxu0 0.0
      %371 = vmatprep.subr.mxu0 0.0
      %372 = vmatpush1.msra.mxu0 0.0
      %373 = vmatprep.subr.mxu0 0.0
      %374 = vmatpush1.msra.mxu0 0.0
      %375 = vmatprep.subr.mxu0 0.0
      %376 = vmatpush1.msra.mxu0 0.0
      %377 = vmatprep.subr.mxu0 0.0
      %378 = vmatpush1.msra.mxu0 0.0
      %379 = vmatprep.subr.mxu0 0.0
      %380 = vmatpush1.msra.mxu0 0.0
      %381 = vmatprep.subr.mxu0 0.0
      %382 = vmatpush1.msra.mxu0 0.0
      %383 = vmatprep.subr.mxu0 0.0
      %384 = vmatpush1.msra.mxu0 0.0
      %385 = vmatprep.subr.mxu0 0.0
      %386 = vmatpush1.msra.mxu0 0.0
      %387 = vmatprep.subr.mxu0 0.0
      %388 = vmatpush1.msra.mxu0 0.0
      %389 = vmatprep.subr.mxu0 0.0
      %390 = vmatpush1.msra.mxu0 0.0
      %391 = vmatprep.mubr.f32.mxu0 0.0
      %392 = vmatmul.mubr.f32.gmra.mrb[0].mxu0 %v279
      %v393 = vpop.f32.mrb[0].mxu0
      %v394 = vadd.f32 0.0, %v393
      %v395 = vpop.f32.mrb[0].mxu0
      %396 = vmatprep.mubr.f32.mxu0 0.0
      %397 = vmatmul.mubr.f32.gmra.mrb[0].mxu0 %v280
      %v398 = vpop.f32.mrb[0].mxu0
      %v399 = vadd.f32 0.0, %v398
      %v400 = vpop.f32.mrb[0].mxu0
      %401 = vmatprep.mubr.f32.mxu0 0.0
      %402 = vmatmul.mubr.f32.gmra.mrb[0].mxu0 %v281
      %v403 = vpop.f32.mrb[0].mxu0
      %v404 = vadd.f32 0.0, %v403
      %v405 = vpop.f32.mrb[0].mxu0
      %406 = vmatprep.mubr.f32.mxu0 0.0
      %407 = vmatmul.mubr.f32.gmra.mrb[0].mxu0 %v282
      %v408 = vpop.f32.mrb[0].mxu0
      %v409 = vadd.f32 0.0, %v408
      %v410 = vpop.f32.mrb[0].mxu0
      %411 = vmatprep.mubr.f32.mxu0 0.0
      %412 = vmatmul.mubr.f32.gmra.mrb[0].mxu0 %v283
      %v413 = vpop.f32.mrb[0].mxu0
      %v414 = vadd.f32 0.0, %v413
      %v415 = vpop.f32.mrb[0].mxu0
      %416 = vmatprep.mubr.f32.mxu0 0.0
      %417 = vmatmul.mubr.f32.gmra.mrb[0].mxu0 %v284
      %v418 = vpop.f32.mrb[0].mxu0
      %v419 = vadd.f32 0.0, %v418
      %v420 = vpop.f32.mrb[0].mxu0
      %421 = vmatprep.mubr.f32.mxu0 0.0
      %422 = vmatmul.mubr.f32.gmra.mrb[0].mxu0 %v285
      %v423 = vpop.f32.mrb[0].mxu0
      %v424 = vadd.f32 0.0, %v423
      %v425 = vpop.f32.mrb[0].mxu0
      %426 = vmatprep.mubr.f32.mxu0 0.0
      %427 = vmatmul.mubr.f32.gmra.mrb[0].mxu0 %v286
      %v428 = vpop.f32.mrb[0].mxu0
      %v429 = vadd.f32 0.0, %v428
      %v430 = vpop.f32.mrb[0].mxu0
      %431 = vmatprep.mubr.f32.mxu0 0.0
      %432 = vmatmul.mubr.f32.gmra.mrb[0].mxu0 %v287
      %v433 = vpop.f32.mrb[0].mxu0
      %v434 = vadd.f32 0.0, %v433
      %v435 = vpop.f32.mrb[0].mxu0
      %436 = vmatprep.mubr.f32.mxu0 0.0
      %437 = vmatmul.mubr.f32.gmra.mrb[0].mxu0 %v288
      %v438 = vpop.f32.mrb[0].mxu0
      %v439 = vadd.f32 0.0, %v438
      %v440 = vpop.f32.mrb[0].mxu0
      %441 = vmatprep.mubr.f32.mxu0 0.0
      %442 = vmatmul.mubr.f32.gmra.mrb[0].mxu0 %v289
      %v443 = vpop.f32.mrb[0].mxu0
      %v444 = vadd.f32 0.0, %v443
      %v445 = vpop.f32.mrb[0].mxu0
      %446 = vmatprep.mubr.f32.mxu0 0.0
      %447 = vmatmul.mubr.f32.gmra.mrb[0].mxu0 %v290
      %v448 = vpop.f32.mrb[0].mxu0
      %v449 = vadd.f32 0.0, %v448
      %v450 = vpop.f32.mrb[0].mxu0
      %451 = vmatprep.mubr.f32.mxu0 0.0
      %452 = vmatmul.mubr.f32.gmra.mrb[0].mxu0 %v291
      %v453 = vpop.f32.mrb[0].mxu0
      %v454 = vadd.f32 0.0, %v453
      %v455 = vpop.f32.mrb[0].mxu0
      %456 = vmatprep.mubr.f32.mxu0 0.0
      %457 = vmatmul.mubr.f32.gmra.mrb[0].mxu0 %v292
      %v458 = vpop.f32.mrb[0].mxu0
      %v459 = vadd.f32 0.0, %v458
      %v460 = vpop.f32.mrb[0].mxu0
      %461 = vmatprep.mubr.f32.mxu0 0.0
      %462 = vmatmul.mubr.f32.gmra.mrb[0].mxu0 %v293
      %v463 = vpop.f32.mrb[0].mxu0
      %v464 = vadd.f32 0.0, %v463
      %v465 = vpop.f32.mrb[0].mxu0
      %466 = vmatprep.mubr.f32.mxu0 0.0
      %467 = vmatmul.mubr.f32.gmra.mrb[0].mxu0 %v294
      %v468 = vpop.f32.mrb[0].mxu0
      %v469 = vadd.f32 0.0, %v468
      %v470 = vpop.f32.mrb[0].mxu0
      %471 = vmatprep.mubr.f32.mxu0 0.0
      %472 = vmatmul.mubr.f32.gmra.mrb[0].mxu0 %v295
      %v473 = vpop.f32.mrb[0].mxu0
      %v474 = vadd.f32 0.0, %v473
      %v475 = vpop.f32.mrb[0].mxu0
      %476 = vmatprep.mubr.f32.mxu0 0.0
      %477 = vmatmul.mubr.f32.gmra.mrb[0].mxu0 %v296
      %v478 = vpop.f32.mrb[0].mxu0
      %v479 = vadd.f32 0.0, %v478
      %v480 = vpop.f32.mrb[0].mxu0
      %481 = vmatprep.mubr.f32.mxu0 0.0
      %482 = vmatmul.mubr.f32.gmra.mrb[0].mxu0 %v297
      %v483 = vpop.f32.mrb[0].mxu0
      %v484 = vadd.f32 0.0, %v483
      %v485 = vpop.f32.mrb[0].mxu0
      %486 = vmatprep.mubr.f32.mxu0 0.0
      %487 = vmatmul.mubr.f32.gmra.mrb[0].mxu0 %v298
      %v488 = vpop.f32.mrb[0].mxu0
      %v489 = vadd.f32 0.0, %v488
      %v490 = vpop.f32.mrb[0].mxu0
      %491 = vmatprep.mubr.f32.mxu0 0.0
      %492 = vmatmul.mubr.f32.gmra.mrb[0].mxu0 %v299
      %v493 = vpop.f32.mrb[0].mxu0
      %v494 = vadd.f32 0.0, %v493
      %v495 = vpop.f32.mrb[0].mxu0
      %496 = vmatprep.mubr.f32.mxu0 0.0
      %497 = vmatmul.mubr.f32.gmra.mrb[0].mxu0 %v300
      %v498 = vpop.f32.mrb[0].mxu0
      %v499 = vadd.f32 0.0, %v498
      %v500 = vpop.f32.mrb[0].mxu0
      %501 = vmatprep.mubr.f32.mxu0 0.0
      %502 = vmatmul.mubr.f32.gmra.mrb[0].mxu0 %v301
      %v503 = vpop.f32.mrb[0].mxu0
      %v504 = vadd.f32 0.0, %v503
      %v505 = vpop.f32.mrb[0].mxu0
      %506 = vmatprep.mubr.f32.mxu0 0.0
      %507 = vmatmul.mubr.f32.gmra.mrb[0].mxu0 %v302
      %v508 = vpop.f32.mrb[0].mxu0
      %v509 = vadd.f32 0.0, %v508
      %v510 = vpop.f32.mrb[0].mxu0
      %511 = vmatprep.mubr.f32.mxu0 0.0
      %512 = vmatmul.mubr.f32.gmra.mrb[0].mxu0 %v303
      %v513 = vpop.f32.mrb[0].mxu0
      %v514 = vadd.f32 0.0, %v513
      %v515 = vpop.f32.mrb[0].mxu0
      %516 = vmatprep.mubr.f32.mxu0 0.0
      %517 = vmatmul.mubr.f32.gmra.mrb[0].mxu0 %v304
      %v518 = vpop.f32.mrb[0].mxu0
      %v519 = vadd.f32 0.0, %v518
      %v520 = vpop.f32.mrb[0].mxu0
      %521 = vmatprep.mubr.f32.mxu0 0.0
      %522 = vmatmul.mubr.f32.gmra.mrb[0].mxu0 %v305
      %v523 = vpop.f32.mrb[0].mxu0
      %v524 = vadd.f32 0.0, %v523
      %v525 = vpop.f32.mrb[0].mxu0
      %526 = vmatprep.mubr.f32.mxu0 0.0
      %527 = vmatmul.mubr.f32.gmra.mrb[0].mxu0 %v306
      %v528 = vpop.f32.mrb[0].mxu0
      %v529 = vadd.f32 0.0, %v528
      %v530 = vpop.f32.mrb[0].mxu0
      %531 = vmatprep.mubr.f32.mxu0 0.0
      %532 = vmatmul.mubr.f32.gmra.mrb[0].mxu0 %v307
      %v533 = vpop.f32.mrb[0].mxu0
      %v534 = vadd.f32 0.0, %v533
      %v535 = vpop.f32.mrb[0].mxu0
      %536 = vmatprep.mubr.f32.mxu0 0.0
      %537 = vmatmul.mubr.f32.gmra.mrb[0].mxu0 %v308
      %v538 = vpop.f32.mrb[0].mxu0
      %v539 = vadd.f32 0.0, %v538
      %v540 = vpop.f32.mrb[0].mxu0
      %541 = vmatprep.mubr.f32.mxu0 0.0
      %542 = vmatmul.mubr.f32.gmra.mrb[0].mxu0 %v309
      %v543 = vpop.f32.mrb[0].mxu0
      %v544 = vadd.f32 0.0, %v543
      %v545 = vpop.f32.mrb[0].mxu0
      %546 = vmatprep.mubr.f32.mxu0 0.0
      %547 = vmatmul.mubr.f32.gmra.mrb[0].mxu0 %v310
      %v548 = vpop.f32.mrb[0].mxu0
      %v549 = vadd.f32 0.0, %v548
      %v550 = vpop.f32.mrb[0].mxu0
      %551 = vdwg.mxu0
      %552 = vmatprep.subr.mxu0 0.0
      %553 = vmatpush1.msra.mxu0 %v263
      %554 = vmatprep.subr.mxu0 0.0
      %555 = vmatpush1.msra.mxu0 %v264
      %556 = vmatprep.subr.mxu0 0.0
      %557 = vmatpush1.msra.mxu0 %v265
      %558 = vmatprep.subr.mxu0 0.0
      %559 = vmatpush1.msra.mxu0 %v266
      %560 = vmatprep.subr.mxu0 0.0
      %561 = vmatpush1.msra.mxu0 %v267
      %562 = vmatprep.subr.mxu0 0.0
      %563 = vmatpush1.msra.mxu0 %v268
      %564 = vmatprep.subr.mxu0 0.0
      %565 = vmatpush1.msra.mxu0 %v269
      %566 = vmatprep.subr.mxu0 0.0
      %567 = vmatpush1.msra.mxu0 %v270
      %568 = vmatprep.subr.mxu0 0.0
      %569 = vmatpush1.msra.mxu0 %v271
      %570 = vmatprep.subr.mxu0 0.0
      %571 = vmatpush1.msra.mxu0 %v272
      %572 = vmatprep.subr.mxu0 0.0
      %573 = vmatpush1.msra.mxu0 %v273
      %574 = vmatprep.subr.mxu0 0.0
      %575 = vmatpush1.msra.mxu0 %v274
      %576 = vmatprep.subr.mxu0 0.0
      %577 = vmatpush1.msra.mxu0 %v275
      %578 = vmatprep.subr.mxu0 0.0
      %579 = vmatpush1.msra.mxu0 %v276
      %580 = vmatprep.subr.mxu0 0.0
      %581 = vmatpush1.msra.mxu0 %v277
      %582 = vmatprep.subr.mxu0 0.0
      %583 = vmatpush1.msra.mxu0 %v278
      %584 = vmatprep.subr.mxu0 0.0
      %585 = vmatpush1.msra.mxu0 0.0
      %586 = vmatprep.subr.mxu0 0.0
      %587 = vmatpush1.msra.mxu0 0.0
      %588 = vmatprep.subr.mxu0 0.0
      %589 = vmatpush1.msra.mxu0 0.0
      %590 = vmatprep.subr.mxu0 0.0
      %591 = vmatpush1.msra.mxu0 0.0
      %592 = vmatprep.subr.mxu0 0.0
      %593 = vmatpush1.msra.mxu0 0.0
      %594 = vmatprep.subr.mxu0 0.0
      %595 = vmatpush1.msra.mxu0 0.0
      %596 = vmatprep.subr.mxu0 0.0
      %597 = vmatpush1.msra.mxu0 0.0
      %598 = vmatprep.subr.mxu0 0.0
      %599 = vmatpush1.msra.mxu0 0.0
      %600 = vmatprep.subr.mxu0 0.0
      %601 = vmatpush1.msra.mxu0 0.0
      %602 = vmatprep.subr.mxu0 0.0
      %603 = vmatpush1.msra.mxu0 0.0
      %604 = vmatprep.subr.mxu0 0.0
      %605 = vmatpush1.msra.mxu0 0.0
      %606 = vmatprep.subr.mxu0 0.0
      %607 = vmatpush1.msra.mxu0 0.0
      %608 = vmatprep.subr.mxu0 0.0
      %609 = vmatpush1.msra.mxu0 0.0
      %610 = vmatprep.subr.mxu0 0.0
      %611 = vmatpush1.msra.mxu0 0.0
      %612 = vmatprep.subr.mxu0 0.0
      %613 = vmatpush1.msra.mxu0 0.0
      %614 = vmatprep.subr.mxu0 0.0
      %615 = vmatpush1.msra.mxu0 0.0
      %616 = vmatprep.mubr.f32.mxu0 0.0
      %617 = vmatmul.mubr.f32.gmra.mrb[0].mxu0 %v231
      %v618 = vpop.f32.mrb[0].mxu0
      %v619 = vadd.f32 %v394, %v618
      %v620 = vpop.f32.mrb[0].mxu0
      %621 = vmatprep.mubr.f32.mxu0 0.0
      %622 = vmatmul.mubr.f32.gmra.mrb[0].mxu0 %v232
      %v623 = vpop.f32.mrb[0].mxu0
      %v624 = vadd.f32 %v399, %v623
      %v625 = vpop.f32.mrb[0].mxu0
      %626 = vmatprep.mubr.f32.mxu0 0.0
      %627 = vmatmul.mubr.f32.gmra.mrb[0].mxu0 %v233
      %v628 = vpop.f32.mrb[0].mxu0
      %v629 = vadd.f32 %v404, %v628
      %v630 = vpop.f32.mrb[0].mxu0
      %631 = vmatprep.mubr.f32.mxu0 0.0
      %632 = vmatmul.mubr.f32.gmra.mrb[0].mxu0 %v234
      %v633 = vpop.f32.mrb[0].mxu0
      %v634 = vadd.f32 %v409, %v633
      %v635 = vpop.f32.mrb[0].mxu0
      %636 = vmatprep.mubr.f32.mxu0 0.0
      %637 = vmatmul.mubr.f32.gmra.mrb[0].mxu0 %v235
      %v638 = vpop.f32.mrb[0].mxu0
      %v639 = vadd.f32 %v414, %v638
      %v640 = vpop.f32.mrb[0].mxu0
      %641 = vmatprep.mubr.f32.mxu0 0.0
      %642 = vmatmul.mubr.f32.gmra.mrb[0].mxu0 %v236
      %v643 = vpop.f32.mrb[0].mxu0
      %v644 = vadd.f32 %v419, %v643
      %v645 = vpop.f32.mrb[0].mxu0
      %646 = vmatprep.mubr.f32.mxu0 0.0
      %647 = vmatmul.mubr.f32.gmra.mrb[0].mxu0 %v237
      %v648 = vpop.f32.mrb[0].mxu0
      %v649 = vadd.f32 %v424, %v648
      %v650 = vpop.f32.mrb[0].mxu0
      %651 = vmatprep.mubr.f32.mxu0 0.0
      %652 = vmatmul.mubr.f32.gmra.mrb[0].mxu0 %v238
      %v653 = vpop.f32.mrb[0].mxu0
      %v654 = vadd.f32 %v429, %v653
      %v655 = vpop.f32.mrb[0].mxu0
      %656 = vmatprep.mubr.f32.mxu0 0.0
      %657 = vmatmul.mubr.f32.gmra.mrb[0].mxu0 %v239
      %v658 = vpop.f32.mrb[0].mxu0
      %v659 = vadd.f32 %v434, %v658
      %v660 = vpop.f32.mrb[0].mxu0
      %661 = vmatprep.mubr.f32.mxu0 0.0
      %662 = vmatmul.mubr.f32.gmra.mrb[0].mxu0 %v240
      %v663 = vpop.f32.mrb[0].mxu0
      %v664 = vadd.f32 %v439, %v663
      %v665 = vpop.f32.mrb[0].mxu0
      %666 = vmatprep.mubr.f32.mxu0 0.0
      %667 = vmatmul.mubr.f32.gmra.mrb[0].mxu0 %v241
      %v668 = vpop.f32.mrb[0].mxu0
      %v669 = vadd.f32 %v444, %v668
      %v670 = vpop.f32.mrb[0].mxu0
      %671 = vmatprep.mubr.f32.mxu0 0.0
      %672 = vmatmul.mubr.f32.gmra.mrb[0].mxu0 %v242
      %v673 = vpop.f32.mrb[0].mxu0
      %v674 = vadd.f32 %v449, %v673
      %v675 = vpop.f32.mrb[0].mxu0
      %676 = vmatprep.mubr.f32.mxu0 0.0
      %677 = vmatmul.mubr.f32.gmra.mrb[0].mxu0 %v243
      %v678 = vpop.f32.mrb[0].mxu0
      %v679 = vadd.f32 %v454, %v678
      %v680 = vpop.f32.mrb[0].mxu0
      %681 = vmatprep.mubr.f32.mxu0 0.0
      %682 = vmatmul.mubr.f32.gmra.mrb[0].mxu0 %v244
      %v683 = vpop.f32.mrb[0].mxu0
      %v684 = vadd.f32 %v459, %v683
      %v685 = vpop.f32.mrb[0].mxu0
      %686 = vmatprep.mubr.f32.mxu0 0.0
      %687 = vmatmul.mubr.f32.gmra.mrb[0].mxu0 %v245
      %v688 = vpop.f32.mrb[0].mxu0
      %v689 = vadd.f32 %v464, %v688
      %v690 = vpop.f32.mrb[0].mxu0
      %691 = vmatprep.mubr.f32.mxu0 0.0
      %692 = vmatmul.mubr.f32.gmra.mrb[0].mxu0 %v246
      %v693 = vpop.f32.mrb[0].mxu0
      %v694 = vadd.f32 %v469, %v693
      %v695 = vpop.f32.mrb[0].mxu0
      %696 = vmatprep.mubr.f32.mxu0 0.0
      %697 = vmatmul.mubr.f32.gmra.mrb[0].mxu0 %v247
      %v698 = vpop.f32.mrb[0].mxu0
      %v699 = vadd.f32 %v474, %v698
      %v700 = vpop.f32.mrb[0].mxu0
      %701 = vmatprep.mubr.f32.mxu0 0.0
      %702 = vmatmul.mubr.f32.gmra.mrb[0].mxu0 %v248
      %v703 = vpop.f32.mrb[0].mxu0
      %v704 = vadd.f32 %v479, %v703
      %v705 = vpop.f32.mrb[0].mxu0
      %706 = vmatprep.mubr.f32.mxu0 0.0
      %707 = vmatmul.mubr.f32.gmra.mrb[0].mxu0 %v249
      %v708 = vpop.f32.mrb[0].mxu0
      %v709 = vadd.f32 %v484, %v708
      %v710 = vpop.f32.mrb[0].mxu0
      %711 = vmatprep.mubr.f32.mxu0 0.0
      %712 = vmatmul.mubr.f32.gmra.mrb[0].mxu0 %v250
      %v713 = vpop.f32.mrb[0].mxu0
      %v714 = vadd.f32 %v489, %v713
      %v715 = vpop.f32.mrb[0].mxu0
      %716 = vmatprep.mubr.f32.mxu0 0.0
      %717 = vmatmul.mubr.f32.gmra.mrb[0].mxu0 %v251
      %v718 = vpop.f32.mrb[0].mxu0
      %v719 = vadd.f32 %v494, %v718
      %v720 = vpop.f32.mrb[0].mxu0
      %721 = vmatprep.mubr.f32.mxu0 0.0
      %722 = vmatmul.mubr.f32.gmra.mrb[0].mxu0 %v252
      %v723 = vpop.f32.mrb[0].mxu0
      %v724 = vadd.f32 %v499, %v723
      %v725 = vpop.f32.mrb[0].mxu0
      %726 = vmatprep.mubr.f32.mxu0 0.0
      %727 = vmatmul.mubr.f32.gmra.mrb[0].mxu0 %v253
      %v728 = vpop.f32.mrb[0].mxu0
      %v729 = vadd.f32 %v504, %v728
      %v730 = vpop.f32.mrb[0].mxu0
      %731 = vmatprep.mubr.f32.mxu0 0.0
      %732 = vmatmul.mubr.f32.gmra.mrb[0].mxu0 %v254
      %v733 = vpop.f32.mrb[0].mxu0
      %v734 = vadd.f32 %v509, %v733
      %v735 = vpop.f32.mrb[0].mxu0
      %736 = vmatprep.mubr.f32.mxu0 0.0
      %737 = vmatmul.mubr.f32.gmra.mrb[0].mxu0 %v255
      %v738 = vpop.f32.mrb[0].mxu0
      %v739 = vadd.f32 %v514, %v738
      %v740 = vpop.f32.mrb[0].mxu0
      %741 = vmatprep.mubr.f32.mxu0 0.0
      %742 = vmatmul.mubr.f32.gmra.mrb[0].mxu0 %v256
      %v743 = vpop.f32.mrb[0].mxu0
      %v744 = vadd.f32 %v519, %v743
      %v745 = vpop.f32.mrb[0].mxu0
      %746 = vmatprep.mubr.f32.mxu0 0.0
      %747 = vmatmul.mubr.f32.gmra.mrb[0].mxu0 %v257
      %v748 = vpop.f32.mrb[0].mxu0
      %v749 = vadd.f32 %v524, %v748
      %v750 = vpop.f32.mrb[0].mxu0
      %751 = vmatprep.mubr.f32.mxu0 0.0
      %752 = vmatmul.mubr.f32.gmra.mrb[0].mxu0 %v258
      %v753 = vpop.f32.mrb[0].mxu0
      %v754 = vadd.f32 %v529, %v753
      %v755 = vpop.f32.mrb[0].mxu0
      %756 = vmatprep.mubr.f32.mxu0 0.0
      %757 = vmatmul.mubr.f32.gmra.mrb[0].mxu0 %v259
      %v758 = vpop.f32.mrb[0].mxu0
      %v759 = vadd.f32 %v534, %v758
      %v760 = vpop.f32.mrb[0].mxu0
      %761 = vmatprep.mubr.f32.mxu0 0.0
      %762 = vmatmul.mubr.f32.gmra.mrb[0].mxu0 %v260
      %v763 = vpop.f32.mrb[0].mxu0
      %v764 = vadd.f32 %v539, %v763
      %v765 = vpop.f32.mrb[0].mxu0
      %766 = vmatprep.mubr.f32.mxu0 0.0
      %767 = vmatmul.mubr.f32.gmra.mrb[0].mxu0 %v261
      %v768 = vpop.f32.mrb[0].mxu0
      %v769 = vadd.f32 %v544, %v768
      %v770 = vpop.f32.mrb[0].mxu0
      %771 = vmatprep.mubr.f32.mxu0 0.0
      %772 = vmatmul.mubr.f32.gmra.mrb[0].mxu0 %v262
      %v773 = vpop.f32.mrb[0].mxu0
      %v774 = vadd.f32 %v549, %v773
      %v775 = vpop.f32.mrb[0].mxu0
      %776 = vdwg.mxu0
      %v777 = vld [vmem:[%s223] sm:$0xff]
      %v778 = vld [vmem:[%s223 + $0x8] sm:$0xff]
      %v779 = vld [vmem:[%s223 + $0x10] sm:$0xff]
      %v780 = vld [vmem:[%s223 + $0x18] sm:$0xff]
      %v781 = vld [vmem:[%s223 + $0x20] sm:$0xff]
      %v782 = vld [vmem:[%s223 + $0x28] sm:$0xff]
      %v783 = vld [vmem:[%s223 + $0x30] sm:$0xff]
      %v784 = vld [vmem:[%s223 + $0x38] sm:$0xff]
      %v785 = vld [vmem:[%s223 + $0x40] sm:$0xff]
      %v786 = vld [vmem:[%s223 + $0x48] sm:$0xff]
      %v787 = vld [vmem:[%s223 + $0x50] sm:$0xff]
      %v788 = vld [vmem:[%s223 + $0x58] sm:$0xff]
      %v789 = vld [vmem:[%s223 + $0x60] sm:$0xff]
      %v790 = vld [vmem:[%s223 + $0x68] sm:$0xff]
      %v791 = vld [vmem:[%s223 + $0x70] sm:$0xff]
      %v792 = vld [vmem:[%s223 + $0x78] sm:$0xff]
      %v793 = vunpack.c.l.bf16 %v777
      %v794 = vunpack.c.h.bf16 %v777
      %v795 = vunpack.c.l.bf16 %v778
      %v796 = vunpack.c.h.bf16 %v778
      %v797 = vunpack.c.l.bf16 %v779
      %v798 = vunpack.c.h.bf16 %v779
      %v799 = vunpack.c.l.bf16 %v780
      %v800 = vunpack.c.h.bf16 %v780
      %v801 = vunpack.c.l.bf16 %v781
      %v802 = vunpack.c.h.bf16 %v781
      %v803 = vunpack.c.l.bf16 %v782
      %v804 = vunpack.c.h.bf16 %v782
      %v805 = vunpack.c.l.bf16 %v783
      %v806 = vunpack.c.h.bf16 %v783
      %v807 = vunpack.c.l.bf16 %v784
      %v808 = vunpack.c.h.bf16 %v784
      %v809 = vunpack.c.l.bf16 %v785
      %v810 = vunpack.c.h.bf16 %v785
      %v811 = vunpack.c.l.bf16 %v786
      %v812 = vunpack.c.h.bf16 %v786
      %v813 = vunpack.c.l.bf16 %v787
      %v814 = vunpack.c.h.bf16 %v787
      %v815 = vunpack.c.l.bf16 %v788
      %v816 = vunpack.c.h.bf16 %v788
      %v817 = vunpack.c.l.bf16 %v789
      %v818 = vunpack.c.h.bf16 %v789
      %v819 = vunpack.c.l.bf16 %v790
      %v820 = vunpack.c.h.bf16 %v790
      %v821 = vunpack.c.l.bf16 %v791
      %v822 = vunpack.c.h.bf16 %v791
      %v823 = vunpack.c.l.bf16 %v792
      %v824 = vunpack.c.h.bf16 %v792
      %825 = vmatprep.subr.mxu0 0.0
      %826 = vmatpush1.msra.mxu0 %v619
      %827 = vmatprep.subr.mxu0 0.0
      %828 = vmatpush1.msra.mxu0 %v624
      %829 = vmatprep.subr.mxu0 0.0
      %830 = vmatpush1.msra.mxu0 %v629
      %831 = vmatprep.subr.mxu0 0.0
      %832 = vmatpush1.msra.mxu0 %v634
      %833 = vmatprep.subr.mxu0 0.0
      %834 = vmatpush1.msra.mxu0 %v639
      %835 = vmatprep.subr.mxu0 0.0
      %836 = vmatpush1.msra.mxu0 %v644
      %837 = vmatprep.subr.mxu0 0.0
      %838 = vmatpush1.msra.mxu0 %v649
      %839 = vmatprep.subr.mxu0 0.0
      %840 = vmatpush1.msra.mxu0 %v654
      %841 = vmatprep.subr.mxu0 0.0
      %842 = vmatpush1.msra.mxu0 %v659
      %843 = vmatprep.subr.mxu0 0.0
      %844 = vmatpush1.msra.mxu0 %v664
      %845 = vmatprep.subr.mxu0 0.0
      %846 = vmatpush1.msra.mxu0 %v669
      %847 = vmatprep.subr.mxu0 0.0
      %848 = vmatpush1.msra.mxu0 %v674
      %849 = vmatprep.subr.mxu0 0.0
      %850 = vmatpush1.msra.mxu0 %v679
      %851 = vmatprep.subr.mxu0 0.0
      %852 = vmatpush1.msra.mxu0 %v684
      %853 = vmatprep.subr.mxu0 0.0
      %854 = vmatpush1.msra.mxu0 %v689
      %855 = vmatprep.subr.mxu0 0.0
      %856 = vmatpush1.msra.mxu0 %v694
      %857 = vmatprep.subr.mxu0 0.0
      %858 = vmatpush1.msra.mxu0 %v699
      %859 = vmatprep.subr.mxu0 0.0
      %860 = vmatpush1.msra.mxu0 %v704
      %861 = vmatprep.subr.mxu0 0.0
      %862 = vmatpush1.msra.mxu0 %v709
      %863 = vmatprep.subr.mxu0 0.0
      %864 = vmatpush1.msra.mxu0 %v714
      %865 = vmatprep.subr.mxu0 0.0
      %866 = vmatpush1.msra.mxu0 %v719
      %867 = vmatprep.subr.mxu0 0.0
      %868 = vmatpush1.msra.mxu0 %v724
      %869 = vmatprep.subr.mxu0 0.0
      %870 = vmatpush1.msra.mxu0 %v729
      %871 = vmatprep.subr.mxu0 0.0
      %872 = vmatpush1.msra.mxu0 %v734
      %873 = vmatprep.subr.mxu0 0.0
      %874 = vmatpush1.msra.mxu0 %v739
      %875 = vmatprep.subr.mxu0 0.0
      %876 = vmatpush1.msra.mxu0 %v744
      %877 = vmatprep.subr.mxu0 0.0
      %878 = vmatpush1.msra.mxu0 %v749
      %879 = vmatprep.subr.mxu0 0.0
      %880 = vmatpush1.msra.mxu0 %v754
      %881 = vmatprep.subr.mxu0 0.0
      %882 = vmatpush1.msra.mxu0 %v759
      %883 = vmatprep.subr.mxu0 0.0
      %884 = vmatpush1.msra.mxu0 %v764
      %885 = vmatprep.subr.mxu0 0.0
      %886 = vmatpush1.msra.mxu0 %v769
      %887 = vmatprep.subr.mxu0 0.0
      %888 = vmatpush1.msra.mxu0 %v774
      %889 = vmatprep.mubr.f32.mxu0 %v794
      %890 = vmatmul.mubr.f32.gmra.mrb[0].mxu0 %v793
      %v891 = vpop.f32.mrb[0].mxu0
      %v892 = vadd.f32 0.0, %v891
      %v893 = vpop.f32.mrb[0].mxu0
      %894 = vmatprep.mubr.f32.mxu0 %v796
      %895 = vmatmul.mubr.f32.gmra.mrb[0].mxu0 %v795
      %v896 = vpop.f32.mrb[0].mxu0
      %v897 = vadd.f32 0.0, %v896
      %v898 = vpop.f32.mrb[0].mxu0
      %899 = vmatprep.mubr.f32.mxu0 %v798
      %900 = vmatmul.mubr.f32.gmra.mrb[0].mxu0 %v797
      %v901 = vpop.f32.mrb[0].mxu0
      %v902 = vadd.f32 0.0, %v901
      %v903 = vpop.f32.mrb[0].mxu0
      %904 = vmatprep.mubr.f32.mxu0 %v800
      %905 = vmatmul.mubr.f32.gmra.mrb[0].mxu0 %v799
      %v906 = vpop.f32.mrb[0].mxu0
      %v907 = vadd.f32 0.0, %v906
      %v908 = vpop.f32.mrb[0].mxu0
      %909 = vmatprep.mubr.f32.mxu0 %v802
      %910 = vmatmul.mubr.f32.gmra.mrb[0].mxu0 %v801
      %v911 = vpop.f32.mrb[0].mxu0
      %v912 = vadd.f32 0.0, %v911
      %v913 = vpop.f32.mrb[0].mxu0
      %914 = vmatprep.mubr.f32.mxu0 %v804
      %915 = vmatmul.mubr.f32.gmra.mrb[0].mxu0 %v803
      %v916 = vpop.f32.mrb[0].mxu0
      %v917 = vadd.f32 0.0, %v916
      %v918 = vpop.f32.mrb[0].mxu0
      %919 = vmatprep.mubr.f32.mxu0 %v806
      %920 = vmatmul.mubr.f32.gmra.mrb[0].mxu0 %v805
      %v921 = vpop.f32.mrb[0].mxu0
      %v922 = vadd.f32 0.0, %v921
      %v923 = vpop.f32.mrb[0].mxu0
      %924 = vmatprep.mubr.f32.mxu0 %v808
      %925 = vmatmul.mubr.f32.gmra.mrb[0].mxu0 %v807
      %v926 = vpop.f32.mrb[0].mxu0
      %v927 = vadd.f32 0.0, %v926
      %v928 = vpop.f32.mrb[0].mxu0
      %929 = vmatprep.mubr.f32.mxu0 %v810
      %930 = vmatmul.mubr.f32.gmra.mrb[0].mxu0 %v809
      %v931 = vpop.f32.mrb[0].mxu0
      %v932 = vadd.f32 0.0, %v931
      %v933 = vpop.f32.mrb[0].mxu0
      %934 = vmatprep.mubr.f32.mxu0 %v812
      %935 = vmatmul.mubr.f32.gmra.mrb[0].mxu0 %v811
      %v936 = vpop.f32.mrb[0].mxu0
      %v937 = vadd.f32 0.0, %v936
      %v938 = vpop.f32.mrb[0].mxu0
      %939 = vmatprep.mubr.f32.mxu0 %v814
      %940 = vmatmul.mubr.f32.gmra.mrb[0].mxu0 %v813
      %v941 = vpop.f32.mrb[0].mxu0
      %v942 = vadd.f32 0.0, %v941
      %v943 = vpop.f32.mrb[0].mxu0
      %944 = vmatprep.mubr.f32.mxu0 %v816
      %945 = vmatmul.mubr.f32.gmra.mrb[0].mxu0 %v815
      %v946 = vpop.f32.mrb[0].mxu0
      %v947 = vadd.f32 0.0, %v946
      %v948 = vpop.f32.mrb[0].mxu0
      %949 = vmatprep.mubr.f32.mxu0 %v818
      %950 = vmatmul.mubr.f32.gmra.mrb[0].mxu0 %v817
      %v951 = vpop.f32.mrb[0].mxu0
      %v952 = vadd.f32 0.0, %v951
      %v953 = vpop.f32.mrb[0].mxu0
      %954 = vmatprep.mubr.f32.mxu0 %v820
      %955 = vmatmul.mubr.f32.gmra.mrb[0].mxu0 %v819
      %v956 = vpop.f32.mrb[0].mxu0
      %v957 = vadd.f32 0.0, %v956
      %v958 = vpop.f32.mrb[0].mxu0
      %959 = vmatprep.mubr.f32.mxu0 %v822
      %960 = vmatmul.mubr.f32.gmra.mrb[0].mxu0 %v821
      %v961 = vpop.f32.mrb[0].mxu0
      %v962 = vadd.f32 0.0, %v961
      %v963 = vpop.f32.mrb[0].mxu0
      %964 = vmatprep.mubr.f32.mxu0 %v824
      %965 = vmatmul.mubr.f32.gmra.mrb[0].mxu0 %v823
      %v966 = vpop.f32.mrb[0].mxu0
      %v967 = vadd.f32 0.0, %v966
      %v968 = vpop.f32.mrb[0].mxu0
      %969 = vdwg.mxu0
      %v970 = vmax.f32 %v892, 0.0
      %v971 = vmax.f32 %v897, 0.0
      %v972 = vmax.f32 %v902, 0.0
      %v973 = vmax.f32 %v907, 0.0
      %v974 = vmax.f32 %v912, 0.0
      %v975 = vmax.f32 %v917, 0.0
      %v976 = vmax.f32 %v922, 0.0
      %v977 = vmax.f32 %v927, 0.0
      %v978 = vmax.f32 %v932, 0.0
      %v979 = vmax.f32 %v937, 0.0
      %v980 = vmax.f32 %v942, 0.0
      %v981 = vmax.f32 %v947, 0.0
      %v982 = vmax.f32 %v952, 0.0
      %v983 = vmax.f32 %v957, 0.0
      %v984 = vmax.f32 %v962, 0.0
      %v985 = vmax.f32 %v967, 0.0
      %986 = vst [vmem:[%s229] sm:$0xff] %v970
      %987 = vst [vmem:[%s229 + $0x8] sm:$0xff] %v971
      %988 = vst [vmem:[%s229 + $0x10] sm:$0xff] %v972
      %989 = vst [vmem:[%s229 + $0x18] sm:$0xff] %v973
      %990 = vst [vmem:[%s229 + $0x20] sm:$0xff] %v974
      %991 = vst [vmem:[%s229 + $0x28] sm:$0xff] %v975
      %992 = vst [vmem:[%s229 + $0x30] sm:$0xff] %v976
      %993 = vst [vmem:[%s229 + $0x38] sm:$0xff] %v977
      %994 = vst [vmem:[%s229 + $0x40] sm:$0xff] %v978
      %995 = vst [vmem:[%s229 + $0x48] sm:$0xff] %v979
      %996 = vst [vmem:[%s229 + $0x50] sm:$0xff] %v980
      %997 = vst [vmem:[%s229 + $0x58] sm:$0xff] %v981
      %998 = vst [vmem:[%s229 + $0x60] sm:$0xff] %v982
      %999 = vst [vmem:[%s229 + $0x68] sm:$0xff] %v983
      %1000 = vst [vmem:[%s229 + $0x70] sm:$0xff] %v984
      %1001 = vst [vmem:[%s229 + $0x78] sm:$0xff] %v985
      %s1002 = smul.u32 16, %s16
      %p1003 = scmp.lt.s32.totalorder %s1002, 31
      %s1004 = scalar_select %p1003, %s1002, 31
      %s1005 = smul.addr %s1004, 8
      %s1006 = scalar_lea.vmem %s5, %s1005
      // Predicated region
      $region41: #{vgae5_forward.2} parent=39 // pred_check
        %p1007 = pneg %p144
      $region42: #{vgae5_forward.2} parent=39 // pred_check_branch
        %1009 = sbr.rel (%p1007) target = $region44
      $region43: #{vgae5_forward.2} parent=39 // pred_region
        %s1010 = smul.u32 16, %s16
      $region44: #{vgae5_forward.2} parent=39 // pred_fallthru
        _
    $region40: #{vgae5_forward.2} parent=5 // pred_fallthru
      _
    %p1011 = scmp.le.s32.totalorder 2, %s11
    // Predicated region
    $region45: #{vgae5_forward.2} parent=5 // pred_check
      %p1012 = pneg %p1011
    $region46: #{vgae5_forward.2} parent=5 // pred_check_branch
      %1014 = sbr.rel (%p1012) target = $region48
    $region47: #{vgae5_forward.2} parent=5 // pred_region
      %s1015 = ssub.s32 %s11, 2
      // Predicated region
      $region49: #{vgae5_forward.2} parent=47 // pred_check
        %p1016 = pneg %p150
      $region50: #{vgae5_forward.2} parent=47 // pred_check_branch
        %1018 = sbr.rel (%p1016) target = $region52
      $region51: #{vgae5_forward.2} parent=47 // pred_region
        %s1019 = smul.u32 16, %s17
        %p1020 = scmp.lt.s32.totalorder %s1019, 31
        %s1021 = scalar_select %p1020, %s1019, 31
        %s1022 = smul.addr %s1021, 8
        %s1023 = scalar_lea.vmem %s5, %s1022
      $region52: #{vgae5_forward.2} parent=47 // pred_fallthru
        _
    $region48: #{vgae5_forward.2} parent=5 // pred_fallthru
      _
  $region6: #{vgae5_forward.2} parent=0 // loop_footer
    %s15 = sadd.s32 1, %s11
  $region7: #{vgae5_forward.2} parent=0 // loop_footer_branch
    %10 = sbr.rel target = $region3
  $region8: #{vgae5_forward.2} parent=0 // loop_exit
    _

// kernel: vgae5_forward.3
$region0: #{vgae5_forward.3}
  #allocation0 [shape = 'u32[]', space=smem, size = 0x4, offset = 0x4, fixed_abs, tag = 'smem constant byte address 0x4 - core index']
  #allocation1 [shape = 'u32[144,128]{1,0:T(1,128)}', space=vmem, size = 0x12000, scoped, tag = 'internal scratch']
  %s0 = inlined_call_operand.vmem [shape: f32[256,128], index: 0, kind: input, shape index: {}]
  %s1 = inlined_call_operand.vmem [shape: f32[128,256], index: 1, kind: input, shape index: {}]
  %s2 = inlined_call_operand.vmem [shape: bf16[256,256], index: 2, kind: input, shape index: {}]
  %s3 = inlined_call_operand.vmem [shape: f32[256,128], index: 3, kind: input, shape index: {}]
  %s4 = inlined_call_operand.vmem [shape: f32[256,128], index: 4, kind: input, shape index: {}]
  %s5 = inlined_call_operand.vmem [shape: f32[128,128], index: 5, kind: input, shape index: {}]
  %s6 = inlined_call_operand.vmem [shape: f32[128,128], index: 6, kind: input, shape index: {}]
  %s7 = inlined_call_operand.vmem [shape: f32[1,128], index: 7, kind: input, shape index: {}]
  %s8 = inlined_call_operand.vmem [shape: f32[128,256], index: 8, kind: input, shape index: {}]
  %s9 = inlined_call_operand.vmem [shape: f32[1,256], index: 9, kind: input, shape index: {}]
  %s10 = inlined_call_operand.hbm [shape: bf16[256,256], index: 10, kind: output, shape index: {0}]
  %s11 = inlined_call_operand.vmem [shape: f32[256,128], index: 11, kind: output, shape index: {1}]
  %s12 = inlined_call_operand.vmem [shape: f32[256,128], index: 12, kind: output, shape index: {2}]
  %13 = xla_tuple %s10, %s11, %s12
  %s14 = sld [smem:[#allocation0]]
  $region89: #{vgae5_forward.3} parent=0
    _
  %s16 = ssub.s32 1, %s14
  %s17 = scalar_select 0, %s16, %s14
  $region1: #{vgae5_forward.3} parent=0
    #allocation2 [shape = 'u8[131072]{0}', space=vmem, size = 0x20000, scoped, tag = 'output window, operand 0']
    #allocation3 [shape = 's32[2]{0}', space=sflag, size = 0x8, scoped, tag = 'scoped memory for vgae5_forward.3']
    %18 = vsyncpa [#allocation3], 0
    %s19 = scalar_lea.sflag [#allocation3], 1
    %20 = vsyncpa %s19, 0
    loop: start=0, step=1, limit=4
    $region2: #{vgae5_forward.3} parent=1 // loop_pre_header
      _
    $region3: #{vgae5_forward.3} parent=1 // loop_header
      %s22 = sphi 0, %s26
      %p23 = scmp.ge.s32.totalorder %s22, 4
      %s30 = sphi 0, %s30
      %s32 = sphi 0, %s30
      %s33 = sphi 0, %s32
      %s47 = sphi 0, %s33
      %s51 = sphi 0, %s51
      %s53 = sphi 0, %s51
      %s54 = sphi 0, %s53
      %s68 = sphi 0, %s54
      %s74 = sphi 0, %s76
      %s77 = sphi 0, %s74
      %s78 = sphi 0, %s77
      %s94 = sphi 0, %s78
      %s100 = sphi 0, %s102
      %s103 = sphi 0, %s100
      %s104 = sphi 0, %s103
      %s120 = sphi 0, %s104
      %s126 = sphi 0, %s128
      %s129 = sphi 0, %s126
      %s130 = sphi 0, %s129
      %s146 = sphi 0, %s130
      %s150 = sphi 0, %s150
      %s152 = sphi 0, %s150
      %s153 = sphi 0, %s152
      %s167 = sphi 0, %s153
      %s171 = sphi 0, %s171
      %s173 = sphi 0, %s171
      %s174 = sphi 0, %s173
      %s188 = sphi 0, %s174
      %s192 = sphi 0, %s192
      %s194 = sphi 0, %s192
      %s195 = sphi 0, %s194
      %s209 = sphi 0, %s195
      %s213 = sphi 0, %s213
      %s215 = sphi 0, %s213
      %s216 = sphi 0, %s215
      %s230 = sphi 0, %s216
      %s234 = sphi 0, %s234
      %s236 = sphi 0, %s234
      %s237 = sphi 0, %s236
      %s251 = sphi 0, %s237
      %s257 = sphi 0, %s259
      %s260 = sphi 0, %s257
      %s261 = sphi 0, %s260
      %s277 = sphi 0, %s261
      %s283 = sphi 0, %s285
      %s286 = sphi 0, %s283
      %s287 = sphi 0, %s286
      %s303 = sphi 0, %s287
      %s309 = sphi 0, %s311
      %s312 = sphi 0, %s309
      %s313 = sphi 0, %s312
      %s329 = sphi 0, %s313
    $region4: #{vgae5_forward.3} parent=1 // loop_header_branch
      %25 = sbr.rel (%p23) target = $region8
    $region5: #{vgae5_forward.3} parent=1 // loop_body
      %s27 = ssub.s32 %s22, 1
      %s28 = ssub.s32 %s22, 2
      %s29 = sadd.s32 %s22, 1
      %s31 = sadd.s32 %s30, 1
      %p34 = scmp.eq.s32.totalorder %s22, 1
      %p35 = scmp.ne.s32.totalorder %s30, %s32
      %p36 = scmp.eq.s32.totalorder %s22, 0
      %p37 = por %p35, %p36
      %p38 = scmp.ne.s32.totalorder %s30, %s32
      %p39 = scmp.eq.s32.totalorder %s27, 1
      %p40 = por %p38, %p39
      %p41 = scmp.ne.s32.totalorder %s32, %s33
      %p42 = scmp.eq.s32.totalorder %s27, 0
      %p43 = por %p41, %p42
      %p44 = scmp.ne.s32.totalorder %s32, %s33
      %p45 = scmp.eq.s32.totalorder %s28, 1
      %p46 = por %p44, %p45
      %p48 = scmp.ne.s32.totalorder %s33, %s47
      %p49 = scmp.eq.s32.totalorder %s28, 0
      %p50 = por %p48, %p49
      %s52 = sadd.s32 %s51, 1
      %p55 = scmp.eq.s32.totalorder %s22, 1
      %p56 = scmp.ne.s32.totalorder %s51, %s53
      %p57 = scmp.eq.s32.totalorder %s22, 0
      %p58 = por %p56, %p57
      %p59 = scmp.ne.s32.totalorder %s51, %s53
      %p60 = scmp.eq.s32.totalorder %s27, 1
      %p61 = por %p59, %p60
      %p62 = scmp.ne.s32.totalorder %s53, %s54
      %p63 = scmp.eq.s32.totalorder %s27, 0
      %p64 = por %p62, %p63
      %p65 = scmp.ne.s32.totalorder %s53, %s54
      %p66 = scmp.eq.s32.totalorder %s28, 1
      %p67 = por %p65, %p66
      %p69 = scmp.ne.s32.totalorder %s54, %s68
      %p70 = scmp.eq.s32.totalorder %s28, 0
      %p71 = por %p69, %p70
      %s72 = ssub.s32 %s22, %s29
      %p73 = scmp.eq.s32.totalorder %s72, 0
      %s75 = sadd.s32 %s74, 1
      %s76 = scalar_select %p73, %s74, %s75
      %p79 = pneg %p73
      %p80 = scmp.eq.s32.totalorder %s22, 1
      %p81 = por %p79, %p80
      %p82 = scmp.ne.s32.totalorder %s74, %s77
      %p83 = scmp.eq.s32.totalorder %s22, 0
      %p84 = por %p82, %p83
      %p85 = scmp.ne.s32.totalorder %s74, %s77
      %p86 = scmp.eq.s32.totalorder %s27, 1
      %p87 = por %p85, %p86
      %p88 = scmp.ne.s32.totalorder %s77, %s78
      %p89 = scmp.eq.s32.totalorder %s27, 0
      %p90 = por %p88, %p89
      %p91 = scmp.ne.s32.totalorder %s77, %s78
      %p92 = scmp.eq.s32.totalorder %s28, 1
      %p93 = por %p91, %p92
      %p95 = scmp.ne.s32.totalorder %s78, %s94
      %p96 = scmp.eq.s32.totalorder %s28, 0
      %p97 = por %p95, %p96
      %s98 = ssub.s32 %s22, %s29
      %p99 = scmp.eq.s32.totalorder %s98, 0
      %s101 = sadd.s32 %s100, 1
      %s102 = scalar_select %p99, %s100, %s101
      %p105 = pneg %p99
      %p106 = scmp.eq.s32.totalorder %s22, 1
      %p107 = por %p105, %p106
      %p108 = scmp.ne.s32.totalorder %s100, %s103
      %p109 = scmp.eq.s32.totalorder %s22, 0
      %p110 = por %p108, %p109
      %p111 = scmp.ne.s32.totalorder %s100, %s103
      %p112 = scmp.eq.s32.totalorder %s27, 1
      %p113 = por %p111, %p112
      %p114 = scmp.ne.s32.totalorder %s103, %s104
      %p115 = scmp.eq.s32.totalorder %s27, 0
      %p116 = por %p114, %p115
      %p117 = scmp.ne.s32.totalorder %s103, %s104
      %p118 = scmp.eq.s32.totalorder %s28, 1
      %p119 = por %p117, %p118
      %p121 = scmp.ne.s32.totalorder %s104, %s120
      %p122 = scmp.eq.s32.totalorder %s28, 0
      %p123 = por %p121, %p122
      %s124 = ssub.s32 %s22, %s29
      %p125 = scmp.eq.s32.totalorder %s124, 0
      %s127 = sadd.s32 %s126, 1
      %s128 = scalar_select %p125, %s126, %s127
      %p131 = pneg %p125
      %p132 = scmp.eq.s32.totalorder %s22, 1
      %p133 = por %p131, %p132
      %p134 = scmp.ne.s32.totalorder %s126, %s129
      %p135 = scmp.eq.s32.totalorder %s22, 0
      %p136 = por %p134, %p135
      %p137 = scmp.ne.s32.totalorder %s126, %s129
      %p138 = scmp.eq.s32.totalorder %s27, 1
      %p139 = por %p137, %p138
      %p140 = scmp.ne.s32.totalorder %s129, %s130
      %p141 = scmp.eq.s32.totalorder %s27, 0
      %p142 = por %p140, %p141
      %p143 = scmp.ne.s32.totalorder %s129, %s130
      %p144 = scmp.eq.s32.totalorder %s28, 1
      %p145 = por %p143, %p144
      %p147 = scmp.ne.s32.totalorder %s130, %s146
      %p148 = scmp.eq.s32.totalorder %s28, 0
      %p149 = por %p147, %p148
      %s151 = sadd.s32 %s150, 1
      %p154 = scmp.eq.s32.totalorder %s22, 1
      %p155 = scmp.ne.s32.totalorder %s150, %s152
      %p156 = scmp.eq.s32.totalorder %s22, 0
      %p157 = por %p155, %p156
      %p158 = scmp.ne.s32.totalorder %s150, %s152
      %p159 = scmp.eq.s32.totalorder %s27, 1
      %p160 = por %p158, %p159
      %p161 = scmp.ne.s32.totalorder %s152, %s153
      %p162 = scmp.eq.s32.totalorder %s27, 0
      %p163 = por %p161, %p162
      %p164 = scmp.ne.s32.totalorder %s152, %s153
      %p165 = scmp.eq.s32.totalorder %s28, 1
      %p166 = por %p164, %p165
      %p168 = scmp.ne.s32.totalorder %s153, %s167
      %p169 = scmp.eq.s32.totalorder %s28, 0
      %p170 = por %p168, %p169
      %s172 = sadd.s32 %s171, 1
      %p175 = scmp.eq.s32.totalorder %s22, 1
      %p176 = scmp.ne.s32.totalorder %s171, %s173
      %p177 = scmp.eq.s32.totalorder %s22, 0
      %p178 = por %p176, %p177
      %p179 = scmp.ne.s32.totalorder %s171, %s173
      %p180 = scmp.eq.s32.totalorder %s27, 1
      %p181 = por %p179, %p180
      %p182 = scmp.ne.s32.totalorder %s173, %s174
      %p183 = scmp.eq.s32.totalorder %s27, 0
      %p184 = por %p182, %p183
      %p185 = scmp.ne.s32.totalorder %s173, %s174
      %p186 = scmp.eq.s32.totalorder %s28, 1
      %p187 = por %p185, %p186
      %p189 = scmp.ne.s32.totalorder %s174, %s188
      %p190 = scmp.eq.s32.totalorder %s28, 0
      %p191 = por %p189, %p190
      %s193 = sadd.s32 %s192, 1
      %p196 = scmp.eq.s32.totalorder %s22, 1
      %p197 = scmp.ne.s32.totalorder %s192, %s194
      %p198 = scmp.eq.s32.totalorder %s22, 0
      %p199 = por %p197, %p198
      %p200 = scmp.ne.s32.totalorder %s192, %s194
      %p201 = scmp.eq.s32.totalorder %s27, 1
      %p202 = por %p200, %p201
      %p203 = scmp.ne.s32.totalorder %s194, %s195
      %p204 = scmp.eq.s32.totalorder %s27, 0
      %p205 = por %p203, %p204
      %p206 = scmp.ne.s32.totalorder %s194, %s195
      %p207 = scmp.eq.s32.totalorder %s28, 1
      %p208 = por %p206, %p207
      %p210 = scmp.ne.s32.totalorder %s195, %s209
      %p211 = scmp.eq.s32.totalorder %s28, 0
      %p212 = por %p210, %p211
      %s214 = sadd.s32 %s213, 1
      %p217 = scmp.eq.s32.totalorder %s22, 1
      %p218 = scmp.ne.s32.totalorder %s213, %s215
      %p219 = scmp.eq.s32.totalorder %s22, 0
      %p220 = por %p218, %p219
      %p221 = scmp.ne.s32.totalorder %s213, %s215
      %p222 = scmp.eq.s32.totalorder %s27, 1
      %p223 = por %p221, %p222
      %p224 = scmp.ne.s32.totalorder %s215, %s216
      %p225 = scmp.eq.s32.totalorder %s27, 0
      %p226 = por %p224, %p225
      %p227 = scmp.ne.s32.totalorder %s215, %s216
      %p228 = scmp.eq.s32.totalorder %s28, 1
      %p229 = por %p227, %p228
      %p231 = scmp.ne.s32.totalorder %s216, %s230
      %p232 = scmp.eq.s32.totalorder %s28, 0
      %p233 = por %p231, %p232
      %s235 = sadd.s32 %s234, 1
      %p238 = scmp.eq.s32.totalorder %s22, 1
      %p239 = scmp.ne.s32.totalorder %s234, %s236
      %p240 = scmp.eq.s32.totalorder %s22, 0
      %p241 = por %p239, %p240
      %p242 = scmp.ne.s32.totalorder %s234, %s236
      %p243 = scmp.eq.s32.totalorder %s27, 1
      %p244 = por %p242, %p243
      %p245 = scmp.ne.s32.totalorder %s236, %s237
      %p246 = scmp.eq.s32.totalorder %s27, 0
      %p247 = por %p245, %p246
      %p248 = scmp.ne.s32.totalorder %s236, %s237
      %p249 = scmp.eq.s32.totalorder %s28, 1
      %p250 = por %p248, %p249
      %p252 = scmp.ne.s32.totalorder %s237, %s251
      %p253 = scmp.eq.s32.totalorder %s28, 0
      %p254 = por %p252, %p253
      %s255 = ssub.s32 %s22, %s29
      %p256 = scmp.eq.s32.totalorder %s255, 0
      %s258 = sadd.s32 %s257, 1
      %s259 = scalar_select %p256, %s257, %s258
      %p262 = pneg %p256
      %p263 = scmp.eq.s32.totalorder %s22, 1
      %p264 = por %p262, %p263
      %p265 = scmp.ne.s32.totalorder %s257, %s260
      %p266 = scmp.eq.s32.totalorder %s22, 0
      %p267 = por %p265, %p266
      %p268 = scmp.ne.s32.totalorder %s257, %s260
      %p269 = scmp.eq.s32.totalorder %s27, 1
      %p270 = por %p268, %p269
      %p271 = scmp.ne.s32.totalorder %s260, %s261
      %p272 = scmp.eq.s32.totalorder %s27, 0
      %p273 = por %p271, %p272
      %p274 = scmp.ne.s32.totalorder %s260, %s261
      %p275 = scmp.eq.s32.totalorder %s28, 1
      %p276 = por %p274, %p275
      %p278 = scmp.ne.s32.totalorder %s261, %s277
      %p279 = scmp.eq.s32.totalorder %s28, 0
      %p280 = por %p278, %p279
      %s281 = ssub.s32 %s22, %s29
      %p282 = scmp.eq.s32.totalorder %s281, 0
      %s284 = sadd.s32 %s283, 1
      %s285 = scalar_select %p282, %s283, %s284
      %p288 = pneg %p282
      %p289 = scmp.eq.s32.totalorder %s22, 1
      %p290 = por %p288, %p289
      %p291 = scmp.ne.s32.totalorder %s283, %s286
      %p292 = scmp.eq.s32.totalorder %s22, 0
      %p293 = por %p291, %p292
      %p294 = scmp.ne.s32.totalorder %s283, %s286
      %p295 = scmp.eq.s32.totalorder %s27, 1
      %p296 = por %p294, %p295
      %p297 = scmp.ne.s32.totalorder %s286, %s287
      %p298 = scmp.eq.s32.totalorder %s27, 0
      %p299 = por %p297, %p298
      %p300 = scmp.ne.s32.totalorder %s286, %s287
      %p301 = scmp.eq.s32.totalorder %s28, 1
      %p302 = por %p300, %p301
      %p304 = scmp.ne.s32.totalorder %s287, %s303
      %p305 = scmp.eq.s32.totalorder %s28, 0
      %p306 = por %p304, %p305
      %s307 = ssub.s32 %s22, %s29
      %p308 = scmp.eq.s32.totalorder %s307, 0
      %s310 = sadd.s32 %s309, 1
      %s311 = scalar_select %p308, %s309, %s310
      %p314 = pneg %p308
      %p315 = scmp.eq.s32.totalorder %s22, 1
      %p316 = por %p314, %p315
      %p317 = scmp.ne.s32.totalorder %s309, %s312
      %p318 = scmp.eq.s32.totalorder %s22, 0
      %p319 = por %p317, %p318
      %p320 = scmp.ne.s32.totalorder %s309, %s312
      %p321 = scmp.eq.s32.totalorder %s27, 1
      %p322 = por %p320, %p321
      %p323 = scmp.ne.s32.totalorder %s312, %s313
      %p324 = scmp.eq.s32.totalorder %s27, 0
      %p325 = por %p323, %p324
      %p326 = scmp.ne.s32.totalorder %s312, %s313
      %p327 = scmp.eq.s32.totalorder %s28, 1
      %p328 = por %p326, %p327
      %p330 = scmp.ne.s32.totalorder %s313, %s329
      %p331 = scmp.eq.s32.totalorder %s28, 0
      %p332 = por %p330, %p331
      %p333 = scmp.le.s32.totalorder 1, %s22
      %p334 = scmp.lt.s32.totalorder %s22, 3
      %p335 = pnand %p333, %p334
      %p336 = pneg %p335
      // Predicated region
      $region9: #{vgae5_forward.3} parent=5 // pred_check
        _
      $region10: #{vgae5_forward.3} parent=5 // pred_check_branch
        %338 = sbr.rel (%p335) target = $region12
      $region11: #{vgae5_forward.3} parent=5 // pred_region
        %s339 = ssub.s32 %s22, 1
        // Predicated region
        $region13: #{vgae5_forward.3} parent=11 // pred_check
          %p340 = pneg %p43
        $region14: #{vgae5_forward.3} parent=11 // pred_check_branch
          %342 = sbr.rel (%p340) target = $region16
        $region15: #{vgae5_forward.3} parent=11 // pred_region
          _
        $region16: #{vgae5_forward.3} parent=11 // pred_fallthru
          _
        // Predicated region
        $region17: #{vgae5_forward.3} parent=11 // pred_check
          %p343 = pneg %p64
        $region18: #{vgae5_forward.3} parent=11 // pred_check_branch
          %345 = sbr.rel (%p343) target = $region20
        $region19: #{vgae5_forward.3} parent=11 // pred_region
          _
        $region20: #{vgae5_forward.3} parent=11 // pred_fallthru
          _
        // Predicated region
        $region21: #{vgae5_forward.3} parent=11 // pred_check
          %p346 = pneg %p163
        $region22: #{vgae5_forward.3} parent=11 // pred_check_branch
          %348 = sbr.rel (%p346) target = $region24
        $region23: #{vgae5_forward.3} parent=11 // pred_region
          _
        $region24: #{vgae5_forward.3} parent=11 // pred_fallthru
          _
        // Predicated region
        $region25: #{vgae5_forward.3} parent=11 // pred_check
          %p349 = pneg %p184
        $region26: #{vgae5_forward.3} parent=11 // pred_check_branch
          %351 = sbr.rel (%p349) target = $region28
        $region27: #{vgae5_forward.3} parent=11 // pred_region
          _
        $region28: #{vgae5_forward.3} parent=11 // pred_fallthru
          _
        // Predicated region
        $region29: #{vgae5_forward.3} parent=11 // pred_check
          %p352 = pneg %p205
        $region30: #{vgae5_forward.3} parent=11 // pred_check_branch
          %354 = sbr.rel (%p352) target = $region32
        $region31: #{vgae5_forward.3} parent=11 // pred_region
          _
        $region32: #{vgae5_forward.3} parent=11 // pred_fallthru
          _
        // Predicated region
        $region33: #{vgae5_forward.3} parent=11 // pred_check
          %p355 = pneg %p226
        $region34: #{vgae5_forward.3} parent=11 // pred_check_branch
          %357 = sbr.rel (%p355) target = $region36
        $region35: #{vgae5_forward.3} parent=11 // pred_region
          _
        $region36: #{vgae5_forward.3} parent=11 // pred_fallthru
          _
        // Predicated region
        $region37: #{vgae5_forward.3} parent=11 // pred_check
          %p358 = pneg %p247
        $region38: #{vgae5_forward.3} parent=11 // pred_check_branch
          %360 = sbr.rel (%p358) target = $region40
        $region39: #{vgae5_forward.3} parent=11 // pred_region
          _
        $region40: #{vgae5_forward.3} parent=11 // pred_fallthru
          _
      $region12: #{vgae5_forward.3} parent=5 // pred_fallthru
        _
      %p361 = scmp.lt.s32.totalorder %s22, 2
      // Predicated region
      $region41: #{vgae5_forward.3} parent=5 // pred_check
        %p362 = pneg %p361
      $region42: #{vgae5_forward.3} parent=5 // pred_check_branch
        %364 = sbr.rel (%p362) target = $region44
      $region43: #{vgae5_forward.3} parent=5 // pred_region
        // Predicated region
        $region45: #{vgae5_forward.3} parent=43 // pred_check
          %p365 = pneg %p84
        $region46: #{vgae5_forward.3} parent=43 // pred_check_branch
          %367 = sbr.rel (%p365) target = $region48
        $region47: #{vgae5_forward.3} parent=43 // pred_region
          %s368 = smul.u32 16, %s22
          %p369 = scmp.lt.s32.totalorder %s368, 31
          %s370 = scalar_select %p369, %s368, 31
          %s371 = smul.addr %s370, 2
          %s372 = smul.addr %s371, 4
          %s373 = scalar_lea.vmem %s2, %s372
          %s374 = smul.u32 16, %s22
        $region48: #{vgae5_forward.3} parent=43 // pred_fallthru
          _
        // Predicated region
        $region49: #{vgae5_forward.3} parent=43 // pred_check
          %p375 = pneg %p110
        $region50: #{vgae5_forward.3} parent=43 // pred_check_branch
          %377 = sbr.rel (%p375) target = $region52
        $region51: #{vgae5_forward.3} parent=43 // pred_region
          %s378 = smul.u32 16, %s22
          %p379 = scmp.lt.s32.totalorder %s378, 31
          %s380 = scalar_select %p379, %s378, 31
          %s381 = smul.addr %s380, 8
          %s382 = scalar_lea.vmem %s3, %s381
          %s383 = smul.u32 16, %s22
        $region52: #{vgae5_forward.3} parent=43 // pred_fallthru
          _
        // Predicated region
        $region53: #{vgae5_forward.3} parent=43 // pred_check
          %p384 = pneg %p136
        $region54: #{vgae5_forward.3} parent=43 // pred_check_branch
          %386 = sbr.rel (%p384) target = $region56
        $region55: #{vgae5_forward.3} parent=43 // pred_region
          %s387 = smul.u32 16, %s22
          %p388 = scmp.lt.s32.totalorder %s387, 31
          %s389 = scalar_select %p388, %s387, 31
          %s390 = smul.addr %s389, 8
          %s391 = scalar_lea.vmem %s4, %s390
          %s392 = smul.u32 16, %s22
        $region56: #{vgae5_forward.3} parent=43 // pred_fallthru
          _
      $region44: #{vgae5_forward.3} parent=5 // pred_fallthru
        _
      %p393 = scmp.le.s32.totalorder 1, %s22
      %p394 = scmp.lt.s32.totalorder %s22, 3
      %p395 = pnand %p393, %p394
      %p396 = pneg %p395
      // Predicated region
      $region57: #{vgae5_forward.3} parent=5 // pred_check
        _
      $region58: #{vgae5_forward.3} parent=5 // pred_check_branch
        %398 = sbr.rel (%p395) target = $region60
      $region59: #{vgae5_forward.3} parent=5 // pred_region
        %s399 = ssub.s32 %s22, 1
        %p400 = pneg %p43
        %p401 = pneg %p40
        %p402 = pneg %p64
        %p403 = pneg %p61
        %s404 = smul.u32 16, %s27
        %p405 = scmp.lt.s32.totalorder %s404, 31
        %s406 = scalar_select %p405, %s404, 31
        %s407 = smul.addr %s406, 2
        %s408 = smul.addr %s407, 4
        %s409 = scalar_lea.vmem %s2, %s408
        %p410 = pneg %p90
        %p411 = pneg %p87
        %s412 = smul.u32 16, %s27
        %p413 = scmp.lt.s32.totalorder %s412, 31
        %s414 = scalar_select %p413, %s412, 31
        %s415 = smul.addr %s414, 8
        %s416 = scalar_lea.vmem %s3, %s415
        %p417 = pneg %p116
        %p418 = pneg %p113
        %s419 = smul.u32 16, %s27
        %p420 = scmp.lt.s32.totalorder %s419, 31
        %s421 = scalar_select %p420, %s419, 31
        %s422 = smul.addr %s421, 8
        %s423 = scalar_lea.vmem %s4, %s422
        %p424 = pneg %p142
        %p425 = pneg %p139
        %p426 = pneg %p163
        %p427 = pneg %p160
        %p428 = pneg %p184
        %p429 = pneg %p181
        %p430 = pneg %p205
        %p431 = pneg %p202
        %p432 = pneg %p226
        %p433 = pneg %p223
        %p434 = pneg %p247
        %p435 = pneg %p244
        %p436 = pneg %p273
        %p437 = pneg %p270
        %s438 = sand.u32 %s260, 1
        %s439 = scalar_lea.sflag [#allocation3], %s438
        %s440 = sand.u32 %s260, 1
        %s441 = smul.addr %s440, 128
        %s442 = scalar_lea.vmem [#allocation2], %s441
        %p443 = pneg %p299
        %p444 = pneg %p296
        %s445 = smul.u32 16, %s27
        %p446 = scmp.lt.s32.totalorder %s445, 31
        %s447 = scalar_select %p446, %s445, 31
        %s448 = smul.addr %s447, 8
        %s449 = scalar_lea.vmem %s11, %s448
        %p450 = pneg %p325
        %p451 = pneg %p322
        %s452 = smul.u32 16, %s27
        %p453 = scmp.lt.s32.totalorder %s452, 31
        %s454 = scalar_select %p453, %s452, 31
        %s455 = smul.addr %s454, 8
        %s456 = scalar_lea.vmem %s12, %s455
        %s457 = smul.u32 16, %s27
        %p458 = scmp.lt.s32.totalorder %s457, 31
        %s459 = scalar_select %p458, %s457, 31
        %s460 = smul.addr %s459, 2
        %s461 = smul.addr %s460, 4
        %s462 = scalar_lea.vmem %s2, %s461
        %s463 = smul.u32 16, %s27
        %s464 = smul.u32 16, %s27
        %p465 = scmp.lt.s32.totalorder %s464, 31
        %s466 = scalar_select %p465, %s464, 31
        %s467 = smul.addr %s466, 8
        %s468 = scalar_lea.vmem %s3, %s467
        %s469 = smul.u32 16, %s27
        %s470 = smul.u32 16, %s27
        %p471 = scmp.lt.s32.totalorder %s470, 31
        %s472 = scalar_select %p471, %s470, 31
        %s473 = smul.addr %s472, 8
        %s474 = scalar_lea.vmem %s4, %s473
        %s475 = smul.u32 16, %s27
        %s476 = smul.u32 16, %s27
        %s477 = smul.u32 16, %s27
        %p478 = scmp.lt.s32.totalorder %s477, 31
        %s479 = scalar_select %p478, %s477, 31
        %s480 = smul.addr %s479, 8
        %s481 = scalar_lea.vmem %s11, %s480
        %s482 = smul.u32 16, %s27
        %s483 = smul.u32 16, %s27
        %p484 = scmp.lt.s32.totalorder %s483, 31
        %s485 = scalar_select %p484, %s483, 31
        %s486 = smul.addr %s485, 8
        %s487 = scalar_lea.vmem %s12, %s486
        %s488 = smul.u32 16, %s27
        %v489 = vld [vmem:[%s0] sm:$0xff]
        %v490 = vld [vmem:[%s0 + $0x8] sm:$0xff]
        %v491 = vld [vmem:[%s0 + $0x10] sm:$0xff]
        %v492 = vld [vmem:[%s0 + $0x18] sm:$0xff]
        %v493 = vld [vmem:[%s0 + $0x20] sm:$0xff]
        %v494 = vld [vmem:[%s0 + $0x28] sm:$0xff]
        %v495 = vld [vmem:[%s0 + $0x30] sm:$0xff]
        %v496 = vld [vmem:[%s0 + $0x38] sm:$0xff]
        %v497 = vld [vmem:[%s0 + $0x40] sm:$0xff]
        %v498 = vld [vmem:[%s0 + $0x48] sm:$0xff]
        %v499 = vld [vmem:[%s0 + $0x50] sm:$0xff]
        %v500 = vld [vmem:[%s0 + $0x58] sm:$0xff]
        %v501 = vld [vmem:[%s0 + $0x60] sm:$0xff]
        %v502 = vld [vmem:[%s0 + $0x68] sm:$0xff]
        %v503 = vld [vmem:[%s0 + $0x70] sm:$0xff]
        %v504 = vld [vmem:[%s0 + $0x78] sm:$0xff]
        %v505 = vld [vmem:[%s0 + $0x80] sm:$0xff]
        %v506 = vld [vmem:[%s0 + $0x88] sm:$0xff]
        %v507 = vld [vmem:[%s0 + $0x90] sm:$0xff]
        %v508 = vld [vmem:[%s0 + $0x98] sm:$0xff]
        %v509 = vld [vmem:[%s0 + $0xa0] sm:$0xff]
        %v510 = vld [vmem:[%s0 + $0xa8] sm:$0xff]
        %v511 = vld [vmem:[%s0 + $0xb0] sm:$0xff]
        %v512 = vld [vmem:[%s0 + $0xb8] sm:$0xff]
        %v513 = vld [vmem:[%s0 + $0xc0] sm:$0xff]
        %v514 = vld [vmem:[%s0 + $0xc8] sm:$0xff]
        %v515 = vld [vmem:[%s0 + $0xd0] sm:$0xff]
        %v516 = vld [vmem:[%s0 + $0xd8] sm:$0xff]
        %v517 = vld [vmem:[%s0 + $0xe0] sm:$0xff]
        %v518 = vld [vmem:[%s0 + $0xe8] sm:$0xff]
        %v519 = vld [vmem:[%s0 + $0xf0] sm:$0xff]
        %v520 = vld [vmem:[%s0 + $0xf8] sm:$0xff]
        %v521 = vld [vmem:[%s1] sm:$0xff]
        %v522 = vld [vmem:[%s1 + $0x8] sm:$0xff]
        %v523 = vld [vmem:[%s1 + $0x10] sm:$0xff]
        %v524 = vld [vmem:[%s1 + $0x18] sm:$0xff]
        %v525 = vld [vmem:[%s1 + $0x20] sm:$0xff]
        %v526 = vld [vmem:[%s1 + $0x28] sm:$0xff]
        %v527 = vld [vmem:[%s1 + $0x30] sm:$0xff]
        %v528 = vld [vmem:[%s1 + $0x38] sm:$0xff]
        %v529 = vld [vmem:[%s1 + $0x40] sm:$0xff]
        %v530 = vld [vmem:[%s1 + $0x48] sm:$0xff]
        %v531 = vld [vmem:[%s1 + $0x50] sm:$0xff]
        %v532 = vld [vmem:[%s1 + $0x58] sm:$0xff]
        %v533 = vld [vmem:[%s1 + $0x60] sm:$0xff]
        %v534 = vld [vmem:[%s1 + $0x68] sm:$0xff]
        %v535 = vld [vmem:[%s1 + $0x70] sm:$0xff]
        %v536 = vld [vmem:[%s1 + $0x78] sm:$0xff]
        %v537 = vld [vmem:[%s1 + $0x80] sm:$0xff]
        %v538 = vld [vmem:[%s1 + $0x88] sm:$0xff]
        %v539 = vld [vmem:[%s1 + $0x90] sm:$0xff]
        %v540 = vld [vmem:[%s1 + $0x98] sm:$0xff]
        %v541 = vld [vmem:[%s1 + $0xa0] sm:$0xff]
        %v542 = vld [vmem:[%s1 + $0xa8] sm:$0xff]
        %v543 = vld [vmem:[%s1 + $0xb0] sm:$0xff]
        %v544 = vld [vmem:[%s1 + $0xb8] sm:$0xff]
        %v545 = vld [vmem:[%s1 + $0xc0] sm:$0xff]
        %v546 = vld [vmem:[%s1 + $0xc8] sm:$0xff]
        %v547 = vld [vmem:[%s1 + $0xd0] sm:$0xff]
        %v548 = vld [vmem:[%s1 + $0xd8] sm:$0xff]
        %v549 = vld [vmem:[%s1 + $0xe0] sm:$0xff]
        %v550 = vld [vmem:[%s1 + $0xe8] sm:$0xff]
        %v551 = vld [vmem:[%s1 + $0xf0] sm:$0xff]
        %v552 = vld [vmem:[%s1 + $0xf8] sm:$0xff]
        %553 = vmatprep.subr.mxu0 %v522
        %554 = vmatpush1.msra.mxu0 %v521
        %555 = vmatprep.subr.mxu0 %v524
        %556 = vmatpush1.msra.mxu0 %v523
        %557 = vmatprep.subr.mxu0 %v526
        %558 = vmatpush1.msra.mxu0 %v525
        %559 = vmatprep.subr.mxu0 %v528
        %560 = vmatpush1.msra.mxu0 %v527
        %561 = vmatprep.subr.mxu0 %v530
        %562 = vmatpush1.msra.mxu0 %v529
        %563 = vmatprep.subr.mxu0 %v532
        %564 = vmatpush1.msra.mxu0 %v531
        %565 = vmatprep.subr.mxu0 %v534
        %566 = vmatpush1.msra.mxu0 %v533
        %567 = vmatprep.subr.mxu0 %v536
        %568 = vmatpush1.msra.mxu0 %v535
        %569 = vmatprep.subr.mxu0 %v538
        %570 = vmatpush1.msra.mxu0 %v537
        %571 = vmatprep.subr.mxu0 %v540
        %572 = vmatpush1.msra.mxu0 %v539
        %573 = vmatprep.subr.mxu0 %v542
        %574 = vmatpush1.msra.mxu0 %v541
        %575 = vmatprep.subr.mxu0 %v544
        %576 = vmatpush1.msra.mxu0 %v543
        %577 = vmatprep.subr.mxu0 %v546
        %578 = vmatpush1.msra.mxu0 %v545
        %579 = vmatprep.subr.mxu0 %v548
        %580 = vmatpush1.msra.mxu0 %v547
        %581 = vmatprep.subr.mxu0 %v550
        %582 = vmatpush1.msra.mxu0 %v549
        %583 = vmatprep.subr.mxu0 %v552
        %584 = vmatpush1.msra.mxu0 %v551
        %585 = vmatprep.subr.mxu0 0.0
        %586 = vmatpush1.msra.mxu0 0.0
        %587 = vmatprep.subr.mxu0 0.0
        %588 = vmatpush1.msra.mxu0 0.0
        %589 = vmatprep.subr.mxu0 0.0
        %590 = vmatpush1.msra.mxu0 0.0
        %591 = vmatprep.subr.mxu0 0.0
        %592 = vmatpush1.msra.mxu0 0.0
        %593 = vmatprep.subr.mxu0 0.0
        %594 = vmatpush1.msra.mxu0 0.0
        %595 = vmatprep.subr.mxu0 0.0
        %596 = vmatpush1.msra.mxu0 0.0
        %597 = vmatprep.subr.mxu0 0.0
        %598 = vmatpush1.msra.mxu0 0.0
        %599 = vmatprep.subr.mxu0 0.0
        %600 = vmatpush1.msra.mxu0 0.0
        %601 = vmatprep.subr.mxu0 0.0
        %602 = vmatpush1.msra.mxu0 0.0
        %603 = vmatprep.subr.mxu0 0.0
        %604 = vmatpush1.msra.mxu0 0.0
        %605 = vmatprep.subr.mxu0 0.0
        %606 = vmatpush1.msra.mxu0 0.0
        %607 = vmatprep.subr.mxu0 0.0
        %608 = vmatpush1.msra.mxu0 0.0
        %609 = vmatprep.subr.mxu0 0.0
        %610 = vmatpush1.msra.mxu0 0.0
        %611 = vmatprep.subr.mxu0 0.0
        %612 = vmatpush1.msra.mxu0 0.0
        %613 = vmatprep.subr.mxu0 0.0
        %614 = vmatpush1.msra.mxu0 0.0
        %615 = vmatprep.subr.mxu0 0.0
        %616 = vmatpush1.msra.mxu0 0.0
        %617 = vmatprep.mubr.f32.mxu0 0.0
        %618 = vmatmul.mubr.f32.gmra.mrb[0].mxu0 %v489
        %v619 = vpop.f32.mrb[0].mxu0
        %v620 = vadd.f32 0.0, %v619
        %v621 = vpop.f32.mrb[0].mxu0
        %v622 = vadd.f32 0.0, %v621
        %623 = vmatprep.mubr.f32.mxu0 0.0
        %624 = vmatmul.mubr.f32.gmra.mrb[0].mxu0 %v490
        %v625 = vpop.f32.mrb[0].mxu0
        %v626 = vadd.f32 0.0, %v625
        %v627 = vpop.f32.mrb[0].mxu0
        %v628 = vadd.f32 0.0, %v627
        %629 = vmatprep.mubr.f32.mxu0 0.0
        %630 = vmatmul.mubr.f32.gmra.mrb[0].mxu0 %v491
        %v631 = vpop.f32.mrb[0].mxu0
        %v632 = vadd.f32 0.0, %v631
        %v633 = vpop.f32.mrb[0].mxu0
        %v634 = vadd.f32 0.0, %v633
        %635 = vmatprep.mubr.f32.mxu0 0.0
        %636 = vmatmul.mubr.f32.gmra.mrb[0].mxu0 %v492
        %v637 = vpop.f32.mrb[0].mxu0
        %v638 = vadd.f32 0.0, %v637
        %v639 = vpop.f32.mrb[0].mxu0
        %v640 = vadd.f32 0.0, %v639
        %641 = vmatprep.mubr.f32.mxu0 0.0
        %642 = vmatmul.mubr.f32.gmra.mrb[0].mxu0 %v493
        %v643 = vpop.f32.mrb[0].mxu0
        %v644 = vadd.f32 0.0, %v643
        %v645 = vpop.f32.mrb[0].mxu0
        %v646 = vadd.f32 0.0, %v645
        %647 = vmatprep.mubr.f32.mxu0 0.0
        %648 = vmatmul.mubr.f32.gmra.mrb[0].mxu0 %v494
        %v649 = vpop.f32.mrb[0].mxu0
        %v650 = vadd.f32 0.0, %v649
        %v651 = vpop.f32.mrb[0].mxu0
        %v652 = vadd.f32 0.0, %v651
        %653 = vmatprep.mubr.f32.mxu0 0.0
        %654 = vmatmul.mubr.f32.gmra.mrb[0].mxu0 %v495
        %v655 = vpop.f32.mrb[0].mxu0
        %v656 = vadd.f32 0.0, %v655
        %v657 = vpop.f32.mrb[0].mxu0
        %v658 = vadd.f32 0.0, %v657
        %659 = vmatprep.mubr.f32.mxu0 0.0
        %660 = vmatmul.mubr.f32.gmra.mrb[0].mxu0 %v496
        %v661 = vpop.f32.mrb[0].mxu0
        %v662 = vadd.f32 0.0, %v661
        %v663 = vpop.f32.mrb[0].mxu0
        %v664 = vadd.f32 0.0, %v663
        %665 = vmatprep.mubr.f32.mxu0 0.0
        %666 = vmatmul.mubr.f32.gmra.mrb[0].mxu0 %v497
        %v667 = vpop.f32.mrb[0].mxu0
        %v668 = vadd.f32 0.0, %v667
        %v669 = vpop.f32.mrb[0].mxu0
        %v670 = vadd.f32 0.0, %v669
        %671 = vmatprep.mubr.f32.mxu0 0.0
        %672 = vmatmul.mubr.f32.gmra.mrb[0].mxu0 %v498
        %v673 = vpop.f32.mrb[0].mxu0
        %v674 = vadd.f32 0.0, %v673
        %v675 = vpop.f32.mrb[0].mxu0
        %v676 = vadd.f32 0.0, %v675
        %677 = vmatprep.mubr.f32.mxu0 0.0
        %678 = vmatmul.mubr.f32.gmra.mrb[0].mxu0 %v499
        %v679 = vpop.f32.mrb[0].mxu0
        %v680 = vadd.f32 0.0, %v679
        %v681 = vpop.f32.mrb[0].mxu0
        %v682 = vadd.f32 0.0, %v681
        %683 = vmatprep.mubr.f32.mxu0 0.0
        %684 = vmatmul.mubr.f32.gmra.mrb[0].mxu0 %v500
        %v685 = vpop.f32.mrb[0].mxu0
        %v686 = vadd.f32 0.0, %v685
        %v687 = vpop.f32.mrb[0].mxu0
        %v688 = vadd.f32 0.0, %v687
        %689 = vmatprep.mubr.f32.mxu0 0.0
        %690 = vmatmul.mubr.f32.gmra.mrb[0].mxu0 %v501
        %v691 = vpop.f32.mrb[0].mxu0
        %v692 = vadd.f32 0.0, %v691
        %v693 = vpop.f32.mrb[0].mxu0
        %v694 = vadd.f32 0.0, %v693
        %695 = vmatprep.mubr.f32.mxu0 0.0
        %696 = vmatmul.mubr.f32.gmra.mrb[0].mxu0 %v502
        %v697 = vpop.f32.mrb[0].mxu0
        %v698 = vadd.f32 0.0, %v697
        %v699 = vpop.f32.mrb[0].mxu0
        %v700 = vadd.f32 0.0, %v699
        %701 = vmatprep.mubr.f32.mxu0 0.0
        %702 = vmatmul.mubr.f32.gmra.mrb[0].mxu0 %v503
        %v703 = vpop.f32.mrb[0].mxu0
        %v704 = vadd.f32 0.0, %v703
        %v705 = vpop.f32.mrb[0].mxu0
        %v706 = vadd.f32 0.0, %v705
        %707 = vmatprep.mubr.f32.mxu0 0.0
        %708 = vmatmul.mubr.f32.gmra.mrb[0].mxu0 %v504
        %v709 = vpop.f32.mrb[0].mxu0
        %v710 = vadd.f32 0.0, %v709
        %v711 = vpop.f32.mrb[0].mxu0
        %v712 = vadd.f32 0.0, %v711
        %713 = vmatprep.mubr.f32.mxu0 0.0
        %714 = vmatmul.mubr.f32.gmra.mrb[0].mxu0 %v505
        %v715 = vpop.f32.mrb[0].mxu0
        %v716 = vadd.f32 0.0, %v715
        %v717 = vpop.f32.mrb[0].mxu0
        %v718 = vadd.f32 0.0, %v717
        %719 = vmatprep.mubr.f32.mxu0 0.0
        %720 = vmatmul.mubr.f32.gmra.mrb[0].mxu0 %v506
        %v721 = vpop.f32.mrb[0].mxu0
        %v722 = vadd.f32 0.0, %v721
        %v723 = vpop.f32.mrb[0].mxu0
        %v724 = vadd.f32 0.0, %v723
        %725 = vmatprep.mubr.f32.mxu0 0.0
        %726 = vmatmul.mubr.f32.gmra.mrb[0].mxu0 %v507
        %v727 = vpop.f32.mrb[0].mxu0
        %v728 = vadd.f32 0.0, %v727
        %v729 = vpop.f32.mrb[0].mxu0
        %v730 = vadd.f32 0.0, %v729
        %731 = vmatprep.mubr.f32.mxu0 0.0
        %732 = vmatmul.mubr.f32.gmra.mrb[0].mxu0 %v508
        %v733 = vpop.f32.mrb[0].mxu0
        %v734 = vadd.f32 0.0, %v733
        %v735 = vpop.f32.mrb[0].mxu0
        %v736 = vadd.f32 0.0, %v735
        %737 = vmatprep.mubr.f32.mxu0 0.0
        %738 = vmatmul.mubr.f32.gmra.mrb[0].mxu0 %v509
        %v739 = vpop.f32.mrb[0].mxu0
        %v740 = vadd.f32 0.0, %v739
        %v741 = vpop.f32.mrb[0].mxu0
        %v742 = vadd.f32 0.0, %v741
        %743 = vmatprep.mubr.f32.mxu0 0.0
        %744 = vmatmul.mubr.f32.gmra.mrb[0].mxu0 %v510
        %v745 = vpop.f32.mrb[0].mxu0
        %v746 = vadd.f32 0.0, %v745
        %v747 = vpop.f32.mrb[0].mxu0
        %v748 = vadd.f32 0.0, %v747
        %749 = vmatprep.mubr.f32.mxu0 0.0
        %750 = vmatmul.mubr.f32.gmra.mrb[0].mxu0 %v511
        %v751 = vpop.f32.mrb[0].mxu0
        %v752 = vadd.f32 0.0, %v751
        %v753 = vpop.f32.mrb[0].mxu0
        %v754 = vadd.f32 0.0, %v753
        %755 = vmatprep.mubr.f32.mxu0 0.0
        %756 = vmatmul.mubr.f32.gmra.mrb[0].mxu0 %v512
        %v757 = vpop.f32.mrb[0].mxu0
        %v758 = vadd.f32 0.0, %v757
        %v759 = vpop.f32.mrb[0].mxu0
        %v760 = vadd.f32 0.0, %v759
        %761 = vmatprep.mubr.f32.mxu0 0.0
        %762 = vmatmul.mubr.f32.gmra.mrb[0].mxu0 %v513
        %v763 = vpop.f32.mrb[0].mxu0
        %v764 = vadd.f32 0.0, %v763
        %v765 = vpop.f32.mrb[0].mxu0
        %v766 = vadd.f32 0.0, %v765
        %767 = vmatprep.mubr.f32.mxu0 0.0
        %768 = vmatmul.mubr.f32.gmra.mrb[0].mxu0 %v514
        %v769 = vpop.f32.mrb[0].mxu0
        %v770 = vadd.f32 0.0, %v769
        %v771 = vpop.f32.mrb[0].mxu0
        %v772 = vadd.f32 0.0, %v771
        %773 = vmatprep.mubr.f32.mxu0 0.0
        %774 = vmatmul.mubr.f32.gmra.mrb[0].mxu0 %v515
        %v775 = vpop.f32.mrb[0].mxu0
        %v776 = vadd.f32 0.0, %v775
        %v777 = vpop.f32.mrb[0].mxu0
        %v778 = vadd.f32 0.0, %v777
        %779 = vmatprep.mubr.f32.mxu0 0.0
        %780 = vmatmul.mubr.f32.gmra.mrb[0].mxu0 %v516
        %v781 = vpop.f32.mrb[0].mxu0
        %v782 = vadd.f32 0.0, %v781
        %v783 = vpop.f32.mrb[0].mxu0
        %v784 = vadd.f32 0.0, %v783
        %785 = vmatprep.mubr.f32.mxu0 0.0
        %786 = vmatmul.mubr.f32.gmra.mrb[0].mxu0 %v517
        %v787 = vpop.f32.mrb[0].mxu0
        %v788 = vadd.f32 0.0, %v787
        %v789 = vpop.f32.mrb[0].mxu0
        %v790 = vadd.f32 0.0, %v789
        %791 = vmatprep.mubr.f32.mxu0 0.0
        %792 = vmatmul.mubr.f32.gmra.mrb[0].mxu0 %v518
        %v793 = vpop.f32.mrb[0].mxu0
        %v794 = vadd.f32 0.0, %v793
        %v795 = vpop.f32.mrb[0].mxu0
        %v796 = vadd.f32 0.0, %v795
        %797 = vmatprep.mubr.f32.mxu0 0.0
        %798 = vmatmul.mubr.f32.gmra.mrb[0].mxu0 %v519
        %v799 = vpop.f32.mrb[0].mxu0
        %v800 = vadd.f32 0.0, %v799
        %v801 = vpop.f32.mrb[0].mxu0
        %v802 = vadd.f32 0.0, %v801
        %803 = vmatprep.mubr.f32.mxu0 0.0
        %804 = vmatmul.mubr.f32.gmra.mrb[0].mxu0 %v520
        %v805 = vpop.f32.mrb[0].mxu0
        %v806 = vadd.f32 0.0, %v805
        %v807 = vpop.f32.mrb[0].mxu0
        %v808 = vadd.f32 0.0, %v807
        %809 = vdwg.mxu0
        %v810 = vld [vmem:[%s462] sm:$0xff]
        %v811 = vld [vmem:[%s462 + $0x8] sm:$0xff]
        %v812 = vld [vmem:[%s462 + $0x10] sm:$0xff]
        %v813 = vld [vmem:[%s462 + $0x18] sm:$0xff]
        %v814 = vld [vmem:[%s462 + $0x20] sm:$0xff]
        %v815 = vld [vmem:[%s462 + $0x28] sm:$0xff]
        %v816 = vld [vmem:[%s462 + $0x30] sm:$0xff]
        %v817 = vld [vmem:[%s462 + $0x38] sm:$0xff]
        %v818 = vld [vmem:[%s462 + $0x40] sm:$0xff]
        %v819 = vld [vmem:[%s462 + $0x48] sm:$0xff]
        %v820 = vld [vmem:[%s462 + $0x50] sm:$0xff]
        %v821 = vld [vmem:[%s462 + $0x58] sm:$0xff]
        %v822 = vld [vmem:[%s462 + $0x60] sm:$0xff]
        %v823 = vld [vmem:[%s462 + $0x68] sm:$0xff]
        %v824 = vld [vmem:[%s462 + $0x70] sm:$0xff]
        %v825 = vld [vmem:[%s462 + $0x78] sm:$0xff]
        %v826 = vunpack.c.l.bf16 %v810
        %v827 = vunpack.c.h.bf16 %v810
        %v828 = vunpack.c.l.bf16 %v811
        %v829 = vunpack.c.h.bf16 %v811
        %v830 = vunpack.c.l.bf16 %v812
        %v831 = vunpack.c.h.bf16 %v812
        %v832 = vunpack.c.l.bf16 %v813
        %v833 = vunpack.c.h.bf16 %v813
        %v834 = vunpack.c.l.bf16 %v814
        %v835 = vunpack.c.h.bf16 %v814
        %v836 = vunpack.c.l.bf16 %v815
        %v837 = vunpack.c.h.bf16 %v815
        %v838 = vunpack.c.l.bf16 %v816
        %v839 = vunpack.c.h.bf16 %v816
        %v840 = vunpack.c.l.bf16 %v817
        %v841 = vunpack.c.h.bf16 %v817
        %v842 = vunpack.c.l.bf16 %v818
        %v843 = vunpack.c.h.bf16 %v818
        %v844 = vunpack.c.l.bf16 %v819
        %v845 = vunpack.c.h.bf16 %v819
        %v846 = vunpack.c.l.bf16 %v820
        %v847 = vunpack.c.h.bf16 %v820
        %v848 = vunpack.c.l.bf16 %v821
        %v849 = vunpack.c.h.bf16 %v821
        %v850 = vunpack.c.l.bf16 %v822
        %v851 = vunpack.c.h.bf16 %v822
        %v852 = vunpack.c.l.bf16 %v823
        %v853 = vunpack.c.h.bf16 %v823
        %v854 = vunpack.c.l.bf16 %v824
        %v855 = vunpack.c.h.bf16 %v824
        %v856 = vunpack.c.l.bf16 %v825
        %v857 = vunpack.c.h.bf16 %v825
        %858 = vmatprep.subr.mxu0 %v622
        %859 = vmatpush1.msra.mxu0 %v620
        %860 = vmatprep.subr.mxu0 %v628
        %861 = vmatpush1.msra.mxu0 %v626
        %862 = vmatprep.subr.mxu0 %v634
        %863 = vmatpush1.msra.mxu0 %v632
        %864 = vmatprep.subr.mxu0 %v640
        %865 = vmatpush1.msra.mxu0 %v638
        %866 = vmatprep.subr.mxu0 %v646
        %867 = vmatpush1.msra.mxu0 %v644
        %868 = vmatprep.subr.mxu0 %v652
        %869 = vmatpush1.msra.mxu0 %v650
        %870 = vmatprep.subr.mxu0 %v658
        %871 = vmatpush1.msra.mxu0 %v656
        %872 = vmatprep.subr.mxu0 %v664
        %873 = vmatpush1.msra.mxu0 %v662
        %874 = vmatprep.subr.mxu0 %v670
        %875 = vmatpush1.msra.mxu0 %v668
        %876 = vmatprep.subr.mxu0 %v676
        %877 = vmatpush1.msra.mxu0 %v674
        %878 = vmatprep.subr.mxu0 %v682
        %879 = vmatpush1.msra.mxu0 %v680
        %880 = vmatprep.subr.mxu0 %v688
        %881 = vmatpush1.msra.mxu0 %v686
        %882 = vmatprep.subr.mxu0 %v694
        %883 = vmatpush1.msra.mxu0 %v692
        %884 = vmatprep.subr.mxu0 %v700
        %885 = vmatpush1.msra.mxu0 %v698
        %886 = vmatprep.subr.mxu0 %v706
        %887 = vmatpush1.msra.mxu0 %v704
        %888 = vmatprep.subr.mxu0 %v712
        %889 = vmatpush1.msra.mxu0 %v710
        %890 = vmatprep.subr.mxu0 %v718
        %891 = vmatpush1.msra.mxu0 %v716
        %892 = vmatprep.subr.mxu0 %v724
        %893 = vmatpush1.msra.mxu0 %v722
        %894 = vmatprep.subr.mxu0 %v730
        %895 = vmatpush1.msra.mxu0 %v728
        %896 = vmatprep.subr.mxu0 %v736
        %897 = vmatpush1.msra.mxu0 %v734
        %898 = vmatprep.subr.mxu0 %v742
        %899 = vmatpush1.msra.mxu0 %v740
        %900 = vmatprep.subr.mxu0 %v748
        %901 = vmatpush1.msra.mxu0 %v746
        %902 = vmatprep.subr.mxu0 %v754
        %903 = vmatpush1.msra.mxu0 %v752
        %904 = vmatprep.subr.mxu0 %v760
        %905 = vmatpush1.msra.mxu0 %v758
        %906 = vmatprep.subr.mxu0 %v766
        %907 = vmatpush1.msra.mxu0 %v764
        %908 = vmatprep.subr.mxu0 %v772
        %909 = vmatpush1.msra.mxu0 %v770
        %910 = vmatprep.subr.mxu0 %v778
        %911 = vmatpush1.msra.mxu0 %v776
        %912 = vmatprep.subr.mxu0 %v784
        %913 = vmatpush1.msra.mxu0 %v782
        %914 = vmatprep.subr.mxu0 %v790
        %915 = vmatpush1.msra.mxu0 %v788
        %916 = vmatprep.subr.mxu0 %v796
        %917 = vmatpush1.msra.mxu0 %v794
        %918 = vmatprep.subr.mxu0 %v802
        %919 = vmatpush1.msra.mxu0 %v800
        %920 = vmatprep.subr.mxu0 %v808
        %921 = vmatpush1.msra.mxu0 %v806
        %922 = vmatprep.mubr.f32.mxu0 %v827
        %923 = vmatmul.mubr.f32.gmra.mrb[0].mxu0 %v826
        %v924 = vpop.f32.mrb[0].mxu0
        %v925 = vadd.f32 0.0, %v924
        %v926 = vpop.f32.mrb[0].mxu0
        %v927 = vadd.f32 0.0, %v926
        %928 = vmatprep.mubr.f32.mxu0 %v829
        %929 = vmatmul.mubr.f32.gmra.mrb[0].mxu0 %v828
        %v930 = vpop.f32.mrb[0].mxu0
        %v931 = vadd.f32 0.0, %v930
        %v932 = vpop.f32.mrb[0].mxu0
        %v933 = vadd.f32 0.0, %v932
        %934 = vmatprep.mubr.f32.mxu0 %v831
        %935 = vmatmul.mubr.f32.gmra.mrb[0].mxu0 %v830
        %v936 = vpop.f32.mrb[0].mxu0
        %v937 = vadd.f32 0.0, %v936
        %v938 = vpop.f32.mrb[0].mxu0
        %v939 = vadd.f32 0.0, %v938
        %940 = vmatprep.mubr.f32.mxu0 %v833
        %941 = vmatmul.mubr.f32.gmra.mrb[0].mxu0 %v832
        %v942 = vpop.f32.mrb[0].mxu0
        %v943 = vadd.f32 0.0, %v942
        %v944 = vpop.f32.mrb[0].mxu0
        %v945 = vadd.f32 0.0, %v944
        %946 = vmatprep.mubr.f32.mxu0 %v835
        %947 = vmatmul.mubr.f32.gmra.mrb[0].mxu0 %v834
        %v948 = vpop.f32.mrb[0].mxu0
        %v949 = vadd.f32 0.0, %v948
        %v950 = vpop.f32.mrb[0].mxu0
        %v951 = vadd.f32 0.0, %v950
        %952 = vmatprep.mubr.f32.mxu0 %v837
        %953 = vmatmul.mubr.f32.gmra.mrb[0].mxu0 %v836
        %v954 = vpop.f32.mrb[0].mxu0
        %v955 = vadd.f32 0.0, %v954
        %v956 = vpop.f32.mrb[0].mxu0
        %v957 = vadd.f32 0.0, %v956
        %958 = vmatprep.mubr.f32.mxu0 %v839
        %959 = vmatmul.mubr.f32.gmra.mrb[0].mxu0 %v838
        %v960 = vpop.f32.mrb[0].mxu0
        %v961 = vadd.f32 0.0, %v960
        %v962 = vpop.f32.mrb[0].mxu0
        %v963 = vadd.f32 0.0, %v962
        %964 = vmatprep.mubr.f32.mxu0 %v841
        %965 = vmatmul.mubr.f32.gmra.mrb[0].mxu0 %v840
        %v966 = vpop.f32.mrb[0].mxu0
        %v967 = vadd.f32 0.0, %v966
        %v968 = vpop.f32.mrb[0].mxu0
        %v969 = vadd.f32 0.0, %v968
        %970 = vmatprep.mubr.f32.mxu0 %v843
        %971 = vmatmul.mubr.f32.gmra.mrb[0].mxu0 %v842
        %v972 = vpop.f32.mrb[0].mxu0
        %v973 = vadd.f32 0.0, %v972
        %v974 = vpop.f32.mrb[0].mxu0
        %v975 = vadd.f32 0.0, %v974
        %976 = vmatprep.mubr.f32.mxu0 %v845
        %977 = vmatmul.mubr.f32.gmra.mrb[0].mxu0 %v844
        %v978 = vpop.f32.mrb[0].mxu0
        %v979 = vadd.f32 0.0, %v978
        %v980 = vpop.f32.mrb[0].mxu0
        %v981 = vadd.f32 0.0, %v980
        %982 = vmatprep.mubr.f32.mxu0 %v847
        %983 = vmatmul.mubr.f32.gmra.mrb[0].mxu0 %v846
        %v984 = vpop.f32.mrb[0].mxu0
        %v985 = vadd.f32 0.0, %v984
        %v986 = vpop.f32.mrb[0].mxu0
        %v987 = vadd.f32 0.0, %v986
        %988 = vmatprep.mubr.f32.mxu0 %v849
        %989 = vmatmul.mubr.f32.gmra.mrb[0].mxu0 %v848
        %v990 = vpop.f32.mrb[0].mxu0
        %v991 = vadd.f32 0.0, %v990
        %v992 = vpop.f32.mrb[0].mxu0
        %v993 = vadd.f32 0.0, %v992
        %994 = vmatprep.mubr.f32.mxu0 %v851
        %995 = vmatmul.mubr.f32.gmra.mrb[0].mxu0 %v850
        %v996 = vpop.f32.mrb[0].mxu0
        %v997 = vadd.f32 0.0, %v996
        %v998 = vpop.f32.mrb[0].mxu0
        %v999 = vadd.f32 0.0, %v998
        %1000 = vmatprep.mubr.f32.mxu0 %v853
        %1001 = vmatmul.mubr.f32.gmra.mrb[0].mxu0 %v852
        %v1002 = vpop.f32.mrb[0].mxu0
        %v1003 = vadd.f32 0.0, %v1002
        %v1004 = vpop.f32.mrb[0].mxu0
        %v1005 = vadd.f32 0.0, %v1004
        %1006 = vmatprep.mubr.f32.mxu0 %v855
        %1007 = vmatmul.mubr.f32.gmra.mrb[0].mxu0 %v854
        %v1008 = vpop.f32.mrb[0].mxu0
        %v1009 = vadd.f32 0.0, %v1008
        %v1010 = vpop.f32.mrb[0].mxu0
        %v1011 = vadd.f32 0.0, %v1010
        %1012 = vmatprep.mubr.f32.mxu0 %v857
        %1013 = vmatmul.mubr.f32.gmra.mrb[0].mxu0 %v856
        %v1014 = vpop.f32.mrb[0].mxu0
        %v1015 = vadd.f32 0.0, %v1014
        %v1016 = vpop.f32.mrb[0].mxu0
        %v1017 = vadd.f32 0.0, %v1016
        %1018 = vdwg.mxu0
        %1019 = vst [vmem:[%s481] sm:$0xff] %v925
        %1020 = vst [vmem:[%s481 + $0x8] sm:$0xff] %v931
        %1021 = vst [vmem:[%s481 + $0x10] sm:$0xff] %v937
        %1022 = vst [vmem:[%s481 + $0x18] sm:$0xff] %v943
        %1023 = vst [vmem:[%s481 + $0x20] sm:$0xff] %v949
        %1024 = vst [vmem:[%s481 + $0x28] sm:$0xff] %v955
        %1025 = vst [vmem:[%s481 + $0x30] sm:$0xff] %v961
        %1026 = vst [vmem:[%s481 + $0x38] sm:$0xff] %v967
        %1027 = vst [vmem:[%s481 + $0x40] sm:$0xff] %v973
        %1028 = vst [vmem:[%s481 + $0x48] sm:$0xff] %v979
        %1029 = vst [vmem:[%s481 + $0x50] sm:$0xff] %v985
        %1030 = vst [vmem:[%s481 + $0x58] sm:$0xff] %v991
        %1031 = vst [vmem:[%s481 + $0x60] sm:$0xff] %v997
        %1032 = vst [vmem:[%s481 + $0x68] sm:$0xff] %v1003
        %1033 = vst [vmem:[%s481 + $0x70] sm:$0xff] %v1009
        %1034 = vst [vmem:[%s481 + $0x78] sm:$0xff] %v1015
        %1035 = vst [vmem:[%s487] sm:$0xff] %v927
        %1036 = vst [vmem:[%s487 + $0x8] sm:$0xff] %v933
        %1037 = vst [vmem:[%s487 + $0x10] sm:$0xff] %v939
        %1038 = vst [vmem:[%s487 + $0x18] sm:$0xff] %v945
        %1039 = vst [vmem:[%s487 + $0x20] sm:$0xff] %v951
        %1040 = vst [vmem:[%s487 + $0x28] sm:$0xff] %v957
        %1041 = vst [vmem:[%s487 + $0x30] sm:$0xff] %v963
        %1042 = vst [vmem:[%s487 + $0x38] sm:$0xff] %v969
        %1043 = vst [vmem:[%s487 + $0x40] sm:$0xff] %v975
        %1044 = vst [vmem:[%s487 + $0x48] sm:$0xff] %v981
        %1045 = vst [vmem:[%s487 + $0x50] sm:$0xff] %v987
        %1046 = vst [vmem:[%s487 + $0x58] sm:$0xff] %v993
        %1047 = vst [vmem:[%s487 + $0x60] sm:$0xff] %v999
        %1048 = vst [vmem:[%s487 + $0x68] sm:$0xff] %v1005
        %1049 = vst [vmem:[%s487 + $0x70] sm:$0xff] %v1011
        %1050 = vst [vmem:[%s487 + $0x78] sm:$0xff] %v1017
        %v1051 = vld [vmem:[%s468] sm:$0xff]
        %v1052 = vld [vmem:[%s468 + $0x8] sm:$0xff]
        %v1053 = vld [vmem:[%s468 + $0x10] sm:$0xff]
        %v1054 = vld [vmem:[%s468 + $0x18] sm:$0xff]
        %v1055 = vld [vmem:[%s468 + $0x20] sm:$0xff]
        %v1056 = vld [vmem:[%s468 + $0x28] sm:$0xff]
        %v1057 = vld [vmem:[%s468 + $0x30] sm:$0xff]
        %v1058 = vld [vmem:[%s468 + $0x38] sm:$0xff]
        %v1059 = vld [vmem:[%s468 + $0x40] sm:$0xff]
        %v1060 = vld [vmem:[%s468 + $0x48] sm:$0xff]
        %v1061 = vld [vmem:[%s468 + $0x50] sm:$0xff]
        %v1062 = vld [vmem:[%s468 + $0x58] sm:$0xff]
        %v1063 = vld [vmem:[%s468 + $0x60] sm:$0xff]
        %v1064 = vld [vmem:[%s468 + $0x68] sm:$0xff]
        %v1065 = vld [vmem:[%s468 + $0x70] sm:$0xff]
        %v1066 = vld [vmem:[%s468 + $0x78] sm:$0xff]
        %v1067 = vmul.f32 %v927, 1.442695
        %v1068 = vpow.pop %v1067
        %v1069 = vmul.f32 %v933, 1.442695
        %v1070 = vpow.pop %v1069
        %v1071 = vmul.f32 %v939, 1.442695
        %v1072 = vpow.pop %v1071
        %v1073 = vmul.f32 %v945, 1.442695
        %v1074 = vpow.pop %v1073
        %v1075 = vmul.f32 %v951, 1.442695
        %v1076 = vpow.pop %v1075
        %v1077 = vmul.f32 %v957, 1.442695
        %v1078 = vpow.pop %v1077
        %v1079 = vmul.f32 %v963, 1.442695
        %v1080 = vpow.pop %v1079
        %v1081 = vmul.f32 %v969, 1.442695
        %v1082 = vpow.pop %v1081
        %v1083 = vmul.f32 %v975, 1.442695
        %v1084 = vpow.pop %v1083
        %v1085 = vmul.f32 %v981, 1.442695
        %v1086 = vpow.pop %v1085
        %v1087 = vmul.f32 %v987, 1.442695
        %v1088 = vpow.pop %v1087
        %v1089 = vmul.f32 %v993, 1.442695
        %v1090 = vpow.pop %v1089
        %v1091 = vmul.f32 %v999, 1.442695
        %v1092 = vpow.pop %v1091
        %v1093 = vmul.f32 %v1005, 1.442695
        %v1094 = vpow.pop %v1093
        %v1095 = vmul.f32 %v1011, 1.442695
        %v1096 = vpow.pop %v1095
        %v1097 = vmul.f32 %v1017, 1.442695
        %v1098 = vpow.pop %v1097
        %v1099 = vmul.f32 %v1051, %v1068
        %v1100 = vmul.f32 %v1052, %v1070
        %v1101 = vmul.f32 %v1053, %v1072
        %v1102 = vmul.f32 %v1054, %v1074
        %v1103 = vmul.f32 %v1055, %v1076
        %v1104 = vmul.f32 %v1056, %v1078
        %v1105 = vmul.f32 %v1057, %v1080
        %v1106 = vmul.f32 %v1058, %v1082
        %v1107 = vmul.f32 %v1059, %v1084
        %v1108 = vmul.f32 %v1060, %v1086
        %v1109 = vmul.f32 %v1061, %v1088
        %v1110 = vmul.f32 %v1062, %v1090
        %v1111 = vmul.f32 %v1063, %v1092
        %v1112 = vmul.f32 %v1064, %v1094
        %v1113 = vmul.f32 %v1065, %v1096
        %v1114 = vmul.f32 %v1066, %v1098
        %v1115 = vadd.f32 %v1099, %v925
        %v1116 = vadd.f32 %v1100, %v931
        %v1117 = vadd.f32 %v1101, %v937
        %v1118 = vadd.f32 %v1102, %v943
        %v1119 = vadd.f32 %v1103, %v949
        %v1120 = vadd.f32 %v1104, %v955
        %v1121 = vadd.f32 %v1105, %v961
        %v1122 = vadd.f32 %v1106, %v967
        %v1123 = vadd.f32 %v1107, %v973
        %v1124 = vadd.f32 %v1108, %v979
        %v1125 = vadd.f32 %v1109, %v985
        %v1126 = vadd.f32 %v1110, %v991
        %v1127 = vadd.f32 %v1111, %v997
        %v1128 = vadd.f32 %v1112, %v1003
        %v1129 = vadd.f32 %v1113, %v1009
        %v1130 = vadd.f32 %v1114, %v1015
        %v1131 = vld [vmem:[%s5] sm:$0xff]
        %v1132 = vld [vmem:[%s5 + $0x8] sm:$0xff]
        %v1133 = vld [vmem:[%s5 + $0x10] sm:$0xff]
        %v1134 = vld [vmem:[%s5 + $0x18] sm:$0xff]
        %v1135 = vld [vmem:[%s5 + $0x20] sm:$0xff]
        %v1136 = vld [vmem:[%s5 + $0x28] sm:$0xff]
        %v1137 = vld [vmem:[%s5 + $0x30] sm:$0xff]
        %v1138 = vld [vmem:[%s5 + $0x38] sm:$0xff]
        %v1139 = vld [vmem:[%s5 + $0x40] sm:$0xff]
        %v1140 = vld [vmem:[%s5 + $0x48] sm:$0xff]
        %v1141 = vld [vmem:[%s5 + $0x50] sm:$0xff]
        %v1142 = vld [vmem:[%s5 + $0x58] sm:$0xff]
        %v1143 = vld [vmem:[%s5 + $0x60] sm:$0xff]
        %v1144 = vld [vmem:[%s5 + $0x68] sm:$0xff]
        %v1145 = vld [vmem:[%s5 + $0x70] sm:$0xff]
        %v1146 = vld [vmem:[%s5 + $0x78] sm:$0xff]
        %v1147 = vld [vmem:[%s474] sm:$0xff]
        %v1148 = vld [vmem:[%s474 + $0x8] sm:$0xff]
        %v1149 = vld [vmem:[%s474 + $0x10] sm:$0xff]
        %v1150 = vld [vmem:[%s474 + $0x18] sm:$0xff]
        %v1151 = vld [vmem:[%s474 + $0x20] sm:$0xff]
        %v1152 = vld [vmem:[%s474 + $0x28] sm:$0xff]
        %v1153 = vld [vmem:[%s474 + $0x30] sm:$0xff]
        %v1154 = vld [vmem:[%s474 + $0x38] sm:$0xff]
        %v1155 = vld [vmem:[%s474 + $0x40] sm:$0xff]
        %v1156 = vld [vmem:[%s474 + $0x48] sm:$0xff]
        %v1157 = vld [vmem:[%s474 + $0x50] sm:$0xff]
        %v1158 = vld [vmem:[%s474 + $0x58] sm:$0xff]
        %v1159 = vld [vmem:[%s474 + $0x60] sm:$0xff]
        %v1160 = vld [vmem:[%s474 + $0x68] sm:$0xff]
        %v1161 = vld [vmem:[%s474 + $0x70] sm:$0xff]
        %v1162 = vld [vmem:[%s474 + $0x78] sm:$0xff]
        %v1163 = vld [vmem:[%s6] sm:$0xff]
        %v1164 = vld [vmem:[%s6 + $0x8] sm:$0xff]
        %v1165 = vld [vmem:[%s6 + $0x10] sm:$0xff]
        %v1166 = vld [vmem:[%s6 + $0x18] sm:$0xff]
        %v1167 = vld [vmem:[%s6 + $0x20] sm:$0xff]
        %v1168 = vld [vmem:[%s6 + $0x28] sm:$0xff]
        %v1169 = vld [vmem:[%s6 + $0x30] sm:$0xff]
        %v1170 = vld [vmem:[%s6 + $0x38] sm:$0xff]
        %v1171 = vld [vmem:[%s6 + $0x40] sm:$0xff]
        %v1172 = vld [vmem:[%s6 + $0x48] sm:$0xff]
        %v1173 = vld [vmem:[%s6 + $0x50] sm:$0xff]
        %v1174 = vld [vmem:[%s6 + $0x58] sm:$0xff]
        %v1175 = vld [vmem:[%s6 + $0x60] sm:$0xff]
        %v1176 = vld [vmem:[%s6 + $0x68] sm:$0xff]
        %v1177 = vld [vmem:[%s6 + $0x70] sm:$0xff]
        %v1178 = vld [vmem:[%s6 + $0x78] sm:$0xff]
        %1179 = vmatprep.subr.mxu0 0.0
        %1180 = vmatpush1.msra.mxu0 %v1163
        %1181 = vmatprep.subr.mxu0 0.0
        %1182 = vmatpush1.msra.mxu0 %v1164
        %1183 = vmatprep.subr.mxu0 0.0
        %1184 = vmatpush1.msra.mxu0 %v1165
        %1185 = vmatprep.subr.mxu0 0.0
        %1186 = vmatpush1.msra.mxu0 %v1166
        %1187 = vmatprep.subr.mxu0 0.0
        %1188 = vmatpush1.msra.mxu0 %v1167
        %1189 = vmatprep.subr.mxu0 0.0
        %1190 = vmatpush1.msra.mxu0 %v1168
        %1191 = vmatprep.subr.mxu0 0.0
        %1192 = vmatpush1.msra.mxu0 %v1169
        %1193 = vmatprep.subr.mxu0 0.0
        %1194 = vmatpush1.msra.mxu0 %v1170
        %1195 = vmatprep.subr.mxu0 0.0
        %1196 = vmatpush1.msra.mxu0 %v1171
        %1197 = vmatprep.subr.mxu0 0.0
        %1198 = vmatpush1.msra.mxu0 %v1172
        %1199 = vmatprep.subr.mxu0 0.0
        %1200 = vmatpush1.msra.mxu0 %v1173
        %1201 = vmatprep.subr.mxu0 0.0
        %1202 = vmatpush1.msra.mxu0 %v1174
        %1203 = vmatprep.subr.mxu0 0.0
        %1204 = vmatpush1.msra.mxu0 %v1175
        %1205 = vmatprep.subr.mxu0 0.0
        %1206 = vmatpush1.msra.mxu0 %v1176
        %1207 = vmatprep.subr.mxu0 0.0
        %1208 = vmatpush1.msra.mxu0 %v1177
        %1209 = vmatprep.subr.mxu0 0.0
        %1210 = vmatpush1.msra.mxu0 %v1178
        %1211 = vmatprep.subr.mxu0 0.0
        %1212 = vmatpush1.msra.mxu0 0.0
        %1213 = vmatprep.subr.mxu0 0.0
        %1214 = vmatpush1.msra.mxu0 0.0
        %1215 = vmatprep.subr.mxu0 0.0
        %1216 = vmatpush1.msra.mxu0 0.0
        %1217 = vmatprep.subr.mxu0 0.0
        %1218 = vmatpush1.msra.mxu0 0.0
        %1219 = vmatprep.subr.mxu0 0.0
        %1220 = vmatpush1.msra.mxu0 0.0
        %1221 = vmatprep.subr.mxu0 0.0
        %1222 = vmatpush1.msra.mxu0 0.0
        %1223 = vmatprep.subr.mxu0 0.0
        %1224 = vmatpush1.msra.mxu0 0.0
        %1225 = vmatprep.subr.mxu0 0.0
        %1226 = vmatpush1.msra.mxu0 0.0
        %1227 = vmatprep.subr.mxu0 0.0
        %1228 = vmatpush1.msra.mxu0 0.0
        %1229 = vmatprep.subr.mxu0 0.0
        %1230 = vmatpush1.msra.mxu0 0.0
        %1231 = vmatprep.subr.mxu0 0.0
        %1232 = vmatpush1.msra.mxu0 0.0
        %1233 = vmatprep.subr.mxu0 0.0
        %1234 = vmatpush1.msra.mxu0 0.0
        %1235 = vmatprep.subr.mxu0 0.0
        %1236 = vmatpush1.msra.mxu0 0.0
        %1237 = vmatprep.subr.mxu0 0.0
        %1238 = vmatpush1.msra.mxu0 0.0
        %1239 = vmatprep.subr.mxu0 0.0
        %1240 = vmatpush1.msra.mxu0 0.0
        %1241 = vmatprep.subr.mxu0 0.0
        %1242 = vmatpush1.msra.mxu0 0.0
        %1243 = vmatprep.mubr.f32.mxu0 0.0
        %1244 = vmatmul.mubr.f32.gmra.mrb[0].mxu0 %v1147
        %v1245 = vpop.f32.mrb[0].mxu0
        %v1246 = vadd.f32 0.0, %v1245
        %v1247 = vpop.f32.mrb[0].mxu0
        %1248 = vmatprep.mubr.f32.mxu0 0.0
        %1249 = vmatmul.mubr.f32.gmra.mrb[0].mxu0 %v1148
        %v1250 = vpop.f32.mrb[0].mxu0
        %v1251 = vadd.f32 0.0, %v1250
        %v1252 = vpop.f32.mrb[0].mxu0
        %1253 = vmatprep.mubr.f32.mxu0 0.0
        %1254 = vmatmul.mubr.f32.gmra.mrb[0].mxu0 %v1149
        %v1255 = vpop.f32.mrb[0].mxu0
        %v1256 = vadd.f32 0.0, %v1255
        %v1257 = vpop.f32.mrb[0].mxu0
        %1258 = vmatprep.mubr.f32.mxu0 0.0
        %1259 = vmatmul.mubr.f32.gmra.mrb[0].mxu0 %v1150
        %v1260 = vpop.f32.mrb[0].mxu0
        %v1261 = vadd.f32 0.0, %v1260
        %v1262 = vpop.f32.mrb[0].mxu0
        %1263 = vmatprep.mubr.f32.mxu0 0.0
        %1264 = vmatmul.mubr.f32.gmra.mrb[0].mxu0 %v1151
        %v1265 = vpop.f32.mrb[0].mxu0
        %v1266 = vadd.f32 0.0, %v1265
        %v1267 = vpop.f32.mrb[0].mxu0
        %1268 = vmatprep.mubr.f32.mxu0 0.0
        %1269 = vmatmul.mubr.f32.gmra.mrb[0].mxu0 %v1152
        %v1270 = vpop.f32.mrb[0].mxu0
        %v1271 = vadd.f32 0.0, %v1270
        %v1272 = vpop.f32.mrb[0].mxu0
        %1273 = vmatprep.mubr.f32.mxu0 0.0
        %1274 = vmatmul.mubr.f32.gmra.mrb[0].mxu0 %v1153
        %v1275 = vpop.f32.mrb[0].mxu0
        %v1276 = vadd.f32 0.0, %v1275
        %v1277 = vpop.f32.mrb[0].mxu0
        %1278 = vmatprep.mubr.f32.mxu0 0.0
        %1279 = vmatmul.mubr.f32.gmra.mrb[0].mxu0 %v1154
        %v1280 = vpop.f32.mrb[0].mxu0
        %v1281 = vadd.f32 0.0, %v1280
        %v1282 = vpop.f32.mrb[0].mxu0
        %1283 = vmatprep.mubr.f32.mxu0 0.0
        %1284 = vmatmul.mubr.f32.gmra.mrb[0].mxu0 %v1155
        %v1285 = vpop.f32.mrb[0].mxu0
        %v1286 = vadd.f32 0.0, %v1285
        %v1287 = vpop.f32.mrb[0].mxu0
        %1288 = vmatprep.mubr.f32.mxu0 0.0
        %1289 = vmatmul.mubr.f32.gmra.mrb[0].mxu0 %v1156
        %v1290 = vpop.f32.mrb[0].mxu0
        %v1291 = vadd.f32 0.0, %v1290
        %v1292 = vpop.f32.mrb[0].mxu0
        %1293 = vmatprep.mubr.f32.mxu0 0.0
        %1294 = vmatmul.mubr.f32.gmra.mrb[0].mxu0 %v1157
        %v1295 = vpop.f32.mrb[0].mxu0
        %v1296 = vadd.f32 0.0, %v1295
        %v1297 = vpop.f32.mrb[0].mxu0
        %1298 = vmatprep.mubr.f32.mxu0 0.0
        %1299 = vmatmul.mubr.f32.gmra.mrb[0].mxu0 %v1158
        %v1300 = vpop.f32.mrb[0].mxu0
        %v1301 = vadd.f32 0.0, %v1300
        %v1302 = vpop.f32.mrb[0].mxu0
        %1303 = vmatprep.mubr.f32.mxu0 0.0
        %1304 = vmatmul.mubr.f32.gmra.mrb[0].mxu0 %v1159
        %v1305 = vpop.f32.mrb[0].mxu0
        %v1306 = vadd.f32 0.0, %v1305
        %v1307 = vpop.f32.mrb[0].mxu0
        %1308 = vmatprep.mubr.f32.mxu0 0.0
        %1309 = vmatmul.mubr.f32.gmra.mrb[0].mxu0 %v1160
        %v1310 = vpop.f32.mrb[0].mxu0
        %v1311 = vadd.f32 0.0, %v1310
        %v1312 = vpop.f32.mrb[0].mxu0
        %1313 = vmatprep.mubr.f32.mxu0 0.0
        %1314 = vmatmul.mubr.f32.gmra.mrb[0].mxu0 %v1161
        %v1315 = vpop.f32.mrb[0].mxu0
        %v1316 = vadd.f32 0.0, %v1315
        %v1317 = vpop.f32.mrb[0].mxu0
        %1318 = vmatprep.mubr.f32.mxu0 0.0
        %1319 = vmatmul.mubr.f32.gmra.mrb[0].mxu0 %v1162
        %v1320 = vpop.f32.mrb[0].mxu0
        %v1321 = vadd.f32 0.0, %v1320
        %v1322 = vpop.f32.mrb[0].mxu0
        %1323 = vdwg.mxu0
        %1324 = vmatprep.subr.mxu0 0.0
        %1325 = vmatpush1.msra.mxu0 %v1131
        %1326 = vmatprep.subr.mxu0 0.0
        %1327 = vmatpush1.msra.mxu0 %v1132
        %1328 = vmatprep.subr.mxu0 0.0
        %1329 = vmatpush1.msra.mxu0 %v1133
        %1330 = vmatprep.subr.mxu0 0.0
        %1331 = vmatpush1.msra.mxu0 %v1134
        %1332 = vmatprep.subr.mxu0 0.0
        %1333 = vmatpush1.msra.mxu0 %v1135
        %1334 = vmatprep.subr.mxu0 0.0
        %1335 = vmatpush1.msra.mxu0 %v1136
        %1336 = vmatprep.subr.mxu0 0.0
        %1337 = vmatpush1.msra.mxu0 %v1137
        %1338 = vmatprep.subr.mxu0 0.0
        %1339 = vmatpush1.msra.mxu0 %v1138
        %1340 = vmatprep.subr.mxu0 0.0
        %1341 = vmatpush1.msra.mxu0 %v1139
        %1342 = vmatprep.subr.mxu0 0.0
        %1343 = vmatpush1.msra.mxu0 %v1140
        %1344 = vmatprep.subr.mxu0 0.0
        %1345 = vmatpush1.msra.mxu0 %v1141
        %1346 = vmatprep.subr.mxu0 0.0
        %1347 = vmatpush1.msra.mxu0 %v1142
        %1348 = vmatprep.subr.mxu0 0.0
        %1349 = vmatpush1.msra.mxu0 %v1143
        %1350 = vmatprep.subr.mxu0 0.0
        %1351 = vmatpush1.msra.mxu0 %v1144
        %1352 = vmatprep.subr.mxu0 0.0
        %1353 = vmatpush1.msra.mxu0 %v1145
        %1354 = vmatprep.subr.mxu0 0.0
        %1355 = vmatpush1.msra.mxu0 %v1146
        %1356 = vmatprep.subr.mxu0 0.0
        %1357 = vmatpush1.msra.mxu0 0.0
        %1358 = vmatprep.subr.mxu0 0.0
        %1359 = vmatpush1.msra.mxu0 0.0
        %1360 = vmatprep.subr.mxu0 0.0
        %1361 = vmatpush1.msra.mxu0 0.0
        %1362 = vmatprep.subr.mxu0 0.0
        %1363 = vmatpush1.msra.mxu0 0.0
        %1364 = vmatprep.subr.mxu0 0.0
        %1365 = vmatpush1.msra.mxu0 0.0
        %1366 = vmatprep.subr.mxu0 0.0
        %1367 = vmatpush1.msra.mxu0 0.0
        %1368 = vmatprep.subr.mxu0 0.0
        %1369 = vmatpush1.msra.mxu0 0.0
        %1370 = vmatprep.subr.mxu0 0.0
        %1371 = vmatpush1.msra.mxu0 0.0
        %1372 = vmatprep.subr.mxu0 0.0
        %1373 = vmatpush1.msra.mxu0 0.0
        %1374 = vmatprep.subr.mxu0 0.0
        %1375 = vmatpush1.msra.mxu0 0.0
        %1376 = vmatprep.subr.mxu0 0.0
        %1377 = vmatpush1.msra.mxu0 0.0
        %1378 = vmatprep.subr.mxu0 0.0
        %1379 = vmatpush1.msra.mxu0 0.0
        %1380 = vmatprep.subr.mxu0 0.0
        %1381 = vmatpush1.msra.mxu0 0.0
        %1382 = vmatprep.subr.mxu0 0.0
        %1383 = vmatpush1.msra.mxu0 0.0
        %1384 = vmatprep.subr.mxu0 0.0
        %1385 = vmatpush1.msra.mxu0 0.0
        %1386 = vmatprep.subr.mxu0 0.0
        %1387 = vmatpush1.msra.mxu0 0.0
        %1388 = vmatprep.mubr.f32.mxu0 0.0
        %1389 = vmatmul.mubr.f32.gmra.mrb[0].mxu0 %v1115
        %v1390 = vpop.f32.mrb[0].mxu0
        %v1391 = vadd.f32 %v1246, %v1390
        %v1392 = vpop.f32.mrb[0].mxu0
        %1393 = vmatprep.mubr.f32.mxu0 0.0
        %1394 = vmatmul.mubr.f32.gmra.mrb[0].mxu0 %v1116
        %v1395 = vpop.f32.mrb[0].mxu0
        %v1396 = vadd.f32 %v1251, %v1395
        %v1397 = vpop.f32.mrb[0].mxu0
        %1398 = vmatprep.mubr.f32.mxu0 0.0
        %1399 = vmatmul.mubr.f32.gmra.mrb[0].mxu0 %v1117
        %v1400 = vpop.f32.mrb[0].mxu0
        %v1401 = vadd.f32 %v1256, %v1400
        %v1402 = vpop.f32.mrb[0].mxu0
        %1403 = vmatprep.mubr.f32.mxu0 0.0
        %1404 = vmatmul.mubr.f32.gmra.mrb[0].mxu0 %v1118
        %v1405 = vpop.f32.mrb[0].mxu0
        %v1406 = vadd.f32 %v1261, %v1405
        %v1407 = vpop.f32.mrb[0].mxu0
        %1408 = vmatprep.mubr.f32.mxu0 0.0
        %1409 = vmatmul.mubr.f32.gmra.mrb[0].mxu0 %v1119
        %v1410 = vpop.f32.mrb[0].mxu0
        %v1411 = vadd.f32 %v1266, %v1410
        %v1412 = vpop.f32.mrb[0].mxu0
        %1413 = vmatprep.mubr.f32.mxu0 0.0
        %1414 = vmatmul.mubr.f32.gmra.mrb[0].mxu0 %v1120
        %v1415 = vpop.f32.mrb[0].mxu0
        %v1416 = vadd.f32 %v1271, %v1415
        %v1417 = vpop.f32.mrb[0].mxu0
        %1418 = vmatprep.mubr.f32.mxu0 0.0
        %1419 = vmatmul.mubr.f32.gmra.mrb[0].mxu0 %v1121
        %v1420 = vpop.f32.mrb[0].mxu0
        %v1421 = vadd.f32 %v1276, %v1420
        %v1422 = vpop.f32.mrb[0].mxu0
        %1423 = vmatprep.mubr.f32.mxu0 0.0
        %1424 = vmatmul.mubr.f32.gmra.mrb[0].mxu0 %v1122
        %v1425 = vpop.f32.mrb[0].mxu0
        %v1426 = vadd.f32 %v1281, %v1425
        %v1427 = vpop.f32.mrb[0].mxu0
        %1428 = vmatprep.mubr.f32.mxu0 0.0
        %1429 = vmatmul.mubr.f32.gmra.mrb[0].mxu0 %v1123
        %v1430 = vpop.f32.mrb[0].mxu0
        %v1431 = vadd.f32 %v1286, %v1430
        %v1432 = vpop.f32.mrb[0].mxu0
        %1433 = vmatprep.mubr.f32.mxu0 0.0
        %1434 = vmatmul.mubr.f32.gmra.mrb[0].mxu0 %v1124
        %v1435 = vpop.f32.mrb[0].mxu0
        %v1436 = vadd.f32 %v1291, %v1435
        %v1437 = vpop.f32.mrb[0].mxu0
        %1438 = vmatprep.mubr.f32.mxu0 0.0
        %1439 = vmatmul.mubr.f32.gmra.mrb[0].mxu0 %v1125
        %v1440 = vpop.f32.mrb[0].mxu0
        %v1441 = vadd.f32 %v1296, %v1440
        %v1442 = vpop.f32.mrb[0].mxu0
        %1443 = vmatprep.mubr.f32.mxu0 0.0
        %1444 = vmatmul.mubr.f32.gmra.mrb[0].mxu0 %v1126
        %v1445 = vpop.f32.mrb[0].mxu0
        %v1446 = vadd.f32 %v1301, %v1445
        %v1447 = vpop.f32.mrb[0].mxu0
        %1448 = vmatprep.mubr.f32.mxu0 0.0
        %1449 = vmatmul.mubr.f32.gmra.mrb[0].mxu0 %v1127
        %v1450 = vpop.f32.mrb[0].mxu0
        %v1451 = vadd.f32 %v1306, %v1450
        %v1452 = vpop.f32.mrb[0].mxu0
        %1453 = vmatprep.mubr.f32.mxu0 0.0
        %1454 = vmatmul.mubr.f32.gmra.mrb[0].mxu0 %v1128
        %v1455 = vpop.f32.mrb[0].mxu0
        %v1456 = vadd.f32 %v1311, %v1455
        %v1457 = vpop.f32.mrb[0].mxu0
        %1458 = vmatprep.mubr.f32.mxu0 0.0
        %1459 = vmatmul.mubr.f32.gmra.mrb[0].mxu0 %v1129
        %v1460 = vpop.f32.mrb[0].mxu0
        %v1461 = vadd.f32 %v1316, %v1460
        %v1462 = vpop.f32.mrb[0].mxu0
        %1463 = vmatprep.mubr.f32.mxu0 0.0
        %1464 = vmatmul.mubr.f32.gmra.mrb[0].mxu0 %v1130
        %v1465 = vpop.f32.mrb[0].mxu0
        %v1466 = vadd.f32 %v1321, %v1465
        %v1467 = vpop.f32.mrb[0].mxu0
        %1468 = vdwg.mxu0
        %v1469 = vld [vmem:[%s7] sm:$0x1]
        %v1471 = vlaneseq
        %v1472 = vshrl.u32 %v1471, 7
        %v1473 = vsub.s32 0, %v1472
        %v1474 = vrot.slane %v1469, %v1473
        %v1476 = vadd.f32 %v1391, %v1474
        %v1477 = vadd.f32 %v1396, %v1474
        %v1478 = vadd.f32 %v1401, %v1474
        %v1479 = vadd.f32 %v1406, %v1474
        %v1480 = vadd.f32 %v1411, %v1474
        %v1481 = vadd.f32 %v1416, %v1474
        %v1482 = vadd.f32 %v1421, %v1474
        %v1483 = vadd.f32 %v1426, %v1474
        %v1484 = vadd.f32 %v1431, %v1474
        %v1485 = vadd.f32 %v1436, %v1474
        %v1486 = vadd.f32 %v1441, %v1474
        %v1487 = vadd.f32 %v1446, %v1474
        %v1488 = vadd.f32 %v1451, %v1474
        %v1489 = vadd.f32 %v1456, %v1474
        %v1490 = vadd.f32 %v1461, %v1474
        %v1491 = vadd.f32 %v1466, %v1474
        %v1492 = vmax.f32 %v1476, 0.0
        %v1493 = vmax.f32 %v1477, 0.0
        %v1494 = vmax.f32 %v1478, 0.0
        %v1495 = vmax.f32 %v1479, 0.0
        %v1496 = vmax.f32 %v1480, 0.0
        %v1497 = vmax.f32 %v1481, 0.0
        %v1498 = vmax.f32 %v1482, 0.0
        %v1499 = vmax.f32 %v1483, 0.0
        %v1500 = vmax.f32 %v1484, 0.0
        %v1501 = vmax.f32 %v1485, 0.0
        %v1502 = vmax.f32 %v1486, 0.0
        %v1503 = vmax.f32 %v1487, 0.0
        %v1504 = vmax.f32 %v1488, 0.0
        %v1505 = vmax.f32 %v1489, 0.0
        %v1506 = vmax.f32 %v1490, 0.0
        %v1507 = vmax.f32 %v1491, 0.0
        %v1508 = vld [vmem:[%s8] sm:$0xff]
        %v1509 = vld [vmem:[%s8 + $0x8] sm:$0xff]
        %v1510 = vld [vmem:[%s8 + $0x10] sm:$0xff]
        %v1511 = vld [vmem:[%s8 + $0x18] sm:$0xff]
        %v1512 = vld [vmem:[%s8 + $0x20] sm:$0xff]
        %v1513 = vld [vmem:[%s8 + $0x28] sm:$0xff]
        %v1514 = vld [vmem:[%s8 + $0x30] sm:$0xff]
        %v1515 = vld [vmem:[%s8 + $0x38] sm:$0xff]
        %v1516 = vld [vmem:[%s8 + $0x40] sm:$0xff]
        %v1517 = vld [vmem:[%s8 + $0x48] sm:$0xff]
        %v1518 = vld [vmem:[%s8 + $0x50] sm:$0xff]
        %v1519 = vld [vmem:[%s8 + $0x58] sm:$0xff]
        %v1520 = vld [vmem:[%s8 + $0x60] sm:$0xff]
        %v1521 = vld [vmem:[%s8 + $0x68] sm:$0xff]
        %v1522 = vld [vmem:[%s8 + $0x70] sm:$0xff]
        %v1523 = vld [vmem:[%s8 + $0x78] sm:$0xff]
        %v1524 = vld [vmem:[%s8 + $0x80] sm:$0xff]
        %v1525 = vld [vmem:[%s8 + $0x88] sm:$0xff]
        %v1526 = vld [vmem:[%s8 + $0x90] sm:$0xff]
        %v1527 = vld [vmem:[%s8 + $0x98] sm:$0xff]
        %v1528 = vld [vmem:[%s8 + $0xa0] sm:$0xff]
        %v1529 = vld [vmem:[%s8 + $0xa8] sm:$0xff]
        %v1530 = vld [vmem:[%s8 + $0xb0] sm:$0xff]
        %v1531 = vld [vmem:[%s8 + $0xb8] sm:$0xff]
        %v1532 = vld [vmem:[%s8 + $0xc0] sm:$0xff]
        %v1533 = vld [vmem:[%s8 + $0xc8] sm:$0xff]
        %v1534 = vld [vmem:[%s8 + $0xd0] sm:$0xff]
        %v1535 = vld [vmem:[%s8 + $0xd8] sm:$0xff]
        %v1536 = vld [vmem:[%s8 + $0xe0] sm:$0xff]
        %v1537 = vld [vmem:[%s8 + $0xe8] sm:$0xff]
        %v1538 = vld [vmem:[%s8 + $0xf0] sm:$0xff]
        %v1539 = vld [vmem:[%s8 + $0xf8] sm:$0xff]
        %v1540 = vld [vmem:[%s9] sm:$0x3]
        %v1542 = vlaneseq
        %v1543 = vshrl.u32 %v1542, 7
        %v1544 = vsub.s32 0, %v1543
        %v1545 = vrot.slane %v1540, %v1544
        %v1546 = vlaneseq
        %v1547 = vshrl.u32 %v1546, 7
        %v1548 = vsub.s32 1, %v1547
        %v1549 = vrot.slane %v1540, %v1548
        %1552 = vmatprep.subr.mxu0 %v1509
        %1553 = vmatpush1.msra.mxu0 %v1508
        %1554 = vmatprep.subr.mxu0 %v1511
        %1555 = vmatpush1.msra.mxu0 %v1510
        %1556 = vmatprep.subr.mxu0 %v1513
        %1557 = vmatpush1.msra.mxu0 %v1512
        %1558 = vmatprep.subr.mxu0 %v1515
        %1559 = vmatpush1.msra.mxu0 %v1514
        %1560 = vmatprep.subr.mxu0 %v1517
        %1561 = vmatpush1.msra.mxu0 %v1516
        %1562 = vmatprep.subr.mxu0 %v1519
        %1563 = vmatpush1.msra.mxu0 %v1518
        %1564 = vmatprep.subr.mxu0 %v1521
        %1565 = vmatpush1.msra.mxu0 %v1520
        %1566 = vmatprep.subr.mxu0 %v1523
        %1567 = vmatpush1.msra.mxu0 %v1522
        %1568 = vmatprep.subr.mxu0 %v1525
        %1569 = vmatpush1.msra.mxu0 %v1524
        %1570 = vmatprep.subr.mxu0 %v1527
        %1571 = vmatpush1.msra.mxu0 %v1526
        %1572 = vmatprep.subr.mxu0 %v1529
        %1573 = vmatpush1.msra.mxu0 %v1528
        %1574 = vmatprep.subr.mxu0 %v1531
        %1575 = vmatpush1.msra.mxu0 %v1530
        %1576 = vmatprep.subr.mxu0 %v1533
        %1577 = vmatpush1.msra.mxu0 %v1532
        %1578 = vmatprep.subr.mxu0 %v1535
        %1579 = vmatpush1.msra.mxu0 %v1534
        %1580 = vmatprep.subr.mxu0 %v1537
        %1581 = vmatpush1.msra.mxu0 %v1536
        %1582 = vmatprep.subr.mxu0 %v1539
        %1583 = vmatpush1.msra.mxu0 %v1538
        %1584 = vmatprep.subr.mxu0 0.0
        %1585 = vmatpush1.msra.mxu0 0.0
        %1586 = vmatprep.subr.mxu0 0.0
        %1587 = vmatpush1.msra.mxu0 0.0
        %1588 = vmatprep.subr.mxu0 0.0
        %1589 = vmatpush1.msra.mxu0 0.0
        %1590 = vmatprep.subr.mxu0 0.0
        %1591 = vmatpush1.msra.mxu0 0.0
        %1592 = vmatprep.subr.mxu0 0.0
        %1593 = vmatpush1.msra.mxu0 0.0
        %1594 = vmatprep.subr.mxu0 0.0
        %1595 = vmatpush1.msra.mxu0 0.0
        %1596 = vmatprep.subr.mxu0 0.0
        %1597 = vmatpush1.msra.mxu0 0.0
        %1598 = vmatprep.subr.mxu0 0.0
        %1599 = vmatpush1.msra.mxu0 0.0
        %1600 = vmatprep.subr.mxu0 0.0
        %1601 = vmatpush1.msra.mxu0 0.0
        %1602 = vmatprep.subr.mxu0 0.0
        %1603 = vmatpush1.msra.mxu0 0.0
        %1604 = vmatprep.subr.mxu0 0.0
        %1605 = vmatpush1.msra.mxu0 0.0
        %1606 = vmatprep.subr.mxu0 0.0
        %1607 = vmatpush1.msra.mxu0 0.0
        %1608 = vmatprep.subr.mxu0 0.0
        %1609 = vmatpush1.msra.mxu0 0.0
        %1610 = vmatprep.subr.mxu0 0.0
        %1611 = vmatpush1.msra.mxu0 0.0
        %1612 = vmatprep.subr.mxu0 0.0
        %1613 = vmatpush1.msra.mxu0 0.0
        %1614 = vmatprep.subr.mxu0 0.0
        %1615 = vmatpush1.msra.mxu0 0.0
        %1616 = vmatprep.mubr.f32.mxu0 0.0
        %1617 = vmatmul.mubr.f32.gmra.mrb[0].mxu0 %v1492
        %v1618 = vpop.f32.mrb[0].mxu0
        %v1619 = vadd.f32 %v1545, %v1618
        %v1620 = vpop.f32.mrb[0].mxu0
        %v1621 = vadd.f32 %v1549, %v1620
        %1622 = vmatprep.mubr.f32.mxu0 0.0
        %1623 = vmatmul.mubr.f32.gmra.mrb[0].mxu0 %v1493
        %v1624 = vpop.f32.mrb[0].mxu0
        %v1625 = vadd.f32 %v1545, %v1624
        %v1626 = vpop.f32.mrb[0].mxu0
        %v1627 = vadd.f32 %v1549, %v1626
        %1628 = vmatprep.mubr.f32.mxu0 0.0
        %1629 = vmatmul.mubr.f32.gmra.mrb[0].mxu0 %v1494
        %v1630 = vpop.f32.mrb[0].mxu0
        %v1631 = vadd.f32 %v1545, %v1630
        %v1632 = vpop.f32.mrb[0].mxu0
        %v1633 = vadd.f32 %v1549, %v1632
        %1634 = vmatprep.mubr.f32.mxu0 0.0
        %1635 = vmatmul.mubr.f32.gmra.mrb[0].mxu0 %v1495
        %v1636 = vpop.f32.mrb[0].mxu0
        %v1637 = vadd.f32 %v1545, %v1636
        %v1638 = vpop.f32.mrb[0].mxu0
        %v1639 = vadd.f32 %v1549, %v1638
        %1640 = vmatprep.mubr.f32.mxu0 0.0
        %1641 = vmatmul.mubr.f32.gmra.mrb[0].mxu0 %v1496
        %v1642 = vpop.f32.mrb[0].mxu0
        %v1643 = vadd.f32 %v1545, %v1642
        %v1644 = vpop.f32.mrb[0].mxu0
        %v1645 = vadd.f32 %v1549, %v1644
        %1646 = vmatprep.mubr.f32.mxu0 0.0
        %1647 = vmatmul.mubr.f32.gmra.mrb[0].mxu0 %v1497
        %v1648 = vpop.f32.mrb[0].mxu0
        %v1649 = vadd.f32 %v1545, %v1648
        %v1650 = vpop.f32.mrb[0].mxu0
        %v1651 = vadd.f32 %v1549, %v1650
        %1652 = vmatprep.mubr.f32.mxu0 0.0
        %1653 = vmatmul.mubr.f32.gmra.mrb[0].mxu0 %v1498
        %v1654 = vpop.f32.mrb[0].mxu0
        %v1655 = vadd.f32 %v1545, %v1654
        %v1656 = vpop.f32.mrb[0].mxu0
        %v1657 = vadd.f32 %v1549, %v1656
        %1658 = vmatprep.mubr.f32.mxu0 0.0
        %1659 = vmatmul.mubr.f32.gmra.mrb[0].mxu0 %v1499
        %v1660 = vpop.f32.mrb[0].mxu0
        %v1661 = vadd.f32 %v1545, %v1660
        %v1662 = vpop.f32.mrb[0].mxu0
        %v1663 = vadd.f32 %v1549, %v1662
        %1664 = vmatprep.mubr.f32.mxu0 0.0
        %1665 = vmatmul.mubr.f32.gmra.mrb[0].mxu0 %v1500
        %v1666 = vpop.f32.mrb[0].mxu0
        %v1667 = vadd.f32 %v1545, %v1666
        %v1668 = vpop.f32.mrb[0].mxu0
        %v1669 = vadd.f32 %v1549, %v1668
        %1670 = vmatprep.mubr.f32.mxu0 0.0
        %1671 = vmatmul.mubr.f32.gmra.mrb[0].mxu0 %v1501
        %v1672 = vpop.f32.mrb[0].mxu0
        %v1673 = vadd.f32 %v1545, %v1672
        %v1674 = vpop.f32.mrb[0].mxu0
        %v1675 = vadd.f32 %v1549, %v1674
        %1676 = vmatprep.mubr.f32.mxu0 0.0
        %1677 = vmatmul.mubr.f32.gmra.mrb[0].mxu0 %v1502
        %v1678 = vpop.f32.mrb[0].mxu0
        %v1679 = vadd.f32 %v1545, %v1678
        %v1680 = vpop.f32.mrb[0].mxu0
        %v1681 = vadd.f32 %v1549, %v1680
        %1682 = vmatprep.mubr.f32.mxu0 0.0
        %1683 = vmatmul.mubr.f32.gmra.mrb[0].mxu0 %v1503
        %v1684 = vpop.f32.mrb[0].mxu0
        %v1685 = vadd.f32 %v1545, %v1684
        %v1686 = vpop.f32.mrb[0].mxu0
        %v1687 = vadd.f32 %v1549, %v1686
        %1688 = vmatprep.mubr.f32.mxu0 0.0
        %1689 = vmatmul.mubr.f32.gmra.mrb[0].mxu0 %v1504
        %v1690 = vpop.f32.mrb[0].mxu0
        %v1691 = vadd.f32 %v1545, %v1690
        %v1692 = vpop.f32.mrb[0].mxu0
        %v1693 = vadd.f32 %v1549, %v1692
        %1694 = vmatprep.mubr.f32.mxu0 0.0
        %1695 = vmatmul.mubr.f32.gmra.mrb[0].mxu0 %v1505
        %v1696 = vpop.f32.mrb[0].mxu0
        %v1697 = vadd.f32 %v1545, %v1696
        %v1698 = vpop.f32.mrb[0].mxu0
        %v1699 = vadd.f32 %v1549, %v1698
        %1700 = vmatprep.mubr.f32.mxu0 0.0
        %1701 = vmatmul.mubr.f32.gmra.mrb[0].mxu0 %v1506
        %v1702 = vpop.f32.mrb[0].mxu0
        %v1703 = vadd.f32 %v1545, %v1702
        %v1704 = vpop.f32.mrb[0].mxu0
        %v1705 = vadd.f32 %v1549, %v1704
        %1706 = vmatprep.mubr.f32.mxu0 0.0
        %1707 = vmatmul.mubr.f32.gmra.mrb[0].mxu0 %v1507
        %v1708 = vpop.f32.mrb[0].mxu0
        %v1709 = vadd.f32 %v1545, %v1708
        %v1710 = vpop.f32.mrb[0].mxu0
        %v1711 = vadd.f32 %v1549, %v1710
        %1712 = vdwg.mxu0
        %v1713 = vsub.f32 0.0, %v1619
        %v1714 = vsub.f32 0.0, %v1621
        %v1715 = vsub.f32 0.0, %v1625
        %v1716 = vsub.f32 0.0, %v1627
        %v1717 = vsub.f32 0.0, %v1631
        %v1718 = vsub.f32 0.0, %v1633
        %v1719 = vsub.f32 0.0, %v1637
        %v1720 = vsub.f32 0.0, %v1639
        %v1721 = vsub.f32 0.0, %v1643
        %v1722 = vsub.f32 0.0, %v1645
        %v1723 = vsub.f32 0.0, %v1649
        %v1724 = vsub.f32 0.0, %v1651
        %v1725 = vsub.f32 0.0, %v1655
        %v1726 = vsub.f32 0.0, %v1657
        %v1727 = vsub.f32 0.0, %v1661
        %v1728 = vsub.f32 0.0, %v1663
        %v1729 = vsub.f32 0.0, %v1667
        %v1730 = vsub.f32 0.0, %v1669
        %v1731 = vsub.f32 0.0, %v1673
        %v1732 = vsub.f32 0.0, %v1675
        %v1733 = vsub.f32 0.0, %v1679
        %v1734 = vsub.f32 0.0, %v1681
        %v1735 = vsub.f32 0.0, %v1685
        %v1736 = vsub.f32 0.0, %v1687
        %v1737 = vsub.f32 0.0, %v1691
        %v1738 = vsub.f32 0.0, %v1693
        %v1739 = vsub.f32 0.0, %v1697
        %v1740 = vsub.f32 0.0, %v1699
        %v1741 = vsub.f32 0.0, %v1703
        %v1742 = vsub.f32 0.0, %v1705
        %v1743 = vsub.f32 0.0, %v1709
        %v1744 = vsub.f32 0.0, %v1711
        %v1745 = vmul.f32 %v1713, 1.442695
        %v1746 = vpow.pop %v1745
        %v1747 = vmul.f32 %v1714, 1.442695
        %v1748 = vpow.pop %v1747
        %v1749 = vmul.f32 %v1715, 1.442695
        %v1750 = vpow.pop %v1749
        %v1751 = vmul.f32 %v1716, 1.442695
        %v1752 = vpow.pop %v1751
        %v1753 = vmul.f32 %v1717, 1.442695
        %v1754 = vpow.pop %v1753
        %v1755 = vmul.f32 %v1718, 1.442695
        %v1756 = vpow.pop %v1755
        %v1757 = vmul.f32 %v1719, 1.442695
        %v1758 = vpow.pop %v1757
        %v1759 = vmul.f32 %v1720, 1.442695
        %v1760 = vpow.pop %v1759
        %v1761 = vmul.f32 %v1721, 1.442695
        %v1762 = vpow.pop %v1761
        %v1763 = vmul.f32 %v1722, 1.442695
        %v1764 = vpow.pop %v1763
        %v1765 = vmul.f32 %v1723, 1.442695
        %v1766 = vpow.pop %v1765
        %v1767 = vmul.f32 %v1724, 1.442695
        %v1768 = vpow.pop %v1767
        %v1769 = vmul.f32 %v1725, 1.442695
        %v1770 = vpow.pop %v1769
        %v1771 = vmul.f32 %v1726, 1.442695
        %v1772 = vpow.pop %v1771
        %v1773 = vmul.f32 %v1727, 1.442695
        %v1774 = vpow.pop %v1773
        %v1775 = vmul.f32 %v1728, 1.442695
        %v1776 = vpow.pop %v1775
        %v1777 = vmul.f32 %v1729, 1.442695
        %v1778 = vpow.pop %v1777
        %v1779 = vmul.f32 %v1730, 1.442695
        %v1780 = vpow.pop %v1779
        %v1781 = vmul.f32 %v1731, 1.442695
        %v1782 = vpow.pop %v1781
        %v1783 = vmul.f32 %v1732, 1.442695
        %v1784 = vpow.pop %v1783
        %v1785 = vmul.f32 %v1733, 1.442695
        %v1786 = vpow.pop %v1785
        %v1787 = vmul.f32 %v1734, 1.442695
        %v1788 = vpow.pop %v1787
        %v1789 = vmul.f32 %v1735, 1.442695
        %v1790 = vpow.pop %v1789
        %v1791 = vmul.f32 %v1736, 1.442695
        %v1792 = vpow.pop %v1791
        %v1793 = vmul.f32 %v1737, 1.442695
        %v1794 = vpow.pop %v1793
        %v1795 = vmul.f32 %v1738, 1.442695
        %v1796 = vpow.pop %v1795
        %v1797 = vmul.f32 %v1739, 1.442695
        %v1798 = vpow.pop %v1797
        %v1799 = vmul.f32 %v1740, 1.442695
        %v1800 = vpow.pop %v1799
        %v1801 = vmul.f32 %v1741, 1.442695
        %v1802 = vpow.pop %v1801
        %v1803 = vmul.f32 %v1742, 1.442695
        %v1804 = vpow.pop %v1803
        %v1805 = vmul.f32 %v1743, 1.442695
        %v1806 = vpow.pop %v1805
        %v1807 = vmul.f32 %v1744, 1.442695
        %v1808 = vpow.pop %v1807
        %v1809 = vadd.f32 %v1746, 1.0
        %v1810 = vadd.f32 %v1748, 1.0
        %v1811 = vadd.f32 %v1750, 1.0
        %v1812 = vadd.f32 %v1752, 1.0
        %v1813 = vadd.f32 %v1754, 1.0
        %v1814 = vadd.f32 %v1756, 1.0
        %v1815 = vadd.f32 %v1758, 1.0
        %v1816 = vadd.f32 %v1760, 1.0
        %v1817 = vadd.f32 %v1762, 1.0
        %v1818 = vadd.f32 %v1764, 1.0
        %v1819 = vadd.f32 %v1766, 1.0
        %v1820 = vadd.f32 %v1768, 1.0
        %v1821 = vadd.f32 %v1770, 1.0
        %v1822 = vadd.f32 %v1772, 1.0
        %v1823 = vadd.f32 %v1774, 1.0
        %v1824 = vadd.f32 %v1776, 1.0
        %v1825 = vadd.f32 %v1778, 1.0
        %v1826 = vadd.f32 %v1780, 1.0
        %v1827 = vadd.f32 %v1782, 1.0
        %v1828 = vadd.f32 %v1784, 1.0
        %v1829 = vadd.f32 %v1786, 1.0
        %v1830 = vadd.f32 %v1788, 1.0
        %v1831 = vadd.f32 %v1790, 1.0
        %v1832 = vadd.f32 %v1792, 1.0
        %v1833 = vadd.f32 %v1794, 1.0
        %v1834 = vadd.f32 %v1796, 1.0
        %v1835 = vadd.f32 %v1798, 1.0
        %v1836 = vadd.f32 %v1800, 1.0
        %v1837 = vadd.f32 %v1802, 1.0
        %v1838 = vadd.f32 %v1804, 1.0
        %v1839 = vadd.f32 %v1806, 1.0
        %v1840 = vadd.f32 %v1808, 1.0
        %v1841 = vrcp.pop %v1809
        %v1842 = vrcp.pop %v1810
        %v1843 = vrcp.pop %v1811
        %v1844 = vrcp.pop %v1812
        %v1845 = vrcp.pop %v1813
        %v1846 = vrcp.pop %v1814
        %v1847 = vrcp.pop %v1815
        %v1848 = vrcp.pop %v1816
        %v1849 = vrcp.pop %v1817
        %v1850 = vrcp.pop %v1818
        %v1851 = vrcp.pop %v1819
        %v1852 = vrcp.pop %v1820
        %v1853 = vrcp.pop %v1821
        %v1854 = vrcp.pop %v1822
        %v1855 = vrcp.pop %v1823
        %v1856 = vrcp.pop %v1824
        %v1857 = vrcp.pop %v1825
        %v1858 = vrcp.pop %v1826
        %v1859 = vrcp.pop %v1827
        %v1860 = vrcp.pop %v1828
        %v1861 = vrcp.pop %v1829
        %v1862 = vrcp.pop %v1830
        %v1863 = vrcp.pop %v1831
        %v1864 = vrcp.pop %v1832
        %v1865 = vrcp.pop %v1833
        %v1866 = vrcp.pop %v1834
        %v1867 = vrcp.pop %v1835
        %v1868 = vrcp.pop %v1836
        %v1869 = vrcp.pop %v1837
        %v1870 = vrcp.pop %v1838
        %v1871 = vrcp.pop %v1839
        %v1872 = vrcp.pop %v1840
        %v1873 = vpack.c.bf16 %v1843, %v1841
        %v1874 = vpack.c.bf16 %v1844, %v1842
        %v1875 = vpack.c.bf16 %v1847, %v1845
        %v1876 = vpack.c.bf16 %v1848, %v1846
        %v1877 = vpack.c.bf16 %v1851, %v1849
        %v1878 = vpack.c.bf16 %v1852, %v1850
        %v1879 = vpack.c.bf16 %v1855, %v1853
        %v1880 = vpack.c.bf16 %v1856, %v1854
        %v1881 = vpack.c.bf16 %v1859, %v1857
        %v1882 = vpack.c.bf16 %v1860, %v1858
        %v1883 = vpack.c.bf16 %v1863, %v1861
        %v1884 = vpack.c.bf16 %v1864, %v1862
        %v1885 = vpack.c.bf16 %v1867, %v1865
        %v1886 = vpack.c.bf16 %v1868, %v1866
        %v1887 = vpack.c.bf16 %v1871, %v1869
        %v1888 = vpack.c.bf16 %v1872, %v1870
        %v1905 = vunpack.c.l.b16 %v1873
        %v1906 = vunpack.c.l.b16 %v1874
        %v1907 = vunpack.c.h.b16 %v1873
        %v1908 = vunpack.c.h.b16 %v1874
        %v1909 = vunpack.c.l.b16 %v1875
        %v1910 = vunpack.c.l.b16 %v1876
        %v1911 = vunpack.c.h.b16 %v1875
        %v1912 = vunpack.c.h.b16 %v1876
        %v1913 = vunpack.c.l.b16 %v1877
        %v1914 = vunpack.c.l.b16 %v1878
        %v1915 = vunpack.c.h.b16 %v1877
        %v1916 = vunpack.c.h.b16 %v1878
        %v1917 = vunpack.c.l.b16 %v1879
        %v1918 = vunpack.c.l.b16 %v1880
        %v1919 = vunpack.c.h.b16 %v1879
        %v1920 = vunpack.c.h.b16 %v1880
        %v1921 = vunpack.c.l.b16 %v1881
        %v1922 = vunpack.c.l.b16 %v1882
        %v1923 = vunpack.c.h.b16 %v1881
        %v1924 = vunpack.c.h.b16 %v1882
        %v1925 = vunpack.c.l.b16 %v1883
        %v1926 = vunpack.c.l.b16 %v1884
        %v1927 = vunpack.c.h.b16 %v1883
        %v1928 = vunpack.c.h.b16 %v1884
        %v1929 = vunpack.c.l.b16 %v1885
        %v1930 = vunpack.c.l.b16 %v1886
        %v1931 = vunpack.c.h.b16 %v1885
        %v1932 = vunpack.c.h.b16 %v1886
        %v1933 = vunpack.c.l.b16 %v1887
        %v1934 = vunpack.c.l.b16 %v1888
        %v1935 = vunpack.c.h.b16 %v1887
        %v1936 = vunpack.c.h.b16 %v1888
        %v1937 = vpack.c.b16 %v1906, %v1905
        %v1938 = vpack.c.b16 %v1908, %v1907
        %v1939 = vpack.c.b16 %v1910, %v1909
        %v1940 = vpack.c.b16 %v1912, %v1911
        %v1941 = vpack.c.b16 %v1914, %v1913
        %v1942 = vpack.c.b16 %v1916, %v1915
        %v1943 = vpack.c.b16 %v1918, %v1917
        %v1944 = vpack.c.b16 %v1920, %v1919
        %v1945 = vpack.c.b16 %v1922, %v1921
        %v1946 = vpack.c.b16 %v1924, %v1923
        %v1947 = vpack.c.b16 %v1926, %v1925
        %v1948 = vpack.c.b16 %v1928, %v1927
        %v1949 = vpack.c.b16 %v1930, %v1929
        %v1950 = vpack.c.b16 %v1932, %v1931
        %v1951 = vpack.c.b16 %v1934, %v1933
        %v1952 = vpack.c.b16 %v1936, %v1935
        %1969 = vst [vmem:[%s442] sm:$0xff] %v1937
        %1970 = vst [vmem:[%s442 + $0x8] sm:$0xff] %v1938
        %1971 = vst [vmem:[%s442 + $0x10] sm:$0xff] %v1939
        %1972 = vst [vmem:[%s442 + $0x18] sm:$0xff] %v1940
        %1973 = vst [vmem:[%s442 + $0x20] sm:$0xff] %v1941
        %1974 = vst [vmem:[%s442 + $0x28] sm:$0xff] %v1942
        %1975 = vst [vmem:[%s442 + $0x30] sm:$0xff] %v1943
        %1976 = vst [vmem:[%s442 + $0x38] sm:$0xff] %v1944
        %1977 = vst [vmem:[%s442 + $0x40] sm:$0xff] %v1945
        %1978 = vst [vmem:[%s442 + $0x48] sm:$0xff] %v1946
        %1979 = vst [vmem:[%s442 + $0x50] sm:$0xff] %v1947
        %1980 = vst [vmem:[%s442 + $0x58] sm:$0xff] %v1948
        %1981 = vst [vmem:[%s442 + $0x60] sm:$0xff] %v1949
        %1982 = vst [vmem:[%s442 + $0x68] sm:$0xff] %v1950
        %1983 = vst [vmem:[%s442 + $0x70] sm:$0xff] %v1951
        %1984 = vst [vmem:[%s442 + $0x78] sm:$0xff] %v1952
        %s1985 = sand.u32 %s260, 1
        %s1986 = scalar_lea.sflag [#allocation3], %s1985
        %s1987 = sand.u32 %s260, 1
        %s1988 = smul.addr %s1987, 128
        %s1989 = scalar_lea.vmem [#allocation2], %s1988
        %s1990 = smul.u32 16, %s27
        %p1991 = scmp.lt.s32.totalorder %s1990, 31
        %s1992 = scalar_select %p1991, %s1990, 31
        %s1993 = smul.addr %s1992, 8
        %s1994 = scalar_lea.vmem %s11, %s1993
        %s1995 = smul.u32 16, %s27
        %p1996 = scmp.lt.s32.totalorder %s1995, 31
        %s1997 = scalar_select %p1996, %s1995, 31
        %s1998 = smul.addr %s1997, 8
        %s1999 = scalar_lea.vmem %s12, %s1998
        // Predicated region
        $region61: #{vgae5_forward.3} parent=59 // pred_check
          %p2000 = pneg %p270
        $region62: #{vgae5_forward.3} parent=59 // pred_check_branch
          %2002 = sbr.rel (%p2000) target = $region64
        $region63: #{vgae5_forward.3} parent=59 // pred_region
          %s2003 = smul.u32 16, %s27
          %s2005 = ssub.s32 2048, 2048
          %2006 = vsyncadd %s1986, %s2005
          %s2007 = smul.addr %s2003, 2
          %s2008 = smul.addr %s2007, 64
          %s2009 = scalar_lea.hbm %s10, %s2008
          %s2010 = sshll.u32 %s1989, 4
          %s2011 = int_to_ptr.vmem [resolvable:$true] %s2010
          %2016 = dma.vmem_to_hbm [thread:$0]  %s2011, 2048, %s2009, %s1986, 128, 128, 8
        $region64: #{vgae5_forward.3} parent=59 // pred_fallthru
          _
        // Predicated region
        $region65: #{vgae5_forward.3} parent=59 // pred_check
          %p2017 = pneg %p296
        $region66: #{vgae5_forward.3} parent=59 // pred_check_branch
          %2019 = sbr.rel (%p2017) target = $region68
        $region67: #{vgae5_forward.3} parent=59 // pred_region
          %s2020 = smul.u32 16, %s27
        $region68: #{vgae5_forward.3} parent=59 // pred_fallthru
          _
        // Predicated region
        $region69: #{vgae5_forward.3} parent=59 // pred_check
          %p2021 = pneg %p322
        $region70: #{vgae5_forward.3} parent=59 // pred_check_branch
          %2023 = sbr.rel (%p2021) target = $region72
        $region71: #{vgae5_forward.3} parent=59 // pred_region
          %s2024 = smul.u32 16, %s27
        $region72: #{vgae5_forward.3} parent=59 // pred_fallthru
          _
      $region60: #{vgae5_forward.3} parent=5 // pred_fallthru
        _
      %p2025 = scmp.le.s32.totalorder 2, %s22
      // Predicated region
      $region73: #{vgae5_forward.3} parent=5 // pred_check
        %p2026 = pneg %p2025
      $region74: #{vgae5_forward.3} parent=5 // pred_check_branch
        %2028 = sbr.rel (%p2026) target = $region76
      $region75: #{vgae5_forward.3} parent=5 // pred_region
        %s2029 = ssub.s32 %s22, 2
        // Predicated region
        $region77: #{vgae5_forward.3} parent=75 // pred_check
          %p2030 = pneg %p276
        $region78: #{vgae5_forward.3} parent=75 // pred_check_branch
          %2032 = sbr.rel (%p2030) target = $region80
        $region79: #{vgae5_forward.3} parent=75 // pred_region
          %s2033 = sand.u32 %s261, 1
          %s2034 = scalar_lea.sflag [#allocation3], %s2033
          %s2035 = sand.u32 %s261, 1
          %s2036 = smul.addr %s2035, 128
          %s2037 = scalar_lea.vmem [#allocation2], %s2036
          %2038 = dma.done %s2034, 2048
        $region80: #{vgae5_forward.3} parent=75 // pred_fallthru
          _
        // Predicated region
        $region81: #{vgae5_forward.3} parent=75 // pred_check
          %p2039 = pneg %p302
        $region82: #{vgae5_forward.3} parent=75 // pred_check_branch
          %2041 = sbr.rel (%p2039) target = $region84
        $region83: #{vgae5_forward.3} parent=75 // pred_region
          %s2042 = smul.u32 16, %s28
          %p2043 = scmp.lt.s32.totalorder %s2042, 31
          %s2044 = scalar_select %p2043, %s2042, 31
          %s2045 = smul.addr %s2044, 8
          %s2046 = scalar_lea.vmem %s11, %s2045
        $region84: #{vgae5_forward.3} parent=75 // pred_fallthru
          _
        // Predicated region
        $region85: #{vgae5_forward.3} parent=75 // pred_check
          %p2047 = pneg %p328
        $region86: #{vgae5_forward.3} parent=75 // pred_check_branch
          %2049 = sbr.rel (%p2047) target = $region88
        $region87: #{vgae5_forward.3} parent=75 // pred_region
          %s2050 = smul.u32 16, %s28
          %p2051 = scmp.lt.s32.totalorder %s2050, 31
          %s2052 = scalar_select %p2051, %s2050, 31
          %s2053 = smul.addr %s2052, 8
          %s2054 = scalar_lea.vmem %s12, %s2053
        $region88: #{vgae5_forward.3} parent=75 // pred_fallthru
          _
      $region76: #{vgae5_forward.3} parent=5 // pred_fallthru
        _
    $region6: #{vgae5_forward.3} parent=1 // loop_footer
      %s26 = sadd.s32 1, %s22
    $region7: #{vgae5_forward.3} parent=1 // loop_footer_branch
      %21 = sbr.rel target = $region3
    $region8: #{vgae5_forward.3} parent=1 // loop_exit
      _
    %2055 = vsyncpa [#allocation3], 1
    %s2056 = scalar_lea.sflag [#allocation3], 1
    %2057 = vsyncpa %s2056, 1

</llo_original>
